<compile_context>
chip_gen: v7x
topology: tpu7x:2x2x1
jax: 0.10.0
libtpu: 0.0.40
codegen_flags: <defaults>
</compile_context>

<pallas_src>
import jax
import jax.numpy as jnp
from jax.experimental import pallas as pl
from jax.experimental.pallas import tpu as pltpu


# ---------------------------------------------------------------------------
# Fused keypoint head: conv_fcn stack + ConvTranspose2d(4,2,1) in ONE
# pallas_call.  Activations stay resident in a VMEM scratch across the layer
# axis; all weights are DMA'd once per call.
# ---------------------------------------------------------------------------
def _make_fused_head_kernel(L, RT, P, C, KP4, SW):
    M = RT * P * P

    def kernel(x_ref, w_ref, b_ref, wd_ref, bd_ref, feat_ref, logit_ref, act_ref):
        l = pl.program_id(1)

        @pl.when(l == 0)
        def _():
            # Zero only the 1-px conv-padding border; the interior is fully
            # overwritten below and the extra sublane-alignment columns
            # (>= P+2) are never read by the 3x3 taps.
            zrow = jnp.zeros((RT, 1, SW, C), jnp.float32)
            act_ref[:, 0:1, :, :] = zrow
            act_ref[:, P + 1:P + 2, :, :] = zrow
            zcol = jnp.zeros((RT, P + 2, 1, C), jnp.float32)
            act_ref[:, :, 0:1, :] = zcol
            act_ref[:, :, P + 1:P + 2, :] = zcol
            act_ref[:, 1:P + 1, 1:P + 1, :] = x_ref[...]

        # im2col: 9 shifted views of the VMEM-resident padded activation,
        # cast to bf16 for a native-rate MXU contraction (f32 accumulation).
        taps = [act_ref[:, ky:ky + P, kx:kx + P, :].reshape(M, C).astype(jnp.bfloat16)
                for ky in range(3) for kx in range(3)]
        pat = jnp.concatenate(taps, axis=-1)                       # [M, 9C] bf16

        @pl.when(l < L)
        def _():
            li = jnp.minimum(l, L - 1)
            acc = jnp.dot(pat, w_ref[li], preferred_element_type=jnp.float32)
            y = jnp.maximum(acc + b_ref[li], 0.0).reshape(RT, P, P, C)
            act_ref[:, 1:P + 1, 1:P + 1, :] = y    # stays in VMEM for next layer

        @pl.when(l == L - 1)
        def _():
            # feature-extractor output (the module's `x`)
            feat_ref[...] = act_ref[:, 1:P + 1, 1:P + 1, :].astype(feat_ref.dtype)

        @pl.when(l == L)
        def _():
            # ConvTranspose2d(4,2,1) as a final lane-dense layer: block-sparse
            # [9C, 4*KP] weight over the SAME 9-tap im2col, output packed
            # phase-major along the last (128-wide) dim.
            acc = jnp.dot(pat, wd_ref[...], preferred_element_type=jnp.float32)
            logit_ref[...] = (acc + bd_ref[...]).reshape(
                RT, P, P, KP4).astype(logit_ref.dtype)

    return kernel


def fused_keypoint_head_pallas(x0, w_stack, b_stack, w_dec, b_dec, *, roi_tile):
    """x0: [R_pad, P, P, C] f32; w_stack: [L, 9C, C] bf16; b_stack: [L, 1, C] f32;
       w_dec: [9C, 4*KP] bf16; b_dec: [1, 4*KP] f32."""
    R_pad, P, _, C = x0.shape
    L = w_stack.shape[0]
    KP4 = w_dec.shape[-1]
    RT = roi_tile
    assert R_pad % RT == 0
    SW = ((P + 2 + 7) // 8) * 8                 # sublane-aligned padded width

    kernel = _make_fused_head_kernel(L, RT, P, C, KP4, SW)

    # Rough VMEM budget (streamed blocks double-buffered + resident weights +
    # scratch + im2col temporary); clamp so the scoped limit also fits v7x.
    bytes_needed = (
        2 * 2 * (RT * P * P * C * 4)            # x0 in + feat out (double-buffered)
        + 2 * (RT * P * P * KP4 * 4)            # packed logits out
        + 2 * (L * 9 * C * C * 2)               # bf16 conv weight stack
        + 2 * (9 * C * KP4 * 2)                 # bf16 deconv weight
        + RT * (P + 2) * SW * C * 4             # resident padded activation
        + RT * P * P * 9 * C * 4)               # im2col temporary (worst case f32)
    vmem_limit = int(min(max(2 * bytes_needed, 32 * 1024 * 1024), 96 * 1024 * 1024))

    feats, logits_packed = pl.pallas_call(
        kernel,
        out_shape=(jax.ShapeDtypeStruct((R_pad, P, P, C), jnp.float32),
                   jax.ShapeDtypeStruct((R_pad, P, P, KP4), jnp.float32)),
        grid=(R_pad // RT, L + 1),
        in_specs=[
            pl.BlockSpec((RT, P, P, C), lambda r, l: (r, 0, 0, 0)),   # per ROI tile
            pl.BlockSpec((L, 9 * C, C), lambda r, l: (0, 0, 0)),      # DMA'd once
            pl.BlockSpec((L, 1, C), lambda r, l: (0, 0, 0)),          # DMA'd once
            pl.BlockSpec((9 * C, KP4), lambda r, l: (0, 0)),          # DMA'd once
            pl.BlockSpec((1, KP4), lambda r, l: (0, 0)),              # DMA'd once
        ],
        out_specs=(
            pl.BlockSpec((RT, P, P, C), lambda r, l: (r, 0, 0, 0)),
            pl.BlockSpec((RT, P, P, KP4), lambda r, l: (r, 0, 0, 0)),
        ),
        scratch_shapes=[
            pltpu.VMEM((RT, P + 2, SW, C), jnp.float32),  # resident padded activation
        ],
        compiler_params=pltpu.CompilerParams(
            dimension_semantics=("parallel", "arbitrary"),
            vmem_limit_bytes=vmem_limit),
    )(x0, w_stack, b_stack, w_dec, b_dec)
    return feats, logits_packed


# ---------------------------------------------------------------------------
# ROIAlign pooler (maskrcnn-benchmark semantics, aligned=False).
# TODO(synk): data-dependent bilinear gather has no clean Pallas TPU gather
#             primitive at this access pattern; kept in plain JAX glue.
# ---------------------------------------------------------------------------
def roi_align(feat_hwc, boxes, out_size, spatial_scale, sampling_ratio):
    H, W, C = feat_hwc.shape
    R = boxes.shape[0]
    s = sampling_ratio
    b = boxes * spatial_scale
    x1, y1, x2, y2 = b[:, 0], b[:, 1], b[:, 2], b[:, 3]
    roi_w = jnp.maximum(x2 - x1, 1.0)
    roi_h = jnp.maximum(y2 - y1, 1.0)
    bin_w = roi_w / out_size
    bin_h = roi_h / out_size
    grid = (jnp.arange(out_size, dtype=jnp.float32)[:, None]
            + (jnp.arange(s, dtype=jnp.float32)[None, :] + 0.5) / s).reshape(-1)
    ys = y1[:, None] + grid[None, :] * bin_h[:, None]
    xs = x1[:, None] + grid[None, :] * bin_w[:, None]
    OS = out_size * s
    yy = jnp.broadcast_to(ys[:, :, None], (R, OS, OS))
    xx = jnp.broadcast_to(xs[:, None, :], (R, OS, OS))

    valid = (yy >= -1.0) & (yy <= H) & (xx >= -1.0) & (xx <= W)
    y = jnp.clip(yy, 0.0, H - 1)
    x = jnp.clip(xx, 0.0, W - 1)
    y0 = jnp.floor(y).astype(jnp.int32)
    x0 = jnp.floor(x).astype(jnp.int32)
    y1i = jnp.minimum(y0 + 1, H - 1)
    x1i = jnp.minimum(x0 + 1, W - 1)
    ly = y - y0.astype(jnp.float32)
    lx = x - x0.astype(jnp.float32)
    hy = 1.0 - ly
    hx = 1.0 - lx
    v00 = feat_hwc[y0, x0]
    v01 = feat_hwc[y0, x1i]
    v10 = feat_hwc[y1i, x0]
    v11 = feat_hwc[y1i, x1i]
    val = ((hy * hx)[..., None] * v00 + (hy * lx)[..., None] * v01 +
           (ly * hx)[..., None] * v10 + (ly * lx)[..., None] * v11)
    val = jnp.where(valid[..., None], val, 0.0)
    val = val.reshape(R, out_size, s, out_size, s, C)
    return val.mean(axis=(2, 4))                                  # [R, out, out, C]


# ---------------------------------------------------------------------------
# Post-processor (inference): heatmap logits -> keypoints (x, y, score).
# TODO(synk): exact heatmaps_to_keypoints resizes each ROI heatmap to the
#             rounded per-box size (dynamic shapes per proposal); simplified to
#             argmax at heatmap resolution mapped affinely into the box.
# ---------------------------------------------------------------------------
def keypoint_post_process(heatmaps_nhwk, boxes):
    R, Hm, Wm, K = heatmaps_nhwk.shape
    hm = jnp.transpose(heatmaps_nhwk, (0, 3, 1, 2)).reshape(R, K, Hm * Wm)
    idx = jnp.argmax(hm, axis=-1)
    score = jnp.max(hm, axis=-1)
    py = (idx // Wm).astype(jnp.float32)
    px = (idx % Wm).astype(jnp.float32)
    x1, y1, x2, y2 = boxes[:, 0:1], boxes[:, 1:2], boxes[:, 2:3], boxes[:, 3:4]
    bw = jnp.maximum(x2 - x1, 1.0)
    bh = jnp.maximum(y2 - y1, 1.0)
    kx = x1 + (px + 0.5) / Wm * bw
    ky = y1 + (py + 0.5) / Hm * bh
    return jnp.stack([kx, ky, score], axis=-1)                    # [R, K, 3]


# ---------------------------------------------------------------------------
# Parameters (PyTorch layouts) + one-time preprocessing into kernel layouts.
# ---------------------------------------------------------------------------
def init_params(key, in_channels, conv_layers, num_keypoints):
    params = {"convs": []}
    cin = in_channels
    for cout in conv_layers:
        key, kw, kb = jax.random.split(key, 3)
        w = jax.random.normal(kw, (cout, cin, 3, 3), jnp.float32) * 0.05   # OIHW
        b = jax.random.normal(kb, (cout,), jnp.float32) * 0.01
        params["convs"].append((w, b))
        cin = cout
    key, kw, kb = jax.random.split(key, 3)
    params["deconv_w"] = jax.random.normal(
        kw, (cin, num_keypoints, 4, 4), jnp.float32) * 0.05               # IOHW
    params["deconv_b"] = jax.random.normal(kb, (num_keypoints,), jnp.float32) * 0.01
    return params


def preprocess_params(params):
    """One-time layout work hoisted out of the forward pass.

    Conv weights:   OIHW -> HWIO -> [9C, C], stacked over layers, bf16.
    Deconv weight:  4-phase sub-pixel decomposition packed into ONE block-sparse
                    [9C, 4*KP] bf16 matrix aligned with the conv im2col rows, so
                    the deconv runs as a final lane-dense layer of the same kernel.
    """
    convs = params["convs"]
    C = convs[0][0].shape[0]
    ws, bs = [], []
    for w_oihw, b in convs:
        cout, cin = w_oihw.shape[0], w_oihw.shape[1]
        assert cout == C, "fused stack assumes uniform conv width (cfg CONV_LAYERS)"
        w = jnp.transpose(w_oihw, (2, 3, 1, 0))                   # HWIO
        if cin < C:
            w = jnp.pad(w, ((0, 0), (0, 0), (0, C - cin), (0, 0)))
        ws.append(w.reshape(9 * C, C))                            # (ky, kx, cin) rows
        bs.append(b.reshape(1, C))
    w_stack = jnp.stack(ws).astype(jnp.bfloat16)                  # [L, 9C, C] bf16
    b_stack = jnp.stack(bs)                                       # [L, 1, C]  f32

    wt = params["deconv_w"]                                       # [C, K, 4, 4] IOHW
    bt = params["deconv_b"]
    cin, nk = wt.shape[0], wt.shape[1]
    assert cin == C and wt.shape[2] == 4 and wt.shape[3] == 4
    kp = ((4 * nk + 127) // 128) * 128 // 4                       # 4*KP multiple of 128
    # out[2m+pp, 2n+qq] = sum_{dy,dx} xpad[m+pp+dy, n+qq+dx] @ wt[:,:,(3-pp)-2dy,(3-qq)-2dx]
    # => for phase (pp,qq) the tap lives at im2col tap index t = (pp+dy)*3 + (qq+dx).
    w_dec = jnp.zeros((9 * C, 4 * kp), jnp.float32)
    for pp in range(2):
        for qq in range(2):
            ph = pp * 2 + qq
            for dy in range(2):
                for dx in range(2):
                    t = (pp + dy) * 3 + (qq + dx)
                    tap = wt[:, :, (3 - pp) - 2 * dy, (3 - qq) - 2 * dx]   # [C, nk]
                    w_dec = w_dec.at[t * C:(t + 1) * C,
                                     ph * kp:ph * kp + nk].set(tap)
    w_dec = w_dec.astype(jnp.bfloat16)                            # [9C, 4*KP] bf16
    b_dec = jnp.concatenate([jnp.pad(bt, (0, kp - nk))] * 4).reshape(1, 4 * kp)
    return {"w_stack": w_stack, "b_stack": b_stack,
            "w_dec": w_dec, "b_dec": b_dec,
            "C": C, "num_keypoints": nk, "kp_pad": kp}


# ---------------------------------------------------------------------------
# ROIKeypointHead.forward (inference path).
# ---------------------------------------------------------------------------
def roi_keypoint_head_forward(prep, features_nchw, boxes, *,
                              pooler_resolution=8, spatial_scale=1.0,
                              sampling_ratio=2, up_scale=2, roi_tile=8):
    C, nk, kp = prep["C"], prep["num_keypoints"], prep["kp_pad"]
    P = pooler_resolution
    feat_hwc = jnp.transpose(features_nchw[0], (1, 2, 0))         # [H, W, Cin]

    # --- feature extractor: pooler (plain JAX) + fused Pallas head ----------
    pooled = roi_align(feat_hwc, boxes, P, spatial_scale, sampling_ratio)
    R = pooled.shape[0]
    R_pad = roi_tile * ((R + roi_tile - 1) // roi_tile)
    x0 = jnp.pad(pooled, ((0, R_pad - R), (0, 0), (0, 0), (0, C - pooled.shape[-1])))

    feats, packed = fused_keypoint_head_pallas(
        x0, prep["w_stack"], prep["b_stack"], prep["w_dec"], prep["b_dec"],
        roi_tile=roi_tile)          # [R_pad,P,P,C], [R_pad,P,P,4*KP]

    # un-permute phase-major packed deconv output -> [R, 2P, 2P, K]
    lp = packed.reshape(R_pad, P, P, 2, 2, kp)
    lp = jnp.transpose(lp, (0, 1, 3, 2, 4, 5)).reshape(R_pad, 2 * P, 2 * P, kp)
    logits = lp[:R, :, :, :nk]
    Hm, Wm = 2 * P, 2 * P
    logits_up = jax.image.resize(
        logits, (R, up_scale * Hm, up_scale * Wm, nk), method="bilinear")

    # --- post-processor (eval) ----------------------------------------------
    keypoints = keypoint_post_process(logits_up, boxes)

    x_nchw = jnp.transpose(feats[:R], (0, 3, 1, 2))
    kp_logits_nchw = jnp.transpose(logits_up, (0, 3, 1, 2))
    result = {"boxes": boxes, "keypoints": keypoints, "kp_logits": kp_logits_nchw}
    return x_nchw, result, {}


# ---------------------------------------------------------------------------
# Plain-JAX reference with matching bf16 operand rounding (sanity check).
# ---------------------------------------------------------------------------
def _ref_forward_nhwc(params, pooled):
    y = pooled
    for w_oihw, b in params["convs"]:
        w = jnp.transpose(w_oihw, (2, 3, 1, 0)).astype(jnp.bfloat16)
        y = jax.lax.conv_general_dilated(
            y.astype(jnp.bfloat16), w, (1, 1), ((1, 1), (1, 1)),
            dimension_numbers=("NHWC", "HWIO", "NHWC"),
            preferred_element_type=jnp.float32) + b
        y = jnp.maximum(y, 0.0)
    Rr, H, W, Cc = y.shape
    wt = params["deconv_w"]
    xz = jnp.zeros((Rr, 2 * H - 1, 2 * W - 1, Cc), jnp.float32).at[:, ::2, ::2, :].set(y)
    w_conv = jnp.transpose(jnp.flip(wt, (2, 3)), (2, 3, 0, 1)).astype(jnp.bfloat16)
    logit = jax.lax.conv_general_dilated(
        xz.astype(jnp.bfloat16), w_conv, (1, 1), ((2, 2), (2, 2)),
        dimension_numbers=("NHWC", "HWIO", "NHWC"),
        preferred_element_type=jnp.float32) + params["deconv_b"]
    return y, logit


if __name__ == "__main__":
    key = jax.random.PRNGKey(0)
    key, kf = jax.random.split(key)

    # small shapes: 1 image, 4 input channels, 16x16 feature map, 3 proposals
    features = jax.random.normal(kf, (1, 4, 16, 16), jnp.float32)          # NCHW
    boxes = jnp.array([[1.0, 1.0, 11.0, 13.0],
                       [3.0, 4.0, 14.0, 15.0],
                       [0.0, 2.0, 8.0, 9.0]], jnp.float32)

    conv_layers = (32, 32, 32, 32)   # small stand-in for cfg CONV_LAYERS=(512,)*8
    num_keypoints = 17
    params = init_params(key, in_channels=4, conv_layers=conv_layers,
                         num_keypoints=num_keypoints)
    prep = preprocess_params(params)

    fwd = jax.jit(lambda f, b: roi_keypoint_head_forward(prep, f, b, roi_tile=8))
    x, result, losses = fwd(features, boxes)
    jax.block_until_ready((x, result["keypoints"], result["kp_logits"]))

    # sanity check vs plain-JAX reference (same bf16 operand rounding points)
    pooled = roi_align(jnp.transpose(features[0], (1, 2, 0)), boxes, 8, 1.0, 2)
    ref_x, ref_logit = _ref_forward_nhwc(params, pooled)
    ref_up = jax.image.resize(ref_logit, (3, 32, 32, num_keypoints), method="bilinear")
    assert jnp.allclose(x, jnp.transpose(ref_x, (0, 3, 1, 2)), atol=3e-2, rtol=3e-2)
    assert jnp.allclose(result["kp_logits"], jnp.transpose(ref_up, (0, 3, 1, 2)),
                        atol=3e-2, rtol=3e-2)

    assert x.shape == (3, conv_layers[-1], 8, 8)
    assert result["kp_logits"].shape == (3, num_keypoints, 32, 32)
    assert result["keypoints"].shape == (3, num_keypoints, 3)
    assert losses == {}
    print("KERNEL_OK")
</pallas_src>

<mosaic_0001>
module attributes {stable_mosaic.version = 11 : i64} {
  func.func @kernel(%arg0: i32, %arg1: i32, %arg2: memref<8x8x8x32xf32, #tpu.memory_space<vmem>>, %arg3: memref<4x288x32xbf16, #tpu.memory_space<vmem>>, %arg4: memref<4x1x32xf32, #tpu.memory_space<vmem>>, %arg5: memref<288x128xbf16, #tpu.memory_space<vmem>>, %arg6: memref<1x128xf32, #tpu.memory_space<vmem>>, %arg7: memref<8x8x8x32xf32, #tpu.memory_space<vmem>>, %arg8: memref<8x8x8x128xf32, #tpu.memory_space<vmem>>, %arg9: memref<8x10x16x32xf32, #tpu.memory_space<vmem>>) attributes {dimension_semantics = [#tpu.dimension_semantics<parallel>, #tpu.dimension_semantics<arbitrary>], iteration_bounds = array<i64: 1, 5>, scalar_prefetch = 0 : i64, scratch_operands = 1 : i64, tpu.core_type = #tpu.core_type<tc>, window_params = [{transform_indices = @transform_0, window_bounds = array<i64: 8, 8, 8, 32>}, {pipeline_mode = #tpu.pipeline_mode<synchronous>, transform_indices = @transform_1, window_bounds = array<i64: 4, 288, 32>}, {pipeline_mode = #tpu.pipeline_mode<synchronous>, transform_indices = @transform_2, window_bounds = array<i64: 4, 1, 32>}, {pipeline_mode = #tpu.pipeline_mode<synchronous>, transform_indices = @transform_3, window_bounds = array<i64: 288, 128>}, {pipeline_mode = #tpu.pipeline_mode<synchronous>, transform_indices = @transform_4, window_bounds = array<i64: 1, 128>}, {transform_indices = @transform_5, window_bounds = array<i64: 8, 8, 8, 32>}, {transform_indices = @transform_6, window_bounds = array<i64: 8, 8, 8, 128>}]} {
    %c0_i32 = arith.constant 0 : i32
    %0 = arith.cmpi eq, %arg1, %c0_i32 : i32
    %1 = arith.extui %0 : i1 to i32
    %c0_i32_0 = arith.constant 0 : i32
    %2 = arith.cmpi ne, %1, %c0_i32_0 : i32
    scf.if %2 {
      %cst = arith.constant 0.000000e+00 : f32
      %40 = vector.broadcast %cst : f32 to vector<8x1x16x32xf32>
      %c0_38 = arith.constant 0 : index
      %c0_39 = arith.constant 0 : index
      %c0_40 = arith.constant 0 : index
      %c0_41 = arith.constant 0 : index
      %41 = vector.load %arg9[%c0_38, %c0_39, %c0_40, %c0_41] : memref<8x10x16x32xf32, #tpu.memory_space<vmem>>, vector<8x1x16x32xf32>
      tpu.vector_store %arg9[%c0_38, %c0_39, %c0_40, %c0_41], %40 {strides = array<i32>} : memref<8x10x16x32xf32, #tpu.memory_space<vmem>>, vector<8x1x16x32xf32>,
      %c0_42 = arith.constant 0 : index
      %c9 = arith.constant 9 : index
      %c0_43 = arith.constant 0 : index
      %c0_44 = arith.constant 0 : index
      %42 = vector.load %arg9[%c0_42, %c9, %c0_43, %c0_44] : memref<8x10x16x32xf32, #tpu.memory_space<vmem>>, vector<8x1x16x32xf32>
      tpu.vector_store %arg9[%c0_42, %c9, %c0_43, %c0_44], %40 {strides = array<i32>} : memref<8x10x16x32xf32, #tpu.memory_space<vmem>>, vector<8x1x16x32xf32>,
      %cst_45 = arith.constant 0.000000e+00 : f32
      %43 = vector.broadcast %cst_45 : f32 to vector<8x10x1x32xf32>
      %c0_46 = arith.constant 0 : index
      %c0_47 = arith.constant 0 : index
      %c0_48 = arith.constant 0 : index
      %c0_49 = arith.constant 0 : index
      %44 = vector.load %arg9[%c0_46, %c0_47, %c0_48, %c0_49] : memref<8x10x16x32xf32, #tpu.memory_space<vmem>>, vector<8x10x1x32xf32>
      tpu.vector_store %arg9[%c0_46, %c0_47, %c0_48, %c0_49], %43 {strides = array<i32>} : memref<8x10x16x32xf32, #tpu.memory_space<vmem>>, vector<8x10x1x32xf32>,
      %c0_50 = arith.constant 0 : index
      %c0_51 = arith.constant 0 : index
      %c9_52 = arith.constant 9 : index
      %c0_53 = arith.constant 0 : index
      %45 = vector.load %arg9[%c0_50, %c0_51, %c9_52, %c0_53] : memref<8x10x16x32xf32, #tpu.memory_space<vmem>>, vector<8x10x1x32xf32>
      tpu.vector_store %arg9[%c0_50, %c0_51, %c9_52, %c0_53], %43 {strides = array<i32>} : memref<8x10x16x32xf32, #tpu.memory_space<vmem>>, vector<8x10x1x32xf32>,
      %c0_54 = arith.constant 0 : index
      %c0_55 = arith.constant 0 : index
      %c0_56 = arith.constant 0 : index
      %c0_57 = arith.constant 0 : index
      %46 = vector.load %arg2[%c0_54, %c0_55, %c0_56, %c0_57] : memref<8x8x8x32xf32, #tpu.memory_space<vmem>>, vector<8x8x8x32xf32>
      %c0_58 = arith.constant 0 : index
      %c1_59 = arith.constant 1 : index
      %c1_60 = arith.constant 1 : index
      %c0_61 = arith.constant 0 : index
      %47 = vector.load %arg9[%c0_58, %c1_59, %c1_60, %c0_61] : memref<8x10x16x32xf32, #tpu.memory_space<vmem>>, vector<8x8x8x32xf32>
      tpu.vector_store %arg9[%c0_58, %c1_59, %c1_60, %c0_61], %46 {strides = array<i32>} : memref<8x10x16x32xf32, #tpu.memory_space<vmem>>, vector<8x8x8x32xf32>,
    } else {
    }
    %c0 = arith.constant 0 : index
    %c0_1 = arith.constant 0 : index
    %c0_2 = arith.constant 0 : index
    %c0_3 = arith.constant 0 : index
    %3 = vector.load %arg9[%c0, %c0_1, %c0_2, %c0_3] : memref<8x10x16x32xf32, #tpu.memory_space<vmem>>, vector<8x8x8x32xf32>
    %4 = vector.shape_cast %3 : vector<8x8x8x32xf32> to vector<512x32xf32>
    %5 = arith.truncf %4 : vector<512x32xf32> to vector<512x32xbf16>
    %c0_4 = arith.constant 0 : index
    %c0_5 = arith.constant 0 : index
    %c1 = arith.constant 1 : index
    %c0_6 = arith.constant 0 : index
    %6 = vector.load %arg9[%c0_4, %c0_5, %c1, %c0_6] : memref<8x10x16x32xf32, #tpu.memory_space<vmem>>, vector<8x8x8x32xf32>
    %7 = vector.shape_cast %6 : vector<8x8x8x32xf32> to vector<512x32xf32>
    %8 = arith.truncf %7 : vector<512x32xf32> to vector<512x32xbf16>
    %c0_7 = arith.constant 0 : index
    %c0_8 = arith.constant 0 : index
    %c2 = arith.constant 2 : index
    %c0_9 = arith.constant 0 : index
    %9 = vector.load %arg9[%c0_7, %c0_8, %c2, %c0_9] : memref<8x10x16x32xf32, #tpu.memory_space<vmem>>, vector<8x8x8x32xf32>
    %10 = vector.shape_cast %9 : vector<8x8x8x32xf32> to vector<512x32xf32>
    %11 = arith.truncf %10 : vector<512x32xf32> to vector<512x32xbf16>
    %c0_10 = arith.constant 0 : index
    %c1_11 = arith.constant 1 : index
    %c0_12 = arith.constant 0 : index
    %c0_13 = arith.constant 0 : index
    %12 = vector.load %arg9[%c0_10, %c1_11, %c0_12, %c0_13] : memref<8x10x16x32xf32, #tpu.memory_space<vmem>>, vector<8x8x8x32xf32>
    %13 = vector.shape_cast %12 : vector<8x8x8x32xf32> to vector<512x32xf32>
    %14 = arith.truncf %13 : vector<512x32xf32> to vector<512x32xbf16>
    %c0_14 = arith.constant 0 : index
    %c1_15 = arith.constant 1 : index
    %c1_16 = arith.constant 1 : index
    %c0_17 = arith.constant 0 : index
    %15 = vector.load %arg9[%c0_14, %c1_15, %c1_16, %c0_17] : memref<8x10x16x32xf32, #tpu.memory_space<vmem>>, vector<8x8x8x32xf32>
    %16 = vector.shape_cast %15 : vector<8x8x8x32xf32> to vector<512x32xf32>
    %17 = arith.truncf %16 : vector<512x32xf32> to vector<512x32xbf16>
    %c0_18 = arith.constant 0 : index
    %c1_19 = arith.constant 1 : index
    %c2_20 = arith.constant 2 : index
    %c0_21 = arith.constant 0 : index
    %18 = vector.load %arg9[%c0_18, %c1_19, %c2_20, %c0_21] : memref<8x10x16x32xf32, #tpu.memory_space<vmem>>, vector<8x8x8x32xf32>
    %19 = vector.shape_cast %18 : vector<8x8x8x32xf32> to vector<512x32xf32>
    %20 = arith.truncf %19 : vector<512x32xf32> to vector<512x32xbf16>
    %c0_22 = arith.constant 0 : index
    %c2_23 = arith.constant 2 : index
    %c0_24 = arith.constant 0 : index
    %c0_25 = arith.constant 0 : index
    %21 = vector.load %arg9[%c0_22, %c2_23, %c0_24, %c0_25] : memref<8x10x16x32xf32, #tpu.memory_space<vmem>>, vector<8x8x8x32xf32>
    %22 = vector.shape_cast %21 : vector<8x8x8x32xf32> to vector<512x32xf32>
    %23 = arith.truncf %22 : vector<512x32xf32> to vector<512x32xbf16>
    %c0_26 = arith.constant 0 : index
    %c2_27 = arith.constant 2 : index
    %c1_28 = arith.constant 1 : index
    %c0_29 = arith.constant 0 : index
    %24 = vector.load %arg9[%c0_26, %c2_27, %c1_28, %c0_29] : memref<8x10x16x32xf32, #tpu.memory_space<vmem>>, vector<8x8x8x32xf32>
    %25 = vector.shape_cast %24 : vector<8x8x8x32xf32> to vector<512x32xf32>
    %26 = arith.truncf %25 : vector<512x32xf32> to vector<512x32xbf16>
    %c0_30 = arith.constant 0 : index
    %c2_31 = arith.constant 2 : index
    %c2_32 = arith.constant 2 : index
    %c0_33 = arith.constant 0 : index
    %27 = vector.load %arg9[%c0_30, %c2_31, %c2_32, %c0_33] : memref<8x10x16x32xf32, #tpu.memory_space<vmem>>, vector<8x8x8x32xf32>
    %28 = vector.shape_cast %27 : vector<8x8x8x32xf32> to vector<512x32xf32>
    %29 = arith.truncf %28 : vector<512x32xf32> to vector<512x32xbf16>
    %30 = tpu.concatenate %5, %8, %11, %14, %17, %20, %23, %26, %29 in 1 : vector<512x32xbf16>, vector<512x32xbf16>, vector<512x32xbf16>, vector<512x32xbf16>, vector<512x32xbf16>, vector<512x32xbf16>, vector<512x32xbf16>, vector<512x32xbf16>, vector<512x32xbf16> -> vector<512x288xbf16>
    %c4_i32 = arith.constant 4 : i32
    %31 = arith.cmpi slt, %arg1, %c4_i32 : i32
    %32 = arith.extui %31 : i1 to i32
    %c0_i32_34 = arith.constant 0 : i32
    %33 = arith.cmpi ne, %32, %c0_i32_34 : i32
    scf.if %33 {
      %c3_i32_38 = arith.constant 3 : i32
      %40 = arith.minsi %arg1, %c3_i32_38 : i32
      %41 = arith.index_cast %40 : i32 to index
      %c0_39 = arith.constant 0 : index
      %c0_40 = arith.constant 0 : index
      %42 = vector.load %arg3[%41, %c0_39, %c0_40] : memref<4x288x32xbf16, #tpu.memory_space<vmem>>, vector<1x288x32xbf16>
      %43 = vector.shape_cast %42 : vector<1x288x32xbf16> to vector<288x32xbf16>
      %cst = arith.constant dense<0.000000e+00> : vector<512x32xf32>
      %44 = tpu.matmul %30, %43, %cst {dimension_numbers = #tpu.dot_dimension_numbers<[1], [0], [0], [1], [0, 0, 1, 1], [], []>} : vector<512x288xbf16>, vector<288x32xbf16>, vector<512x32xf32> -> vector<512x32xf32>
      %45 = arith.index_cast %40 : i32 to index
      %c0_41 = arith.constant 0 : index
      %c0_42 = arith.constant 0 : index
      %46 = vector.load %arg4[%45, %c0_41, %c0_42] : memref<4x1x32xf32, #tpu.memory_space<vmem>>, vector<1x1x32xf32>
      %47 = vector.shape_cast %46 : vector<1x1x32xf32> to vector<1x32xf32>
      %48 = vector.broadcast %47 : vector<1x32xf32> to vector<512x32xf32>
      %49 = arith.addf %44, %48 : vector<512x32xf32>
      %cst_43 = arith.constant 0.000000e+00 : f32
      %50 = vector.broadcast %cst_43 : f32 to vector<512x32xf32>
      %51 = arith.maximumf %49, %50 : vector<512x32xf32>
      %52 = vector.shape_cast %51 : vector<512x32xf32> to vector<8x8x8x32xf32>
      %c0_44 = arith.constant 0 : index
      %c1_45 = arith.constant 1 : index
      %c1_46 = arith.constant 1 : index
      %c0_47 = arith.constant 0 : index
      %53 = vector.load %arg9[%c0_44, %c1_45, %c1_46, %c0_47] : memref<8x10x16x32xf32, #tpu.memory_space<vmem>>, vector<8x8x8x32xf32>
      tpu.vector_store %arg9[%c0_44, %c1_45, %c1_46, %c0_47], %52 {strides = array<i32>} : memref<8x10x16x32xf32, #tpu.memory_space<vmem>>, vector<8x8x8x32xf32>,
    } else {
    }
    %c3_i32 = arith.constant 3 : i32
    %34 = arith.cmpi eq, %arg1, %c3_i32 : i32
    %35 = arith.extui %34 : i1 to i32
    %c0_i32_35 = arith.constant 0 : i32
    %36 = arith.cmpi ne, %35, %c0_i32_35 : i32
    scf.if %36 {
      %c0_38 = arith.constant 0 : index
      %c1_39 = arith.constant 1 : index
      %c1_40 = arith.constant 1 : index
      %c0_41 = arith.constant 0 : index
      %40 = vector.load %arg9[%c0_38, %c1_39, %c1_40, %c0_41] : memref<8x10x16x32xf32, #tpu.memory_space<vmem>>, vector<8x8x8x32xf32>
      %c0_42 = arith.constant 0 : index
      %c0_43 = arith.constant 0 : index
      %c0_44 = arith.constant 0 : index
      %c0_45 = arith.constant 0 : index
      %41 = vector.load %arg7[%c0_42, %c0_43, %c0_44, %c0_45] : memref<8x8x8x32xf32, #tpu.memory_space<vmem>>, vector<8x8x8x32xf32>
      tpu.vector_store %arg7[%c0_42, %c0_43, %c0_44, %c0_45], %40 {strides = array<i32>} : memref<8x8x8x32xf32, #tpu.memory_space<vmem>>, vector<8x8x8x32xf32>,
    } else {
    }
    %c4_i32_36 = arith.constant 4 : i32
    %37 = arith.cmpi eq, %arg1, %c4_i32_36 : i32
    %38 = arith.extui %37 : i1 to i32
    %c0_i32_37 = arith.constant 0 : i32
    %39 = arith.cmpi ne, %38, %c0_i32_37 : i32
    scf.if %39 {
      %c0_38 = arith.constant 0 : index
      %c0_39 = arith.constant 0 : index
      %40 = vector.load %arg5[%c0_38, %c0_39] : memref<288x128xbf16, #tpu.memory_space<vmem>>, vector<288x128xbf16>
      %cst = arith.constant dense<0.000000e+00> : vector<512x128xf32>
      %41 = tpu.matmul %30, %40, %cst {dimension_numbers = #tpu.dot_dimension_numbers<[1], [0], [0], [1], [0, 0, 1, 1], [], []>} : vector<512x288xbf16>, vector<288x128xbf16>, vector<512x128xf32> -> vector<512x128xf32>
      %c0_40 = arith.constant 0 : index
      %c0_41 = arith.constant 0 : index
      %42 = vector.load %arg6[%c0_40, %c0_41] : memref<1x128xf32, #tpu.memory_space<vmem>>, vector<1x128xf32>
      %43 = vector.broadcast %42 : vector<1x128xf32> to vector<512x128xf32>
      %44 = arith.addf %41, %43 : vector<512x128xf32>
      %45 = vector.shape_cast %44 : vector<512x128xf32> to vector<8x8x8x128xf32>
      %c0_42 = arith.constant 0 : index
      %c0_43 = arith.constant 0 : index
      %c0_44 = arith.constant 0 : index
      %c0_45 = arith.constant 0 : index
      %46 = vector.load %arg8[%c0_42, %c0_43, %c0_44, %c0_45] : memref<8x8x8x128xf32, #tpu.memory_space<vmem>>, vector<8x8x8x128xf32>
      tpu.vector_store %arg8[%c0_42, %c0_43, %c0_44, %c0_45], %45 {strides = array<i32>} : memref<8x8x8x128xf32, #tpu.memory_space<vmem>>, vector<8x8x8x128xf32>,
    } else {
    }
    return
  }
  func.func @transform_0(%arg0: i32, %arg1: i32) -> (i32, i32, i32, i32) {
    %c0_i32 = arith.constant 0 : i32
    %c0_i32_0 = arith.constant 0 : i32
    %c0_i32_1 = arith.constant 0 : i32
    %c0_i32_2 = arith.constant 0 : i32
    return %arg0, %c0_i32, %c0_i32_0, %c0_i32_1 : i32, i32, i32, i32
  }
  func.func @transform_1(%arg0: i32, %arg1: i32) -> (i32, i32, i32) {
    %c0_i32 = arith.constant 0 : i32
    %c0_i32_0 = arith.constant 0 : i32
    %c0_i32_1 = arith.constant 0 : i32
    %c0_i32_2 = arith.constant 0 : i32
    return %c0_i32, %c0_i32_0, %c0_i32_1 : i32, i32, i32
  }
  func.func @transform_2(%arg0: i32, %arg1: i32) -> (i32, i32, i32) {
    %c0_i32 = arith.constant 0 : i32
    %c0_i32_0 = arith.constant 0 : i32
    %c0_i32_1 = arith.constant 0 : i32
    %c0_i32_2 = arith.constant 0 : i32
    return %c0_i32, %c0_i32_0, %c0_i32_1 : i32, i32, i32
  }
  func.func @transform_3(%arg0: i32, %arg1: i32) -> (i32, i32) {
    %c0_i32 = arith.constant 0 : i32
    %c0_i32_0 = arith.constant 0 : i32
    %c0_i32_1 = arith.constant 0 : i32
    return %c0_i32, %c0_i32_0 : i32, i32
  }
  func.func @transform_4(%arg0: i32, %arg1: i32) -> (i32, i32) {
    %c0_i32 = arith.constant 0 : i32
    %c0_i32_0 = arith.constant 0 : i32
    %c0_i32_1 = arith.constant 0 : i32
    return %c0_i32, %c0_i32_0 : i32, i32
  }
  func.func @transform_5(%arg0: i32, %arg1: i32) -> (i32, i32, i32, i32) {
    %c0_i32 = arith.constant 0 : i32
    %c0_i32_0 = arith.constant 0 : i32
    %c0_i32_1 = arith.constant 0 : i32
    %c0_i32_2 = arith.constant 0 : i32
    return %arg0, %c0_i32, %c0_i32_0, %c0_i32_1 : i32, i32, i32, i32
  }
  func.func @transform_6(%arg0: i32, %arg1: i32) -> (i32, i32, i32, i32) {
    %c0_i32 = arith.constant 0 : i32
    %c0_i32_0 = arith.constant 0 : i32
    %c0_i32_1 = arith.constant 0 : i32
    %c0_i32_2 = arith.constant 0 : i32
    return %arg0, %c0_i32, %c0_i32_0, %c0_i32_1 : i32, i32, i32, i32
  }
}

</mosaic_0001>

<llo_original>
// kernel: _lambda_.1
$region0: #{_lambda_.1}
  #allocation0 [shape = 'u32[]', space=smem, size = 0x4, offset = 0x4, fixed_abs, tag = 'smem constant byte address 0x4 - core index']
  #allocation1 [shape = 'u32[144,128]{1,0:T(1,128)}', space=vmem, size = 0x12000, scoped, tag = 'internal scratch']
  #allocation2 [shape = 'f32[8,10,16,32]{3,2,1,0:T(8,128)}', space=vmem, size = 0xa0000, scoped, tag = 'scratch operand']
  %s0 = inlined_call_operand.vmem [shape: f32[8,8,8,32], index: 0, kind: input, shape index: {}]
  %s1 = inlined_call_operand.vmem [shape: bf16[4,288,32], index: 1, kind: input, shape index: {}]
  %s2 = inlined_call_operand.vmem [shape: f32[4,1,32], index: 2, kind: input, shape index: {}]
  %s3 = inlined_call_operand.vmem [shape: bf16[288,128], index: 3, kind: input, shape index: {}]
  %s4 = inlined_call_operand.vmem [shape: f32[1,128], index: 4, kind: input, shape index: {}]
  %s5 = inlined_call_operand.vmem [shape: f32[8,8,8,32], index: 5, kind: output, shape index: {0}]
  %s6 = inlined_call_operand.vmem [shape: f32[8,8,8,128], index: 6, kind: output, shape index: {1}]
  %7 = xla_tuple %s5, %s6
  %s8 = sld [smem:[#allocation0]]
  $region77: #{_lambda_.1} parent=0
    _
  %s10 = ssub.s32 1, %s8
  %s11 = scalar_select 0, %s10, %s8
  loop: start=0, step=1, limit=7
  $region2: #{_lambda_.1} parent=0 // loop_pre_header
    _
  $region3: #{_lambda_.1} parent=0 // loop_header
    %s13 = sphi 0, %s17
    %p14 = scmp.ge.s32.totalorder %s13, 7
    %s20 = sphi 0, %s32
    %s21 = sphi 0, %s28
    %s22 = sphi 0, %s20
    %s23 = sphi 0, %s21
    %s24 = sphi 0, %s22
    %s25 = sphi 0, %s23
    %s35 = sphi 0, %s37
    %s38 = sphi 0, %s35
    %s39 = sphi 0, %s38
    %s55 = sphi 0, %s39
    %s59 = sphi 0, %s59
    %s61 = sphi 0, %s59
    %s62 = sphi 0, %s61
    %s76 = sphi 0, %s62
    %s80 = sphi 0, %s80
    %s82 = sphi 0, %s80
    %s83 = sphi 0, %s82
    %s97 = sphi 0, %s83
    %s101 = sphi 0, %s101
    %s103 = sphi 0, %s101
    %s104 = sphi 0, %s103
    %s118 = sphi 0, %s104
    %s122 = sphi 0, %s122
    %s124 = sphi 0, %s122
    %s125 = sphi 0, %s124
    %s139 = sphi 0, %s125
    %s145 = sphi 0, %s147
    %s148 = sphi 0, %s145
    %s149 = sphi 0, %s148
    %s165 = sphi 0, %s149
    %s171 = sphi 0, %s173
    %s174 = sphi 0, %s171
    %s175 = sphi 0, %s174
    %s191 = sphi 0, %s175
  $region4: #{_lambda_.1} parent=0 // loop_header_branch
    %16 = sbr.rel (%p14) target = $region8
  $region5: #{_lambda_.1} parent=0 // loop_body
    %s18 = ssub.s32 %s13, 1
    %s19 = ssub.s32 %s13, 2
    %s26 = sadd.s32 1, %s21
    %p27 = scmp.ge.s32.totalorder %s26, 5
    %s28 = scalar_select %p27, 0, %s26
    %s29 = sadd.s32 1, %s20
    %s30 = scalar_select %p27, %s29, %s20
    %p31 = scmp.ge.s32.totalorder %s30, 1
    %s32 = scalar_select %p31, 0, %s30
    %s33 = ssub.s32 %s20, %s32
    %p34 = scmp.eq.s32.totalorder %s33, 0
    %s36 = sadd.s32 %s35, 1
    %s37 = scalar_select %p34, %s35, %s36
    %p40 = pneg %p34
    %p41 = scmp.eq.s32.totalorder %s13, 4
    %p42 = por %p40, %p41
    %p43 = scmp.ne.s32.totalorder %s35, %s38
    %p44 = scmp.eq.s32.totalorder %s13, 0
    %p45 = por %p43, %p44
    %p46 = scmp.ne.s32.totalorder %s35, %s38
    %p47 = scmp.eq.s32.totalorder %s18, 4
    %p48 = por %p46, %p47
    %p49 = scmp.ne.s32.totalorder %s38, %s39
    %p50 = scmp.eq.s32.totalorder %s18, 0
    %p51 = por %p49, %p50
    %p52 = scmp.ne.s32.totalorder %s38, %s39
    %p53 = scmp.eq.s32.totalorder %s19, 4
    %p54 = por %p52, %p53
    %p56 = scmp.ne.s32.totalorder %s39, %s55
    %p57 = scmp.eq.s32.totalorder %s19, 0
    %p58 = por %p56, %p57
    %s60 = sadd.s32 %s59, 1
    %p63 = scmp.eq.s32.totalorder %s13, 4
    %p64 = scmp.ne.s32.totalorder %s59, %s61
    %p65 = scmp.eq.s32.totalorder %s13, 0
    %p66 = por %p64, %p65
    %p67 = scmp.ne.s32.totalorder %s59, %s61
    %p68 = scmp.eq.s32.totalorder %s18, 4
    %p69 = por %p67, %p68
    %p70 = scmp.ne.s32.totalorder %s61, %s62
    %p71 = scmp.eq.s32.totalorder %s18, 0
    %p72 = por %p70, %p71
    %p73 = scmp.ne.s32.totalorder %s61, %s62
    %p74 = scmp.eq.s32.totalorder %s19, 4
    %p75 = por %p73, %p74
    %p77 = scmp.ne.s32.totalorder %s62, %s76
    %p78 = scmp.eq.s32.totalorder %s19, 0
    %p79 = por %p77, %p78
    %s81 = sadd.s32 %s80, 1
    %p84 = scmp.eq.s32.totalorder %s13, 4
    %p85 = scmp.ne.s32.totalorder %s80, %s82
    %p86 = scmp.eq.s32.totalorder %s13, 0
    %p87 = por %p85, %p86
    %p88 = scmp.ne.s32.totalorder %s80, %s82
    %p89 = scmp.eq.s32.totalorder %s18, 4
    %p90 = por %p88, %p89
    %p91 = scmp.ne.s32.totalorder %s82, %s83
    %p92 = scmp.eq.s32.totalorder %s18, 0
    %p93 = por %p91, %p92
    %p94 = scmp.ne.s32.totalorder %s82, %s83
    %p95 = scmp.eq.s32.totalorder %s19, 4
    %p96 = por %p94, %p95
    %p98 = scmp.ne.s32.totalorder %s83, %s97
    %p99 = scmp.eq.s32.totalorder %s19, 0
    %p100 = por %p98, %p99
    %s102 = sadd.s32 %s101, 1
    %p105 = scmp.eq.s32.totalorder %s13, 4
    %p106 = scmp.ne.s32.totalorder %s101, %s103
    %p107 = scmp.eq.s32.totalorder %s13, 0
    %p108 = por %p106, %p107
    %p109 = scmp.ne.s32.totalorder %s101, %s103
    %p110 = scmp.eq.s32.totalorder %s18, 4
    %p111 = por %p109, %p110
    %p112 = scmp.ne.s32.totalorder %s103, %s104
    %p113 = scmp.eq.s32.totalorder %s18, 0
    %p114 = por %p112, %p113
    %p115 = scmp.ne.s32.totalorder %s103, %s104
    %p116 = scmp.eq.s32.totalorder %s19, 4
    %p117 = por %p115, %p116
    %p119 = scmp.ne.s32.totalorder %s104, %s118
    %p120 = scmp.eq.s32.totalorder %s19, 0
    %p121 = por %p119, %p120
    %s123 = sadd.s32 %s122, 1
    %p126 = scmp.eq.s32.totalorder %s13, 4
    %p127 = scmp.ne.s32.totalorder %s122, %s124
    %p128 = scmp.eq.s32.totalorder %s13, 0
    %p129 = por %p127, %p128
    %p130 = scmp.ne.s32.totalorder %s122, %s124
    %p131 = scmp.eq.s32.totalorder %s18, 4
    %p132 = por %p130, %p131
    %p133 = scmp.ne.s32.totalorder %s124, %s125
    %p134 = scmp.eq.s32.totalorder %s18, 0
    %p135 = por %p133, %p134
    %p136 = scmp.ne.s32.totalorder %s124, %s125
    %p137 = scmp.eq.s32.totalorder %s19, 4
    %p138 = por %p136, %p137
    %p140 = scmp.ne.s32.totalorder %s125, %s139
    %p141 = scmp.eq.s32.totalorder %s19, 0
    %p142 = por %p140, %p141
    %s143 = ssub.s32 %s20, %s32
    %p144 = scmp.eq.s32.totalorder %s143, 0
    %s146 = sadd.s32 %s145, 1
    %s147 = scalar_select %p144, %s145, %s146
    %p150 = pneg %p144
    %p151 = scmp.eq.s32.totalorder %s13, 4
    %p152 = por %p150, %p151
    %p153 = scmp.ne.s32.totalorder %s145, %s148
    %p154 = scmp.eq.s32.totalorder %s13, 0
    %p155 = por %p153, %p154
    %p156 = scmp.ne.s32.totalorder %s145, %s148
    %p157 = scmp.eq.s32.totalorder %s18, 4
    %p158 = por %p156, %p157
    %p159 = scmp.ne.s32.totalorder %s148, %s149
    %p160 = scmp.eq.s32.totalorder %s18, 0
    %p161 = por %p159, %p160
    %p162 = scmp.ne.s32.totalorder %s148, %s149
    %p163 = scmp.eq.s32.totalorder %s19, 4
    %p164 = por %p162, %p163
    %p166 = scmp.ne.s32.totalorder %s149, %s165
    %p167 = scmp.eq.s32.totalorder %s19, 0
    %p168 = por %p166, %p167
    %s169 = ssub.s32 %s20, %s32
    %p170 = scmp.eq.s32.totalorder %s169, 0
    %s172 = sadd.s32 %s171, 1
    %s173 = scalar_select %p170, %s171, %s172
    %p176 = pneg %p170
    %p177 = scmp.eq.s32.totalorder %s13, 4
    %p178 = por %p176, %p177
    %p179 = scmp.ne.s32.totalorder %s171, %s174
    %p180 = scmp.eq.s32.totalorder %s13, 0
    %p181 = por %p179, %p180
    %p182 = scmp.ne.s32.totalorder %s171, %s174
    %p183 = scmp.eq.s32.totalorder %s18, 4
    %p184 = por %p182, %p183
    %p185 = scmp.ne.s32.totalorder %s174, %s175
    %p186 = scmp.eq.s32.totalorder %s18, 0
    %p187 = por %p185, %p186
    %p188 = scmp.ne.s32.totalorder %s174, %s175
    %p189 = scmp.eq.s32.totalorder %s19, 4
    %p190 = por %p188, %p189
    %p192 = scmp.ne.s32.totalorder %s175, %s191
    %p193 = scmp.eq.s32.totalorder %s19, 0
    %p194 = por %p192, %p193
    %p195 = scmp.le.s32.totalorder 1, %s13
    %p196 = scmp.lt.s32.totalorder %s13, 6
    %p197 = pnand %p195, %p196
    %p198 = pneg %p197
    // Predicated region
    $region9: #{_lambda_.1} parent=5 // pred_check
      _
    $region10: #{_lambda_.1} parent=5 // pred_check_branch
      %200 = sbr.rel (%p197) target = $region12
    $region11: #{_lambda_.1} parent=5 // pred_region
      %s201 = ssub.s32 %s13, 1
      // Predicated region
      $region13: #{_lambda_.1} parent=11 // pred_check
        %p202 = pneg %p51
      $region14: #{_lambda_.1} parent=11 // pred_check_branch
        %204 = sbr.rel (%p202) target = $region16
      $region15: #{_lambda_.1} parent=11 // pred_region
        %s205 = smul.u32 8, %s22
        %p206 = scmp.lt.s32.totalorder %s205, 7
        %s207 = scalar_select %p206, %s205, 7
        %s208 = smul.addr %s207, 8
        %s209 = smul.addr %s208, 8
        %s210 = scalar_lea.vmem %s0, %s209
        %s211 = smul.u32 8, %s22
      $region16: #{_lambda_.1} parent=11 // pred_fallthru
        _
      // Predicated region
      $region17: #{_lambda_.1} parent=11 // pred_check
        %p212 = pneg %p72
      $region18: #{_lambda_.1} parent=11 // pred_check_branch
        %214 = sbr.rel (%p212) target = $region20
      $region19: #{_lambda_.1} parent=11 // pred_region
        _
      $region20: #{_lambda_.1} parent=11 // pred_fallthru
        _
      // Predicated region
      $region21: #{_lambda_.1} parent=11 // pred_check
        %p215 = pneg %p93
      $region22: #{_lambda_.1} parent=11 // pred_check_branch
        %217 = sbr.rel (%p215) target = $region24
      $region23: #{_lambda_.1} parent=11 // pred_region
        _
      $region24: #{_lambda_.1} parent=11 // pred_fallthru
        _
      // Predicated region
      $region25: #{_lambda_.1} parent=11 // pred_check
        %p218 = pneg %p114
      $region26: #{_lambda_.1} parent=11 // pred_check_branch
        %220 = sbr.rel (%p218) target = $region28
      $region27: #{_lambda_.1} parent=11 // pred_region
        _
      $region28: #{_lambda_.1} parent=11 // pred_fallthru
        _
      // Predicated region
      $region29: #{_lambda_.1} parent=11 // pred_check
        %p221 = pneg %p135
      $region30: #{_lambda_.1} parent=11 // pred_check_branch
        %223 = sbr.rel (%p221) target = $region32
      $region31: #{_lambda_.1} parent=11 // pred_region
        _
      $region32: #{_lambda_.1} parent=11 // pred_fallthru
        _
    $region12: #{_lambda_.1} parent=5 // pred_fallthru
      _
    %p224 = scmp.lt.s32.totalorder %s13, 5
    // Predicated region
    $region33: #{_lambda_.1} parent=5 // pred_check
      %p225 = pneg %p224
    $region34: #{_lambda_.1} parent=5 // pred_check_branch
      %227 = sbr.rel (%p225) target = $region36
    $region35: #{_lambda_.1} parent=5 // pred_region
      _
    $region36: #{_lambda_.1} parent=5 // pred_fallthru
      _
    %p228 = scmp.le.s32.totalorder 1, %s13
    %p229 = scmp.lt.s32.totalorder %s13, 6
    %p230 = pnand %p228, %p229
    %p231 = pneg %p230
    // Predicated region
    $region37: #{_lambda_.1} parent=5 // pred_check
      _
    $region38: #{_lambda_.1} parent=5 // pred_check_branch
      %233 = sbr.rel (%p230) target = $region40
    $region39: #{_lambda_.1} parent=5 // pred_region
      %s234 = ssub.s32 %s13, 1
      %s235 = smul.u32 8, %s22
      %p236 = scmp.lt.s32.totalorder %s235, 7
      %s237 = scalar_select %p236, %s235, 7
      %s238 = smul.addr %s237, 8
      %s239 = smul.addr %s238, 8
      %s240 = scalar_lea.vmem %s0, %s239
      %p241 = pneg %p51
      %p242 = pneg %p48
      %p243 = pneg %p72
      %p244 = pneg %p69
      %p245 = pneg %p93
      %p246 = pneg %p90
      %p247 = pneg %p114
      %p248 = pneg %p111
      %p249 = pneg %p135
      %p250 = pneg %p132
      %p251 = pneg %p161
      %p252 = pneg %p158
      %s253 = smul.u32 8, %s22
      %p254 = scmp.lt.s32.totalorder %s253, 7
      %s255 = scalar_select %p254, %s253, 7
      %s256 = smul.addr %s255, 8
      %s257 = smul.addr %s256, 8
      %s258 = scalar_lea.vmem %s5, %s257
      %p259 = pneg %p187
      %p260 = pneg %p184
      %s261 = smul.u32 8, %s22
      %p262 = scmp.lt.s32.totalorder %s261, 7
      %s263 = scalar_select %p262, %s261, 7
      %s264 = smul.addr %s263, 8
      %s265 = smul.addr %s264, 8
      %s266 = scalar_lea.vmem %s6, %s265
      %s267 = smul.u32 8, %s22
      %p268 = scmp.lt.s32.totalorder %s267, 7
      %s269 = scalar_select %p268, %s267, 7
      %s270 = smul.addr %s269, 8
      %s271 = smul.addr %s270, 8
      %s272 = scalar_lea.vmem %s0, %s271
      %s273 = smul.u32 8, %s22
      %s274 = smul.u32 8, %s22
      %p275 = scmp.lt.s32.totalorder %s274, 7
      %s276 = scalar_select %p275, %s274, 7
      %s277 = smul.addr %s276, 8
      %s278 = smul.addr %s277, 8
      %s279 = scalar_lea.vmem %s5, %s278
      %s280 = smul.u32 8, %s22
      %s281 = smul.u32 8, %s22
      %p282 = scmp.lt.s32.totalorder %s281, 7
      %s283 = scalar_select %p282, %s281, 7
      %s284 = smul.addr %s283, 8
      %s285 = smul.addr %s284, 8
      %s286 = scalar_lea.vmem %s6, %s285
      %s287 = smul.u32 8, %s22
      %p289 = scmp.eq.s32.totalorder %s23, 0
      // Predicated region
      $region41: #{_lambda_.1} parent=39 // pred_check
        %p290 = pneg %p289
      $region42: #{_lambda_.1} parent=39 // pred_check_branch
        %292 = sbr.rel (%p290) target = $region44
      $region43: #{_lambda_.1} parent=39 // pred_region
        %vm293 = vcmask 261120
        %294 = vst.msk [vmem:[#allocation2] sm:$0xff] %vm293, 0.0
        %295 = vst.msk [vmem:[#allocation2 + $0x8] sm:$0xff] %vm293, 0.0
        %296 = vst.msk [vmem:[#allocation2 + $0xa0] sm:$0xff] %vm293, 0.0
        %297 = vst.msk [vmem:[#allocation2 + $0xa8] sm:$0xff] %vm293, 0.0
        %298 = vst.msk [vmem:[#allocation2 + $0x140] sm:$0xff] %vm293, 0.0
        %299 = vst.msk [vmem:[#allocation2 + $0x148] sm:$0xff] %vm293, 0.0
        %300 = vst.msk [vmem:[#allocation2 + $0x1e0] sm:$0xff] %vm293, 0.0
        %301 = vst.msk [vmem:[#allocation2 + $0x1e8] sm:$0xff] %vm293, 0.0
        %302 = vst.msk [vmem:[#allocation2 + $0x280] sm:$0xff] %vm293, 0.0
        %303 = vst.msk [vmem:[#allocation2 + $0x288] sm:$0xff] %vm293, 0.0
        %304 = vst.msk [vmem:[#allocation2 + $0x320] sm:$0xff] %vm293, 0.0
        %305 = vst.msk [vmem:[#allocation2 + $0x328] sm:$0xff] %vm293, 0.0
        %306 = vst.msk [vmem:[#allocation2 + $0x3c0] sm:$0xff] %vm293, 0.0
        %307 = vst.msk [vmem:[#allocation2 + $0x3c8] sm:$0xff] %vm293, 0.0
        %308 = vst.msk [vmem:[#allocation2 + $0x460] sm:$0xff] %vm293, 0.0
        %309 = vst.msk [vmem:[#allocation2 + $0x468] sm:$0xff] %vm293, 0.0
        %s310 = scalar_lea.vmem [#allocation2], 144
        %311 = vst.msk [vmem:[%s310] sm:$0xff] %vm293, 0.0
        %312 = vst.msk [vmem:[%s310 + $0x8] sm:$0xff] %vm293, 0.0
        %313 = vst.msk [vmem:[%s310 + $0xa0] sm:$0xff] %vm293, 0.0
        %314 = vst.msk [vmem:[%s310 + $0xa8] sm:$0xff] %vm293, 0.0
        %315 = vst.msk [vmem:[%s310 + $0x140] sm:$0xff] %vm293, 0.0
        %316 = vst.msk [vmem:[%s310 + $0x148] sm:$0xff] %vm293, 0.0
        %317 = vst.msk [vmem:[%s310 + $0x1e0] sm:$0xff] %vm293, 0.0
        %318 = vst.msk [vmem:[%s310 + $0x1e8] sm:$0xff] %vm293, 0.0
        %319 = vst.msk [vmem:[%s310 + $0x280] sm:$0xff] %vm293, 0.0
        %320 = vst.msk [vmem:[%s310 + $0x288] sm:$0xff] %vm293, 0.0
        %321 = vst.msk [vmem:[%s310 + $0x320] sm:$0xff] %vm293, 0.0
        %322 = vst.msk [vmem:[%s310 + $0x328] sm:$0xff] %vm293, 0.0
        %323 = vst.msk [vmem:[%s310 + $0x3c0] sm:$0xff] %vm293, 0.0
        %324 = vst.msk [vmem:[%s310 + $0x3c8] sm:$0xff] %vm293, 0.0
        %325 = vst.msk [vmem:[%s310 + $0x460] sm:$0xff] %vm293, 0.0
        %326 = vst.msk [vmem:[%s310 + $0x468] sm:$0xff] %vm293, 0.0
        %vm327 = vcmask 253952
        %328 = vst.msk [vmem:[#allocation2] sm:$0x1] %vm327, 0.0
        %329 = vst.msk [vmem:[#allocation2 + $0x10] sm:$0x1] %vm327, 0.0
        %330 = vst.msk [vmem:[#allocation2 + $0x20] sm:$0x1] %vm327, 0.0
        %331 = vst.msk [vmem:[#allocation2 + $0x30] sm:$0x1] %vm327, 0.0
        %332 = vst.msk [vmem:[#allocation2 + $0x40] sm:$0x1] %vm327, 0.0
        %333 = vst.msk [vmem:[#allocation2 + $0x50] sm:$0x1] %vm327, 0.0
        %334 = vst.msk [vmem:[#allocation2 + $0x60] sm:$0x1] %vm327, 0.0
        %335 = vst.msk [vmem:[#allocation2 + $0x70] sm:$0x1] %vm327, 0.0
        %336 = vst.msk [vmem:[#allocation2 + $0x80] sm:$0x1] %vm327, 0.0
        %337 = vst.msk [vmem:[#allocation2 + $0x90] sm:$0x1] %vm327, 0.0
        %338 = vst.msk [vmem:[#allocation2 + $0xa0] sm:$0x1] %vm327, 0.0
        %339 = vst.msk [vmem:[#allocation2 + $0xb0] sm:$0x1] %vm327, 0.0
        %340 = vst.msk [vmem:[#allocation2 + $0xc0] sm:$0x1] %vm327, 0.0
        %341 = vst.msk [vmem:[#allocation2 + $0xd0] sm:$0x1] %vm327, 0.0
        %342 = vst.msk [vmem:[#allocation2 + $0xe0] sm:$0x1] %vm327, 0.0
        %343 = vst.msk [vmem:[#allocation2 + $0xf0] sm:$0x1] %vm327, 0.0
        %344 = vst.msk [vmem:[#allocation2 + $0x100] sm:$0x1] %vm327, 0.0
        %345 = vst.msk [vmem:[#allocation2 + $0x110] sm:$0x1] %vm327, 0.0
        %346 = vst.msk [vmem:[#allocation2 + $0x120] sm:$0x1] %vm327, 0.0
        %347 = vst.msk [vmem:[#allocation2 + $0x130] sm:$0x1] %vm327, 0.0
        %348 = vst.msk [vmem:[#allocation2 + $0x140] sm:$0x1] %vm327, 0.0
        %349 = vst.msk [vmem:[#allocation2 + $0x150] sm:$0x1] %vm327, 0.0
        %350 = vst.msk [vmem:[#allocation2 + $0x160] sm:$0x1] %vm327, 0.0
        %351 = vst.msk [vmem:[#allocation2 + $0x170] sm:$0x1] %vm327, 0.0
        %352 = vst.msk [vmem:[#allocation2 + $0x180] sm:$0x1] %vm327, 0.0
        %353 = vst.msk [vmem:[#allocation2 + $0x190] sm:$0x1] %vm327, 0.0
        %354 = vst.msk [vmem:[#allocation2 + $0x1a0] sm:$0x1] %vm327, 0.0
        %355 = vst.msk [vmem:[#allocation2 + $0x1b0] sm:$0x1] %vm327, 0.0
        %356 = vst.msk [vmem:[#allocation2 + $0x1c0] sm:$0x1] %vm327, 0.0
        %357 = vst.msk [vmem:[#allocation2 + $0x1d0] sm:$0x1] %vm327, 0.0
        %358 = vst.msk [vmem:[#allocation2 + $0x1e0] sm:$0x1] %vm327, 0.0
        %359 = vst.msk [vmem:[#allocation2 + $0x1f0] sm:$0x1] %vm327, 0.0
        %360 = vst.msk [vmem:[#allocation2 + $0x200] sm:$0x1] %vm327, 0.0
        %361 = vst.msk [vmem:[#allocation2 + $0x210] sm:$0x1] %vm327, 0.0
        %362 = vst.msk [vmem:[#allocation2 + $0x220] sm:$0x1] %vm327, 0.0
        %363 = vst.msk [vmem:[#allocation2 + $0x230] sm:$0x1] %vm327, 0.0
        %364 = vst.msk [vmem:[#allocation2 + $0x240] sm:$0x1] %vm327, 0.0
        %365 = vst.msk [vmem:[#allocation2 + $0x250] sm:$0x1] %vm327, 0.0
        %366 = vst.msk [vmem:[#allocation2 + $0x260] sm:$0x1] %vm327, 0.0
        %367 = vst.msk [vmem:[#allocation2 + $0x270] sm:$0x1] %vm327, 0.0
        %368 = vst.msk [vmem:[#allocation2 + $0x280] sm:$0x1] %vm327, 0.0
        %369 = vst.msk [vmem:[#allocation2 + $0x290] sm:$0x1] %vm327, 0.0
        %370 = vst.msk [vmem:[#allocation2 + $0x2a0] sm:$0x1] %vm327, 0.0
        %371 = vst.msk [vmem:[#allocation2 + $0x2b0] sm:$0x1] %vm327, 0.0
        %372 = vst.msk [vmem:[#allocation2 + $0x2c0] sm:$0x1] %vm327, 0.0
        %373 = vst.msk [vmem:[#allocation2 + $0x2d0] sm:$0x1] %vm327, 0.0
        %374 = vst.msk [vmem:[#allocation2 + $0x2e0] sm:$0x1] %vm327, 0.0
        %375 = vst.msk [vmem:[#allocation2 + $0x2f0] sm:$0x1] %vm327, 0.0
        %376 = vst.msk [vmem:[#allocation2 + $0x300] sm:$0x1] %vm327, 0.0
        %377 = vst.msk [vmem:[#allocation2 + $0x310] sm:$0x1] %vm327, 0.0
        %378 = vst.msk [vmem:[#allocation2 + $0x320] sm:$0x1] %vm327, 0.0
        %379 = vst.msk [vmem:[#allocation2 + $0x330] sm:$0x1] %vm327, 0.0
        %380 = vst.msk [vmem:[#allocation2 + $0x340] sm:$0x1] %vm327, 0.0
        %381 = vst.msk [vmem:[#allocation2 + $0x350] sm:$0x1] %vm327, 0.0
        %382 = vst.msk [vmem:[#allocation2 + $0x360] sm:$0x1] %vm327, 0.0
        %383 = vst.msk [vmem:[#allocation2 + $0x370] sm:$0x1] %vm327, 0.0
        %384 = vst.msk [vmem:[#allocation2 + $0x380] sm:$0x1] %vm327, 0.0
        %385 = vst.msk [vmem:[#allocation2 + $0x390] sm:$0x1] %vm327, 0.0
        %386 = vst.msk [vmem:[#allocation2 + $0x3a0] sm:$0x1] %vm327, 0.0
        %387 = vst.msk [vmem:[#allocation2 + $0x3b0] sm:$0x1] %vm327, 0.0
        %388 = vst.msk [vmem:[#allocation2 + $0x3c0] sm:$0x1] %vm327, 0.0
        %389 = vst.msk [vmem:[#allocation2 + $0x3d0] sm:$0x1] %vm327, 0.0
        %390 = vst.msk [vmem:[#allocation2 + $0x3e0] sm:$0x1] %vm327, 0.0
        %391 = vst.msk [vmem:[#allocation2 + $0x3f0] sm:$0x1] %vm327, 0.0
        %392 = vst.msk [vmem:[#allocation2 + $0x400] sm:$0x1] %vm327, 0.0
        %393 = vst.msk [vmem:[#allocation2 + $0x410] sm:$0x1] %vm327, 0.0
        %394 = vst.msk [vmem:[#allocation2 + $0x420] sm:$0x1] %vm327, 0.0
        %395 = vst.msk [vmem:[#allocation2 + $0x430] sm:$0x1] %vm327, 0.0
        %396 = vst.msk [vmem:[#allocation2 + $0x440] sm:$0x1] %vm327, 0.0
        %397 = vst.msk [vmem:[#allocation2 + $0x450] sm:$0x1] %vm327, 0.0
        %398 = vst.msk [vmem:[#allocation2 + $0x460] sm:$0x1] %vm327, 0.0
        %399 = vst.msk [vmem:[#allocation2 + $0x470] sm:$0x1] %vm327, 0.0
        %400 = vst.msk [vmem:[#allocation2 + $0x480] sm:$0x1] %vm327, 0.0
        %401 = vst.msk [vmem:[#allocation2 + $0x490] sm:$0x1] %vm327, 0.0
        %402 = vst.msk [vmem:[#allocation2 + $0x4a0] sm:$0x1] %vm327, 0.0
        %403 = vst.msk [vmem:[#allocation2 + $0x4b0] sm:$0x1] %vm327, 0.0
        %404 = vst.msk [vmem:[#allocation2 + $0x4c0] sm:$0x1] %vm327, 0.0
        %405 = vst.msk [vmem:[#allocation2 + $0x4d0] sm:$0x1] %vm327, 0.0
        %406 = vst.msk [vmem:[#allocation2 + $0x4e0] sm:$0x1] %vm327, 0.0
        %407 = vst.msk [vmem:[#allocation2 + $0x4f0] sm:$0x1] %vm327, 0.0
        %408 = vst.msk [vmem:[#allocation2 + $0x9] sm:$0x1] %vm327, 0.0
        %409 = vst.msk [vmem:[#allocation2 + $0x19] sm:$0x1] %vm327, 0.0
        %410 = vst.msk [vmem:[#allocation2 + $0x29] sm:$0x1] %vm327, 0.0
        %411 = vst.msk [vmem:[#allocation2 + $0x39] sm:$0x1] %vm327, 0.0
        %412 = vst.msk [vmem:[#allocation2 + $0x49] sm:$0x1] %vm327, 0.0
        %413 = vst.msk [vmem:[#allocation2 + $0x59] sm:$0x1] %vm327, 0.0
        %414 = vst.msk [vmem:[#allocation2 + $0x69] sm:$0x1] %vm327, 0.0
        %415 = vst.msk [vmem:[#allocation2 + $0x79] sm:$0x1] %vm327, 0.0
        %416 = vst.msk [vmem:[#allocation2 + $0x89] sm:$0x1] %vm327, 0.0
        %417 = vst.msk [vmem:[#allocation2 + $0x99] sm:$0x1] %vm327, 0.0
        %418 = vst.msk [vmem:[#allocation2 + $0xa9] sm:$0x1] %vm327, 0.0
        %419 = vst.msk [vmem:[#allocation2 + $0xb9] sm:$0x1] %vm327, 0.0
        %420 = vst.msk [vmem:[#allocation2 + $0xc9] sm:$0x1] %vm327, 0.0
        %421 = vst.msk [vmem:[#allocation2 + $0xd9] sm:$0x1] %vm327, 0.0
        %422 = vst.msk [vmem:[#allocation2 + $0xe9] sm:$0x1] %vm327, 0.0
        %423 = vst.msk [vmem:[#allocation2 + $0xf9] sm:$0x1] %vm327, 0.0
        %424 = vst.msk [vmem:[#allocation2 + $0x109] sm:$0x1] %vm327, 0.0
        %425 = vst.msk [vmem:[#allocation2 + $0x119] sm:$0x1] %vm327, 0.0
        %426 = vst.msk [vmem:[#allocation2 + $0x129] sm:$0x1] %vm327, 0.0
        %427 = vst.msk [vmem:[#allocation2 + $0x139] sm:$0x1] %vm327, 0.0
        %428 = vst.msk [vmem:[#allocation2 + $0x149] sm:$0x1] %vm327, 0.0
        %429 = vst.msk [vmem:[#allocation2 + $0x159] sm:$0x1] %vm327, 0.0
        %430 = vst.msk [vmem:[#allocation2 + $0x169] sm:$0x1] %vm327, 0.0
        %431 = vst.msk [vmem:[#allocation2 + $0x179] sm:$0x1] %vm327, 0.0
        %432 = vst.msk [vmem:[#allocation2 + $0x189] sm:$0x1] %vm327, 0.0
        %433 = vst.msk [vmem:[#allocation2 + $0x199] sm:$0x1] %vm327, 0.0
        %434 = vst.msk [vmem:[#allocation2 + $0x1a9] sm:$0x1] %vm327, 0.0
        %435 = vst.msk [vmem:[#allocation2 + $0x1b9] sm:$0x1] %vm327, 0.0
        %436 = vst.msk [vmem:[#allocation2 + $0x1c9] sm:$0x1] %vm327, 0.0
        %437 = vst.msk [vmem:[#allocation2 + $0x1d9] sm:$0x1] %vm327, 0.0
        %438 = vst.msk [vmem:[#allocation2 + $0x1e9] sm:$0x1] %vm327, 0.0
        %439 = vst.msk [vmem:[#allocation2 + $0x1f9] sm:$0x1] %vm327, 0.0
        %440 = vst.msk [vmem:[#allocation2 + $0x209] sm:$0x1] %vm327, 0.0
        %441 = vst.msk [vmem:[#allocation2 + $0x219] sm:$0x1] %vm327, 0.0
        %442 = vst.msk [vmem:[#allocation2 + $0x229] sm:$0x1] %vm327, 0.0
        %443 = vst.msk [vmem:[#allocation2 + $0x239] sm:$0x1] %vm327, 0.0
        %444 = vst.msk [vmem:[#allocation2 + $0x249] sm:$0x1] %vm327, 0.0
        %445 = vst.msk [vmem:[#allocation2 + $0x259] sm:$0x1] %vm327, 0.0
        %446 = vst.msk [vmem:[#allocation2 + $0x269] sm:$0x1] %vm327, 0.0
        %447 = vst.msk [vmem:[#allocation2 + $0x279] sm:$0x1] %vm327, 0.0
        %448 = vst.msk [vmem:[#allocation2 + $0x289] sm:$0x1] %vm327, 0.0
        %449 = vst.msk [vmem:[#allocation2 + $0x299] sm:$0x1] %vm327, 0.0
        %450 = vst.msk [vmem:[#allocation2 + $0x2a9] sm:$0x1] %vm327, 0.0
        %451 = vst.msk [vmem:[#allocation2 + $0x2b9] sm:$0x1] %vm327, 0.0
        %452 = vst.msk [vmem:[#allocation2 + $0x2c9] sm:$0x1] %vm327, 0.0
        %453 = vst.msk [vmem:[#allocation2 + $0x2d9] sm:$0x1] %vm327, 0.0
        %454 = vst.msk [vmem:[#allocation2 + $0x2e9] sm:$0x1] %vm327, 0.0
        %455 = vst.msk [vmem:[#allocation2 + $0x2f9] sm:$0x1] %vm327, 0.0
        %456 = vst.msk [vmem:[#allocation2 + $0x309] sm:$0x1] %vm327, 0.0
        %457 = vst.msk [vmem:[#allocation2 + $0x319] sm:$0x1] %vm327, 0.0
        %458 = vst.msk [vmem:[#allocation2 + $0x329] sm:$0x1] %vm327, 0.0
        %459 = vst.msk [vmem:[#allocation2 + $0x339] sm:$0x1] %vm327, 0.0
        %460 = vst.msk [vmem:[#allocation2 + $0x349] sm:$0x1] %vm327, 0.0
        %461 = vst.msk [vmem:[#allocation2 + $0x359] sm:$0x1] %vm327, 0.0
        %462 = vst.msk [vmem:[#allocation2 + $0x369] sm:$0x1] %vm327, 0.0
        %463 = vst.msk [vmem:[#allocation2 + $0x379] sm:$0x1] %vm327, 0.0
        %464 = vst.msk [vmem:[#allocation2 + $0x389] sm:$0x1] %vm327, 0.0
        %465 = vst.msk [vmem:[#allocation2 + $0x399] sm:$0x1] %vm327, 0.0
        %466 = vst.msk [vmem:[#allocation2 + $0x3a9] sm:$0x1] %vm327, 0.0
        %467 = vst.msk [vmem:[#allocation2 + $0x3b9] sm:$0x1] %vm327, 0.0
        %468 = vst.msk [vmem:[#allocation2 + $0x3c9] sm:$0x1] %vm327, 0.0
        %469 = vst.msk [vmem:[#allocation2 + $0x3d9] sm:$0x1] %vm327, 0.0
        %470 = vst.msk [vmem:[#allocation2 + $0x3e9] sm:$0x1] %vm327, 0.0
        %471 = vst.msk [vmem:[#allocation2 + $0x3f9] sm:$0x1] %vm327, 0.0
        %472 = vst.msk [vmem:[#allocation2 + $0x409] sm:$0x1] %vm327, 0.0
        %473 = vst.msk [vmem:[#allocation2 + $0x419] sm:$0x1] %vm327, 0.0
        %474 = vst.msk [vmem:[#allocation2 + $0x429] sm:$0x1] %vm327, 0.0
        %475 = vst.msk [vmem:[#allocation2 + $0x439] sm:$0x1] %vm327, 0.0
        %476 = vst.msk [vmem:[#allocation2 + $0x449] sm:$0x1] %vm327, 0.0
        %477 = vst.msk [vmem:[#allocation2 + $0x459] sm:$0x1] %vm327, 0.0
        %478 = vst.msk [vmem:[#allocation2 + $0x469] sm:$0x1] %vm327, 0.0
        %479 = vst.msk [vmem:[#allocation2 + $0x479] sm:$0x1] %vm327, 0.0
        %480 = vst.msk [vmem:[#allocation2 + $0x489] sm:$0x1] %vm327, 0.0
        %481 = vst.msk [vmem:[#allocation2 + $0x499] sm:$0x1] %vm327, 0.0
        %482 = vst.msk [vmem:[#allocation2 + $0x4a9] sm:$0x1] %vm327, 0.0
        %483 = vst.msk [vmem:[#allocation2 + $0x4b9] sm:$0x1] %vm327, 0.0
        %484 = vst.msk [vmem:[#allocation2 + $0x4c9] sm:$0x1] %vm327, 0.0
        %485 = vst.msk [vmem:[#allocation2 + $0x4d9] sm:$0x1] %vm327, 0.0
        %486 = vst.msk [vmem:[#allocation2 + $0x4e9] sm:$0x1] %vm327, 0.0
        %487 = vst.msk [vmem:[#allocation2 + $0x4f9] sm:$0x1] %vm327, 0.0
        %v488 = vld [vmem:[%s272] sm:$0xff]
        %v489 = vld [vmem:[%s272 + $0x8] sm:$0xff]
        %v490 = vld [vmem:[%s272 + $0x10] sm:$0xff]
        %v491 = vld [vmem:[%s272 + $0x18] sm:$0xff]
        %v492 = vld [vmem:[%s272 + $0x20] sm:$0xff]
        %v493 = vld [vmem:[%s272 + $0x28] sm:$0xff]
        %v494 = vld [vmem:[%s272 + $0x30] sm:$0xff]
        %v495 = vld [vmem:[%s272 + $0x38] sm:$0xff]
        %v496 = vld [vmem:[%s272 + $0x40] sm:$0xff]
        %v497 = vld [vmem:[%s272 + $0x48] sm:$0xff]
        %v498 = vld [vmem:[%s272 + $0x50] sm:$0xff]
        %v499 = vld [vmem:[%s272 + $0x58] sm:$0xff]
        %v500 = vld [vmem:[%s272 + $0x60] sm:$0xff]
        %v501 = vld [vmem:[%s272 + $0x68] sm:$0xff]
        %v502 = vld [vmem:[%s272 + $0x70] sm:$0xff]
        %v503 = vld [vmem:[%s272 + $0x78] sm:$0xff]
        %v504 = vld [vmem:[%s272 + $0x80] sm:$0xff]
        %v505 = vld [vmem:[%s272 + $0x88] sm:$0xff]
        %v506 = vld [vmem:[%s272 + $0x90] sm:$0xff]
        %v507 = vld [vmem:[%s272 + $0x98] sm:$0xff]
        %v508 = vld [vmem:[%s272 + $0xa0] sm:$0xff]
        %v509 = vld [vmem:[%s272 + $0xa8] sm:$0xff]
        %v510 = vld [vmem:[%s272 + $0xb0] sm:$0xff]
        %v511 = vld [vmem:[%s272 + $0xb8] sm:$0xff]
        %v512 = vld [vmem:[%s272 + $0xc0] sm:$0xff]
        %v513 = vld [vmem:[%s272 + $0xc8] sm:$0xff]
        %v514 = vld [vmem:[%s272 + $0xd0] sm:$0xff]
        %v515 = vld [vmem:[%s272 + $0xd8] sm:$0xff]
        %v516 = vld [vmem:[%s272 + $0xe0] sm:$0xff]
        %v517 = vld [vmem:[%s272 + $0xe8] sm:$0xff]
        %v518 = vld [vmem:[%s272 + $0xf0] sm:$0xff]
        %v519 = vld [vmem:[%s272 + $0xf8] sm:$0xff]
        %v520 = vld [vmem:[%s272 + $0x100] sm:$0xff]
        %v521 = vld [vmem:[%s272 + $0x108] sm:$0xff]
        %v522 = vld [vmem:[%s272 + $0x110] sm:$0xff]
        %v523 = vld [vmem:[%s272 + $0x118] sm:$0xff]
        %v524 = vld [vmem:[%s272 + $0x120] sm:$0xff]
        %v525 = vld [vmem:[%s272 + $0x128] sm:$0xff]
        %v526 = vld [vmem:[%s272 + $0x130] sm:$0xff]
        %v527 = vld [vmem:[%s272 + $0x138] sm:$0xff]
        %v528 = vld [vmem:[%s272 + $0x140] sm:$0xff]
        %v529 = vld [vmem:[%s272 + $0x148] sm:$0xff]
        %v530 = vld [vmem:[%s272 + $0x150] sm:$0xff]
        %v531 = vld [vmem:[%s272 + $0x158] sm:$0xff]
        %v532 = vld [vmem:[%s272 + $0x160] sm:$0xff]
        %v533 = vld [vmem:[%s272 + $0x168] sm:$0xff]
        %v534 = vld [vmem:[%s272 + $0x170] sm:$0xff]
        %v535 = vld [vmem:[%s272 + $0x178] sm:$0xff]
        %v536 = vld [vmem:[%s272 + $0x180] sm:$0xff]
        %v537 = vld [vmem:[%s272 + $0x188] sm:$0xff]
        %v538 = vld [vmem:[%s272 + $0x190] sm:$0xff]
        %v539 = vld [vmem:[%s272 + $0x198] sm:$0xff]
        %v540 = vld [vmem:[%s272 + $0x1a0] sm:$0xff]
        %v541 = vld [vmem:[%s272 + $0x1a8] sm:$0xff]
        %v542 = vld [vmem:[%s272 + $0x1b0] sm:$0xff]
        %v543 = vld [vmem:[%s272 + $0x1b8] sm:$0xff]
        %v544 = vld [vmem:[%s272 + $0x1c0] sm:$0xff]
        %v545 = vld [vmem:[%s272 + $0x1c8] sm:$0xff]
        %v546 = vld [vmem:[%s272 + $0x1d0] sm:$0xff]
        %v547 = vld [vmem:[%s272 + $0x1d8] sm:$0xff]
        %v548 = vld [vmem:[%s272 + $0x1e0] sm:$0xff]
        %v549 = vld [vmem:[%s272 + $0x1e8] sm:$0xff]
        %v550 = vld [vmem:[%s272 + $0x1f0] sm:$0xff]
        %v551 = vld [vmem:[%s272 + $0x1f8] sm:$0xff]
        %s552 = scalar_lea.vmem [#allocation2], 16
        %553 = vst.msk [vmem:[%s552 + $0x1] sm:$0xff] %vm293, %v488
        %554 = vst.msk [vmem:[%s552 + $0x11] sm:$0xff] %vm293, %v489
        %555 = vst.msk [vmem:[%s552 + $0x21] sm:$0xff] %vm293, %v490
        %556 = vst.msk [vmem:[%s552 + $0x31] sm:$0xff] %vm293, %v491
        %557 = vst.msk [vmem:[%s552 + $0x41] sm:$0xff] %vm293, %v492
        %558 = vst.msk [vmem:[%s552 + $0x51] sm:$0xff] %vm293, %v493
        %559 = vst.msk [vmem:[%s552 + $0x61] sm:$0xff] %vm293, %v494
        %560 = vst.msk [vmem:[%s552 + $0x71] sm:$0xff] %vm293, %v495
        %561 = vst.msk [vmem:[%s552 + $0xa1] sm:$0xff] %vm293, %v496
        %562 = vst.msk [vmem:[%s552 + $0xb1] sm:$0xff] %vm293, %v497
        %563 = vst.msk [vmem:[%s552 + $0xc1] sm:$0xff] %vm293, %v498
        %564 = vst.msk [vmem:[%s552 + $0xd1] sm:$0xff] %vm293, %v499
        %565 = vst.msk [vmem:[%s552 + $0xe1] sm:$0xff] %vm293, %v500
        %566 = vst.msk [vmem:[%s552 + $0xf1] sm:$0xff] %vm293, %v501
        %567 = vst.msk [vmem:[%s552 + $0x101] sm:$0xff] %vm293, %v502
        %568 = vst.msk [vmem:[%s552 + $0x111] sm:$0xff] %vm293, %v503
        %569 = vst.msk [vmem:[%s552 + $0x141] sm:$0xff] %vm293, %v504
        %570 = vst.msk [vmem:[%s552 + $0x151] sm:$0xff] %vm293, %v505
        %571 = vst.msk [vmem:[%s552 + $0x161] sm:$0xff] %vm293, %v506
        %572 = vst.msk [vmem:[%s552 + $0x171] sm:$0xff] %vm293, %v507
        %573 = vst.msk [vmem:[%s552 + $0x181] sm:$0xff] %vm293, %v508
        %574 = vst.msk [vmem:[%s552 + $0x191] sm:$0xff] %vm293, %v509
        %575 = vst.msk [vmem:[%s552 + $0x1a1] sm:$0xff] %vm293, %v510
        %576 = vst.msk [vmem:[%s552 + $0x1b1] sm:$0xff] %vm293, %v511
        %577 = vst.msk [vmem:[%s552 + $0x1e1] sm:$0xff] %vm293, %v512
        %578 = vst.msk [vmem:[%s552 + $0x1f1] sm:$0xff] %vm293, %v513
        %579 = vst.msk [vmem:[%s552 + $0x201] sm:$0xff] %vm293, %v514
        %580 = vst.msk [vmem:[%s552 + $0x211] sm:$0xff] %vm293, %v515
        %581 = vst.msk [vmem:[%s552 + $0x221] sm:$0xff] %vm293, %v516
        %582 = vst.msk [vmem:[%s552 + $0x231] sm:$0xff] %vm293, %v517
        %583 = vst.msk [vmem:[%s552 + $0x241] sm:$0xff] %vm293, %v518
        %584 = vst.msk [vmem:[%s552 + $0x251] sm:$0xff] %vm293, %v519
        %585 = vst.msk [vmem:[%s552 + $0x281] sm:$0xff] %vm293, %v520
        %586 = vst.msk [vmem:[%s552 + $0x291] sm:$0xff] %vm293, %v521
        %587 = vst.msk [vmem:[%s552 + $0x2a1] sm:$0xff] %vm293, %v522
        %588 = vst.msk [vmem:[%s552 + $0x2b1] sm:$0xff] %vm293, %v523
        %589 = vst.msk [vmem:[%s552 + $0x2c1] sm:$0xff] %vm293, %v524
        %590 = vst.msk [vmem:[%s552 + $0x2d1] sm:$0xff] %vm293, %v525
        %591 = vst.msk [vmem:[%s552 + $0x2e1] sm:$0xff] %vm293, %v526
        %592 = vst.msk [vmem:[%s552 + $0x2f1] sm:$0xff] %vm293, %v527
        %593 = vst.msk [vmem:[%s552 + $0x321] sm:$0xff] %vm293, %v528
        %594 = vst.msk [vmem:[%s552 + $0x331] sm:$0xff] %vm293, %v529
        %595 = vst.msk [vmem:[%s552 + $0x341] sm:$0xff] %vm293, %v530
        %596 = vst.msk [vmem:[%s552 + $0x351] sm:$0xff] %vm293, %v531
        %597 = vst.msk [vmem:[%s552 + $0x361] sm:$0xff] %vm293, %v532
        %598 = vst.msk [vmem:[%s552 + $0x371] sm:$0xff] %vm293, %v533
        %599 = vst.msk [vmem:[%s552 + $0x381] sm:$0xff] %vm293, %v534
        %600 = vst.msk [vmem:[%s552 + $0x391] sm:$0xff] %vm293, %v535
        %601 = vst.msk [vmem:[%s552 + $0x3c1] sm:$0xff] %vm293, %v536
        %602 = vst.msk [vmem:[%s552 + $0x3d1] sm:$0xff] %vm293, %v537
        %603 = vst.msk [vmem:[%s552 + $0x3e1] sm:$0xff] %vm293, %v538
        %604 = vst.msk [vmem:[%s552 + $0x3f1] sm:$0xff] %vm293, %v539
        %605 = vst.msk [vmem:[%s552 + $0x401] sm:$0xff] %vm293, %v540
        %606 = vst.msk [vmem:[%s552 + $0x411] sm:$0xff] %vm293, %v541
        %607 = vst.msk [vmem:[%s552 + $0x421] sm:$0xff] %vm293, %v542
        %608 = vst.msk [vmem:[%s552 + $0x431] sm:$0xff] %vm293, %v543
        %609 = vst.msk [vmem:[%s552 + $0x461] sm:$0xff] %vm293, %v544
        %610 = vst.msk [vmem:[%s552 + $0x471] sm:$0xff] %vm293, %v545
        %611 = vst.msk [vmem:[%s552 + $0x481] sm:$0xff] %vm293, %v546
        %612 = vst.msk [vmem:[%s552 + $0x491] sm:$0xff] %vm293, %v547
        %613 = vst.msk [vmem:[%s552 + $0x4a1] sm:$0xff] %vm293, %v548
        %614 = vst.msk [vmem:[%s552 + $0x4b1] sm:$0xff] %vm293, %v549
        %615 = vst.msk [vmem:[%s552 + $0x4c1] sm:$0xff] %vm293, %v550
        %616 = vst.msk [vmem:[%s552 + $0x4d1] sm:$0xff] %vm293, %v551
      $region44: #{_lambda_.1} parent=39 // pred_fallthru
        _
      %v617 = vld [vmem:[#allocation2] sm:$0xff]
      %v618 = vld [vmem:[#allocation2 + $0x10] sm:$0xff]
      %v619 = vld [vmem:[#allocation2 + $0x20] sm:$0xff]
      %v620 = vld [vmem:[#allocation2 + $0x30] sm:$0xff]
      %v621 = vld [vmem:[#allocation2 + $0x40] sm:$0xff]
      %v622 = vld [vmem:[#allocation2 + $0x50] sm:$0xff]
      %v623 = vld [vmem:[#allocation2 + $0x60] sm:$0xff]
      %v624 = vld [vmem:[#allocation2 + $0x70] sm:$0xff]
      %v625 = vld [vmem:[#allocation2 + $0xa0] sm:$0xff]
      %v626 = vld [vmem:[#allocation2 + $0xb0] sm:$0xff]
      %v627 = vld [vmem:[#allocation2 + $0xc0] sm:$0xff]
      %v628 = vld [vmem:[#allocation2 + $0xd0] sm:$0xff]
      %v629 = vld [vmem:[#allocation2 + $0xe0] sm:$0xff]
      %v630 = vld [vmem:[#allocation2 + $0xf0] sm:$0xff]
      %v631 = vld [vmem:[#allocation2 + $0x100] sm:$0xff]
      %v632 = vld [vmem:[#allocation2 + $0x110] sm:$0xff]
      %v633 = vld [vmem:[#allocation2 + $0x140] sm:$0xff]
      %v634 = vld [vmem:[#allocation2 + $0x150] sm:$0xff]
      %v635 = vld [vmem:[#allocation2 + $0x160] sm:$0xff]
      %v636 = vld [vmem:[#allocation2 + $0x170] sm:$0xff]
      %v637 = vld [vmem:[#allocation2 + $0x180] sm:$0xff]
      %v638 = vld [vmem:[#allocation2 + $0x190] sm:$0xff]
      %v639 = vld [vmem:[#allocation2 + $0x1a0] sm:$0xff]
      %v640 = vld [vmem:[#allocation2 + $0x1b0] sm:$0xff]
      %v641 = vld [vmem:[#allocation2 + $0x1e0] sm:$0xff]
      %v642 = vld [vmem:[#allocation2 + $0x1f0] sm:$0xff]
      %v643 = vld [vmem:[#allocation2 + $0x200] sm:$0xff]
      %v644 = vld [vmem:[#allocation2 + $0x210] sm:$0xff]
      %v645 = vld [vmem:[#allocation2 + $0x220] sm:$0xff]
      %v646 = vld [vmem:[#allocation2 + $0x230] sm:$0xff]
      %v647 = vld [vmem:[#allocation2 + $0x240] sm:$0xff]
      %v648 = vld [vmem:[#allocation2 + $0x250] sm:$0xff]
      %v649 = vld [vmem:[#allocation2 + $0x280] sm:$0xff]
      %v650 = vld [vmem:[#allocation2 + $0x290] sm:$0xff]
      %v651 = vld [vmem:[#allocation2 + $0x2a0] sm:$0xff]
      %v652 = vld [vmem:[#allocation2 + $0x2b0] sm:$0xff]
      %v653 = vld [vmem:[#allocation2 + $0x2c0] sm:$0xff]
      %v654 = vld [vmem:[#allocation2 + $0x2d0] sm:$0xff]
      %v655 = vld [vmem:[#allocation2 + $0x2e0] sm:$0xff]
      %v656 = vld [vmem:[#allocation2 + $0x2f0] sm:$0xff]
      %v657 = vld [vmem:[#allocation2 + $0x320] sm:$0xff]
      %v658 = vld [vmem:[#allocation2 + $0x330] sm:$0xff]
      %v659 = vld [vmem:[#allocation2 + $0x340] sm:$0xff]
      %v660 = vld [vmem:[#allocation2 + $0x350] sm:$0xff]
      %v661 = vld [vmem:[#allocation2 + $0x360] sm:$0xff]
      %v662 = vld [vmem:[#allocation2 + $0x370] sm:$0xff]
      %v663 = vld [vmem:[#allocation2 + $0x380] sm:$0xff]
      %v664 = vld [vmem:[#allocation2 + $0x390] sm:$0xff]
      %v665 = vld [vmem:[#allocation2 + $0x3c0] sm:$0xff]
      %v666 = vld [vmem:[#allocation2 + $0x3d0] sm:$0xff]
      %v667 = vld [vmem:[#allocation2 + $0x3e0] sm:$0xff]
      %v668 = vld [vmem:[#allocation2 + $0x3f0] sm:$0xff]
      %v669 = vld [vmem:[#allocation2 + $0x400] sm:$0xff]
      %v670 = vld [vmem:[#allocation2 + $0x410] sm:$0xff]
      %v671 = vld [vmem:[#allocation2 + $0x420] sm:$0xff]
      %v672 = vld [vmem:[#allocation2 + $0x430] sm:$0xff]
      %v673 = vld [vmem:[#allocation2 + $0x460] sm:$0xff]
      %v674 = vld [vmem:[#allocation2 + $0x470] sm:$0xff]
      %v675 = vld [vmem:[#allocation2 + $0x480] sm:$0xff]
      %v676 = vld [vmem:[#allocation2 + $0x490] sm:$0xff]
      %v677 = vld [vmem:[#allocation2 + $0x4a0] sm:$0xff]
      %v678 = vld [vmem:[#allocation2 + $0x4b0] sm:$0xff]
      %v679 = vld [vmem:[#allocation2 + $0x4c0] sm:$0xff]
      %v680 = vld [vmem:[#allocation2 + $0x4d0] sm:$0xff]
      %v681 = vpack.c.bf16 %v618, %v617
      %v682 = vpack.c.bf16 %v620, %v619
      %v683 = vpack.c.bf16 %v622, %v621
      %v684 = vpack.c.bf16 %v624, %v623
      %v685 = vpack.c.bf16 %v626, %v625
      %v686 = vpack.c.bf16 %v628, %v627
      %v687 = vpack.c.bf16 %v630, %v629
      %v688 = vpack.c.bf16 %v632, %v631
      %v689 = vpack.c.bf16 %v634, %v633
      %v690 = vpack.c.bf16 %v636, %v635
      %v691 = vpack.c.bf16 %v638, %v637
      %v692 = vpack.c.bf16 %v640, %v639
      %v693 = vpack.c.bf16 %v642, %v641
      %v694 = vpack.c.bf16 %v644, %v643
      %v695 = vpack.c.bf16 %v646, %v645
      %v696 = vpack.c.bf16 %v648, %v647
      %v697 = vpack.c.bf16 %v650, %v649
      %v698 = vpack.c.bf16 %v652, %v651
      %v699 = vpack.c.bf16 %v654, %v653
      %v700 = vpack.c.bf16 %v656, %v655
      %v701 = vpack.c.bf16 %v658, %v657
      %v702 = vpack.c.bf16 %v660, %v659
      %v703 = vpack.c.bf16 %v662, %v661
      %v704 = vpack.c.bf16 %v664, %v663
      %v705 = vpack.c.bf16 %v666, %v665
      %v706 = vpack.c.bf16 %v668, %v667
      %v707 = vpack.c.bf16 %v670, %v669
      %v708 = vpack.c.bf16 %v672, %v671
      %v709 = vpack.c.bf16 %v674, %v673
      %v710 = vpack.c.bf16 %v676, %v675
      %v711 = vpack.c.bf16 %v678, %v677
      %v712 = vpack.c.bf16 %v680, %v679
      %v713 = vld [vmem:[#allocation2 + $0x1] sm:$0xff]
      %v714 = vld [vmem:[#allocation2 + $0x11] sm:$0xff]
      %v715 = vld [vmem:[#allocation2 + $0x21] sm:$0xff]
      %v716 = vld [vmem:[#allocation2 + $0x31] sm:$0xff]
      %v717 = vld [vmem:[#allocation2 + $0x41] sm:$0xff]
      %v718 = vld [vmem:[#allocation2 + $0x51] sm:$0xff]
      %v719 = vld [vmem:[#allocation2 + $0x61] sm:$0xff]
      %v720 = vld [vmem:[#allocation2 + $0x71] sm:$0xff]
      %v721 = vld [vmem:[#allocation2 + $0xa1] sm:$0xff]
      %v722 = vld [vmem:[#allocation2 + $0xb1] sm:$0xff]
      %v723 = vld [vmem:[#allocation2 + $0xc1] sm:$0xff]
      %v724 = vld [vmem:[#allocation2 + $0xd1] sm:$0xff]
      %v725 = vld [vmem:[#allocation2 + $0xe1] sm:$0xff]
      %v726 = vld [vmem:[#allocation2 + $0xf1] sm:$0xff]
      %v727 = vld [vmem:[#allocation2 + $0x101] sm:$0xff]
      %v728 = vld [vmem:[#allocation2 + $0x111] sm:$0xff]
      %v729 = vld [vmem:[#allocation2 + $0x141] sm:$0xff]
      %v730 = vld [vmem:[#allocation2 + $0x151] sm:$0xff]
      %v731 = vld [vmem:[#allocation2 + $0x161] sm:$0xff]
      %v732 = vld [vmem:[#allocation2 + $0x171] sm:$0xff]
      %v733 = vld [vmem:[#allocation2 + $0x181] sm:$0xff]
      %v734 = vld [vmem:[#allocation2 + $0x191] sm:$0xff]
      %v735 = vld [vmem:[#allocation2 + $0x1a1] sm:$0xff]
      %v736 = vld [vmem:[#allocation2 + $0x1b1] sm:$0xff]
      %v737 = vld [vmem:[#allocation2 + $0x1e1] sm:$0xff]
      %v738 = vld [vmem:[#allocation2 + $0x1f1] sm:$0xff]
      %v739 = vld [vmem:[#allocation2 + $0x201] sm:$0xff]
      %v740 = vld [vmem:[#allocation2 + $0x211] sm:$0xff]
      %v741 = vld [vmem:[#allocation2 + $0x221] sm:$0xff]
      %v742 = vld [vmem:[#allocation2 + $0x231] sm:$0xff]
      %v743 = vld [vmem:[#allocation2 + $0x241] sm:$0xff]
      %v744 = vld [vmem:[#allocation2 + $0x251] sm:$0xff]
      %v745 = vld [vmem:[#allocation2 + $0x281] sm:$0xff]
      %v746 = vld [vmem:[#allocation2 + $0x291] sm:$0xff]
      %v747 = vld [vmem:[#allocation2 + $0x2a1] sm:$0xff]
      %v748 = vld [vmem:[#allocation2 + $0x2b1] sm:$0xff]
      %v749 = vld [vmem:[#allocation2 + $0x2c1] sm:$0xff]
      %v750 = vld [vmem:[#allocation2 + $0x2d1] sm:$0xff]
      %v751 = vld [vmem:[#allocation2 + $0x2e1] sm:$0xff]
      %v752 = vld [vmem:[#allocation2 + $0x2f1] sm:$0xff]
      %v753 = vld [vmem:[#allocation2 + $0x321] sm:$0xff]
      %v754 = vld [vmem:[#allocation2 + $0x331] sm:$0xff]
      %v755 = vld [vmem:[#allocation2 + $0x341] sm:$0xff]
      %v756 = vld [vmem:[#allocation2 + $0x351] sm:$0xff]
      %v757 = vld [vmem:[#allocation2 + $0x361] sm:$0xff]
      %v758 = vld [vmem:[#allocation2 + $0x371] sm:$0xff]
      %v759 = vld [vmem:[#allocation2 + $0x381] sm:$0xff]
      %v760 = vld [vmem:[#allocation2 + $0x391] sm:$0xff]
      %v761 = vld [vmem:[#allocation2 + $0x3c1] sm:$0xff]
      %v762 = vld [vmem:[#allocation2 + $0x3d1] sm:$0xff]
      %v763 = vld [vmem:[#allocation2 + $0x3e1] sm:$0xff]
      %v764 = vld [vmem:[#allocation2 + $0x3f1] sm:$0xff]
      %v765 = vld [vmem:[#allocation2 + $0x401] sm:$0xff]
      %v766 = vld [vmem:[#allocation2 + $0x411] sm:$0xff]
      %v767 = vld [vmem:[#allocation2 + $0x421] sm:$0xff]
      %v768 = vld [vmem:[#allocation2 + $0x431] sm:$0xff]
      %v769 = vld [vmem:[#allocation2 + $0x461] sm:$0xff]
      %v770 = vld [vmem:[#allocation2 + $0x471] sm:$0xff]
      %v771 = vld [vmem:[#allocation2 + $0x481] sm:$0xff]
      %v772 = vld [vmem:[#allocation2 + $0x491] sm:$0xff]
      %v773 = vld [vmem:[#allocation2 + $0x4a1] sm:$0xff]
      %v774 = vld [vmem:[#allocation2 + $0x4b1] sm:$0xff]
      %v775 = vld [vmem:[#allocation2 + $0x4c1] sm:$0xff]
      %v776 = vld [vmem:[#allocation2 + $0x4d1] sm:$0xff]
      %v777 = vpack.c.bf16 %v714, %v713
      %v778 = vpack.c.bf16 %v716, %v715
      %v779 = vpack.c.bf16 %v718, %v717
      %v780 = vpack.c.bf16 %v720, %v719
      %v781 = vpack.c.bf16 %v722, %v721
      %v782 = vpack.c.bf16 %v724, %v723
      %v783 = vpack.c.bf16 %v726, %v725
      %v784 = vpack.c.bf16 %v728, %v727
      %v785 = vpack.c.bf16 %v730, %v729
      %v786 = vpack.c.bf16 %v732, %v731
      %v787 = vpack.c.bf16 %v734, %v733
      %v788 = vpack.c.bf16 %v736, %v735
      %v789 = vpack.c.bf16 %v738, %v737
      %v790 = vpack.c.bf16 %v740, %v739
      %v791 = vpack.c.bf16 %v742, %v741
      %v792 = vpack.c.bf16 %v744, %v743
      %v793 = vpack.c.bf16 %v746, %v745
      %v794 = vpack.c.bf16 %v748, %v747
      %v795 = vpack.c.bf16 %v750, %v749
      %v796 = vpack.c.bf16 %v752, %v751
      %v797 = vpack.c.bf16 %v754, %v753
      %v798 = vpack.c.bf16 %v756, %v755
      %v799 = vpack.c.bf16 %v758, %v757
      %v800 = vpack.c.bf16 %v760, %v759
      %v801 = vpack.c.bf16 %v762, %v761
      %v802 = vpack.c.bf16 %v764, %v763
      %v803 = vpack.c.bf16 %v766, %v765
      %v804 = vpack.c.bf16 %v768, %v767
      %v805 = vpack.c.bf16 %v770, %v769
      %v806 = vpack.c.bf16 %v772, %v771
      %v807 = vpack.c.bf16 %v774, %v773
      %v808 = vpack.c.bf16 %v776, %v775
      %v809 = vld [vmem:[#allocation2 + $0x2] sm:$0xff]
      %v810 = vld [vmem:[#allocation2 + $0x12] sm:$0xff]
      %v811 = vld [vmem:[#allocation2 + $0x22] sm:$0xff]
      %v812 = vld [vmem:[#allocation2 + $0x32] sm:$0xff]
      %v813 = vld [vmem:[#allocation2 + $0x42] sm:$0xff]
      %v814 = vld [vmem:[#allocation2 + $0x52] sm:$0xff]
      %v815 = vld [vmem:[#allocation2 + $0x62] sm:$0xff]
      %v816 = vld [vmem:[#allocation2 + $0x72] sm:$0xff]
      %v817 = vld [vmem:[#allocation2 + $0xa2] sm:$0xff]
      %v818 = vld [vmem:[#allocation2 + $0xb2] sm:$0xff]
      %v819 = vld [vmem:[#allocation2 + $0xc2] sm:$0xff]
      %v820 = vld [vmem:[#allocation2 + $0xd2] sm:$0xff]
      %v821 = vld [vmem:[#allocation2 + $0xe2] sm:$0xff]
      %v822 = vld [vmem:[#allocation2 + $0xf2] sm:$0xff]
      %v823 = vld [vmem:[#allocation2 + $0x102] sm:$0xff]
      %v824 = vld [vmem:[#allocation2 + $0x112] sm:$0xff]
      %v825 = vld [vmem:[#allocation2 + $0x142] sm:$0xff]
      %v826 = vld [vmem:[#allocation2 + $0x152] sm:$0xff]
      %v827 = vld [vmem:[#allocation2 + $0x162] sm:$0xff]
      %v828 = vld [vmem:[#allocation2 + $0x172] sm:$0xff]
      %v829 = vld [vmem:[#allocation2 + $0x182] sm:$0xff]
      %v830 = vld [vmem:[#allocation2 + $0x192] sm:$0xff]
      %v831 = vld [vmem:[#allocation2 + $0x1a2] sm:$0xff]
      %v832 = vld [vmem:[#allocation2 + $0x1b2] sm:$0xff]
      %v833 = vld [vmem:[#allocation2 + $0x1e2] sm:$0xff]
      %v834 = vld [vmem:[#allocation2 + $0x1f2] sm:$0xff]
      %v835 = vld [vmem:[#allocation2 + $0x202] sm:$0xff]
      %v836 = vld [vmem:[#allocation2 + $0x212] sm:$0xff]
      %v837 = vld [vmem:[#allocation2 + $0x222] sm:$0xff]
      %v838 = vld [vmem:[#allocation2 + $0x232] sm:$0xff]
      %v839 = vld [vmem:[#allocation2 + $0x242] sm:$0xff]
      %v840 = vld [vmem:[#allocation2 + $0x252] sm:$0xff]
      %v841 = vld [vmem:[#allocation2 + $0x282] sm:$0xff]
      %v842 = vld [vmem:[#allocation2 + $0x292] sm:$0xff]
      %v843 = vld [vmem:[#allocation2 + $0x2a2] sm:$0xff]
      %v844 = vld [vmem:[#allocation2 + $0x2b2] sm:$0xff]
      %v845 = vld [vmem:[#allocation2 + $0x2c2] sm:$0xff]
      %v846 = vld [vmem:[#allocation2 + $0x2d2] sm:$0xff]
      %v847 = vld [vmem:[#allocation2 + $0x2e2] sm:$0xff]
      %v848 = vld [vmem:[#allocation2 + $0x2f2] sm:$0xff]
      %v849 = vld [vmem:[#allocation2 + $0x322] sm:$0xff]
      %v850 = vld [vmem:[#allocation2 + $0x332] sm:$0xff]
      %v851 = vld [vmem:[#allocation2 + $0x342] sm:$0xff]
      %v852 = vld [vmem:[#allocation2 + $0x352] sm:$0xff]
      %v853 = vld [vmem:[#allocation2 + $0x362] sm:$0xff]
      %v854 = vld [vmem:[#allocation2 + $0x372] sm:$0xff]
      %v855 = vld [vmem:[#allocation2 + $0x382] sm:$0xff]
      %v856 = vld [vmem:[#allocation2 + $0x392] sm:$0xff]
      %v857 = vld [vmem:[#allocation2 + $0x3c2] sm:$0xff]
      %v858 = vld [vmem:[#allocation2 + $0x3d2] sm:$0xff]
      %v859 = vld [vmem:[#allocation2 + $0x3e2] sm:$0xff]
      %v860 = vld [vmem:[#allocation2 + $0x3f2] sm:$0xff]
      %v861 = vld [vmem:[#allocation2 + $0x402] sm:$0xff]
      %v862 = vld [vmem:[#allocation2 + $0x412] sm:$0xff]
      %v863 = vld [vmem:[#allocation2 + $0x422] sm:$0xff]
      %v864 = vld [vmem:[#allocation2 + $0x432] sm:$0xff]
      %v865 = vld [vmem:[#allocation2 + $0x462] sm:$0xff]
      %v866 = vld [vmem:[#allocation2 + $0x472] sm:$0xff]
      %v867 = vld [vmem:[#allocation2 + $0x482] sm:$0xff]
      %v868 = vld [vmem:[#allocation2 + $0x492] sm:$0xff]
      %v869 = vld [vmem:[#allocation2 + $0x4a2] sm:$0xff]
      %v870 = vld [vmem:[#allocation2 + $0x4b2] sm:$0xff]
      %v871 = vld [vmem:[#allocation2 + $0x4c2] sm:$0xff]
      %v872 = vld [vmem:[#allocation2 + $0x4d2] sm:$0xff]
      %v873 = vpack.c.bf16 %v810, %v809
      %v874 = vpack.c.bf16 %v812, %v811
      %v875 = vpack.c.bf16 %v814, %v813
      %v876 = vpack.c.bf16 %v816, %v815
      %v877 = vpack.c.bf16 %v818, %v817
      %v878 = vpack.c.bf16 %v820, %v819
      %v879 = vpack.c.bf16 %v822, %v821
      %v880 = vpack.c.bf16 %v824, %v823
      %v881 = vpack.c.bf16 %v826, %v825
      %v882 = vpack.c.bf16 %v828, %v827
      %v883 = vpack.c.bf16 %v830, %v829
      %v884 = vpack.c.bf16 %v832, %v831
      %v885 = vpack.c.bf16 %v834, %v833
      %v886 = vpack.c.bf16 %v836, %v835
      %v887 = vpack.c.bf16 %v838, %v837
      %v888 = vpack.c.bf16 %v840, %v839
      %v889 = vpack.c.bf16 %v842, %v841
      %v890 = vpack.c.bf16 %v844, %v843
      %v891 = vpack.c.bf16 %v846, %v845
      %v892 = vpack.c.bf16 %v848, %v847
      %v893 = vpack.c.bf16 %v850, %v849
      %v894 = vpack.c.bf16 %v852, %v851
      %v895 = vpack.c.bf16 %v854, %v853
      %v896 = vpack.c.bf16 %v856, %v855
      %v897 = vpack.c.bf16 %v858, %v857
      %v898 = vpack.c.bf16 %v860, %v859
      %v899 = vpack.c.bf16 %v862, %v861
      %v900 = vpack.c.bf16 %v864, %v863
      %v901 = vpack.c.bf16 %v866, %v865
      %v902 = vpack.c.bf16 %v868, %v867
      %v903 = vpack.c.bf16 %v870, %v869
      %v904 = vpack.c.bf16 %v872, %v871
      %s905 = scalar_lea.vmem [#allocation2], 16
      %v906 = vld [vmem:[%s905] sm:$0xff]
      %v907 = vld [vmem:[%s905 + $0x10] sm:$0xff]
      %v908 = vld [vmem:[%s905 + $0x20] sm:$0xff]
      %v909 = vld [vmem:[%s905 + $0x30] sm:$0xff]
      %v910 = vld [vmem:[%s905 + $0x40] sm:$0xff]
      %v911 = vld [vmem:[%s905 + $0x50] sm:$0xff]
      %v912 = vld [vmem:[%s905 + $0x60] sm:$0xff]
      %v913 = vld [vmem:[%s905 + $0x70] sm:$0xff]
      %v914 = vld [vmem:[%s905 + $0xa0] sm:$0xff]
      %v915 = vld [vmem:[%s905 + $0xb0] sm:$0xff]
      %v916 = vld [vmem:[%s905 + $0xc0] sm:$0xff]
      %v917 = vld [vmem:[%s905 + $0xd0] sm:$0xff]
      %v918 = vld [vmem:[%s905 + $0xe0] sm:$0xff]
      %v919 = vld [vmem:[%s905 + $0xf0] sm:$0xff]
      %v920 = vld [vmem:[%s905 + $0x100] sm:$0xff]
      %v921 = vld [vmem:[%s905 + $0x110] sm:$0xff]
      %v922 = vld [vmem:[%s905 + $0x140] sm:$0xff]
      %v923 = vld [vmem:[%s905 + $0x150] sm:$0xff]
      %v924 = vld [vmem:[%s905 + $0x160] sm:$0xff]
      %v925 = vld [vmem:[%s905 + $0x170] sm:$0xff]
      %v926 = vld [vmem:[%s905 + $0x180] sm:$0xff]
      %v927 = vld [vmem:[%s905 + $0x190] sm:$0xff]
      %v928 = vld [vmem:[%s905 + $0x1a0] sm:$0xff]
      %v929 = vld [vmem:[%s905 + $0x1b0] sm:$0xff]
      %v930 = vld [vmem:[%s905 + $0x1e0] sm:$0xff]
      %v931 = vld [vmem:[%s905 + $0x1f0] sm:$0xff]
      %v932 = vld [vmem:[%s905 + $0x200] sm:$0xff]
      %v933 = vld [vmem:[%s905 + $0x210] sm:$0xff]
      %v934 = vld [vmem:[%s905 + $0x220] sm:$0xff]
      %v935 = vld [vmem:[%s905 + $0x230] sm:$0xff]
      %v936 = vld [vmem:[%s905 + $0x240] sm:$0xff]
      %v937 = vld [vmem:[%s905 + $0x250] sm:$0xff]
      %v938 = vld [vmem:[%s905 + $0x280] sm:$0xff]
      %v939 = vld [vmem:[%s905 + $0x290] sm:$0xff]
      %v940 = vld [vmem:[%s905 + $0x2a0] sm:$0xff]
      %v941 = vld [vmem:[%s905 + $0x2b0] sm:$0xff]
      %v942 = vld [vmem:[%s905 + $0x2c0] sm:$0xff]
      %v943 = vld [vmem:[%s905 + $0x2d0] sm:$0xff]
      %v944 = vld [vmem:[%s905 + $0x2e0] sm:$0xff]
      %v945 = vld [vmem:[%s905 + $0x2f0] sm:$0xff]
      %v946 = vld [vmem:[%s905 + $0x320] sm:$0xff]
      %v947 = vld [vmem:[%s905 + $0x330] sm:$0xff]
      %v948 = vld [vmem:[%s905 + $0x340] sm:$0xff]
      %v949 = vld [vmem:[%s905 + $0x350] sm:$0xff]
      %v950 = vld [vmem:[%s905 + $0x360] sm:$0xff]
      %v951 = vld [vmem:[%s905 + $0x370] sm:$0xff]
      %v952 = vld [vmem:[%s905 + $0x380] sm:$0xff]
      %v953 = vld [vmem:[%s905 + $0x390] sm:$0xff]
      %v954 = vld [vmem:[%s905 + $0x3c0] sm:$0xff]
      %v955 = vld [vmem:[%s905 + $0x3d0] sm:$0xff]
      %v956 = vld [vmem:[%s905 + $0x3e0] sm:$0xff]
      %v957 = vld [vmem:[%s905 + $0x3f0] sm:$0xff]
      %v958 = vld [vmem:[%s905 + $0x400] sm:$0xff]
      %v959 = vld [vmem:[%s905 + $0x410] sm:$0xff]
      %v960 = vld [vmem:[%s905 + $0x420] sm:$0xff]
      %v961 = vld [vmem:[%s905 + $0x430] sm:$0xff]
      %v962 = vld [vmem:[%s905 + $0x460] sm:$0xff]
      %v963 = vld [vmem:[%s905 + $0x470] sm:$0xff]
      %v964 = vld [vmem:[%s905 + $0x480] sm:$0xff]
      %v965 = vld [vmem:[%s905 + $0x490] sm:$0xff]
      %v966 = vld [vmem:[%s905 + $0x4a0] sm:$0xff]
      %v967 = vld [vmem:[%s905 + $0x4b0] sm:$0xff]
      %v968 = vld [vmem:[%s905 + $0x4c0] sm:$0xff]
      %v969 = vld [vmem:[%s905 + $0x4d0] sm:$0xff]
      %v970 = vpack.c.bf16 %v907, %v906
      %v971 = vpack.c.bf16 %v909, %v908
      %v972 = vpack.c.bf16 %v911, %v910
      %v973 = vpack.c.bf16 %v913, %v912
      %v974 = vpack.c.bf16 %v915, %v914
      %v975 = vpack.c.bf16 %v917, %v916
      %v976 = vpack.c.bf16 %v919, %v918
      %v977 = vpack.c.bf16 %v921, %v920
      %v978 = vpack.c.bf16 %v923, %v922
      %v979 = vpack.c.bf16 %v925, %v924
      %v980 = vpack.c.bf16 %v927, %v926
      %v981 = vpack.c.bf16 %v929, %v928
      %v982 = vpack.c.bf16 %v931, %v930
      %v983 = vpack.c.bf16 %v933, %v932
      %v984 = vpack.c.bf16 %v935, %v934
      %v985 = vpack.c.bf16 %v937, %v936
      %v986 = vpack.c.bf16 %v939, %v938
      %v987 = vpack.c.bf16 %v941, %v940
      %v988 = vpack.c.bf16 %v943, %v942
      %v989 = vpack.c.bf16 %v945, %v944
      %v990 = vpack.c.bf16 %v947, %v946
      %v991 = vpack.c.bf16 %v949, %v948
      %v992 = vpack.c.bf16 %v951, %v950
      %v993 = vpack.c.bf16 %v953, %v952
      %v994 = vpack.c.bf16 %v955, %v954
      %v995 = vpack.c.bf16 %v957, %v956
      %v996 = vpack.c.bf16 %v959, %v958
      %v997 = vpack.c.bf16 %v961, %v960
      %v998 = vpack.c.bf16 %v963, %v962
      %v999 = vpack.c.bf16 %v965, %v964
      %v1000 = vpack.c.bf16 %v967, %v966
      %v1001 = vpack.c.bf16 %v969, %v968
      %v1002 = vld [vmem:[%s905 + $0x1] sm:$0xff]
      %v1003 = vld [vmem:[%s905 + $0x11] sm:$0xff]
      %v1004 = vld [vmem:[%s905 + $0x21] sm:$0xff]
      %v1005 = vld [vmem:[%s905 + $0x31] sm:$0xff]
      %v1006 = vld [vmem:[%s905 + $0x41] sm:$0xff]
      %v1007 = vld [vmem:[%s905 + $0x51] sm:$0xff]
      %v1008 = vld [vmem:[%s905 + $0x61] sm:$0xff]
      %v1009 = vld [vmem:[%s905 + $0x71] sm:$0xff]
      %v1010 = vld [vmem:[%s905 + $0xa1] sm:$0xff]
      %v1011 = vld [vmem:[%s905 + $0xb1] sm:$0xff]
      %v1012 = vld [vmem:[%s905 + $0xc1] sm:$0xff]
      %v1013 = vld [vmem:[%s905 + $0xd1] sm:$0xff]
      %v1014 = vld [vmem:[%s905 + $0xe1] sm:$0xff]
      %v1015 = vld [vmem:[%s905 + $0xf1] sm:$0xff]
      %v1016 = vld [vmem:[%s905 + $0x101] sm:$0xff]
      %v1017 = vld [vmem:[%s905 + $0x111] sm:$0xff]
      %v1018 = vld [vmem:[%s905 + $0x141] sm:$0xff]
      %v1019 = vld [vmem:[%s905 + $0x151] sm:$0xff]
      %v1020 = vld [vmem:[%s905 + $0x161] sm:$0xff]
      %v1021 = vld [vmem:[%s905 + $0x171] sm:$0xff]
      %v1022 = vld [vmem:[%s905 + $0x181] sm:$0xff]
      %v1023 = vld [vmem:[%s905 + $0x191] sm:$0xff]
      %v1024 = vld [vmem:[%s905 + $0x1a1] sm:$0xff]
      %v1025 = vld [vmem:[%s905 + $0x1b1] sm:$0xff]
      %v1026 = vld [vmem:[%s905 + $0x1e1] sm:$0xff]
      %v1027 = vld [vmem:[%s905 + $0x1f1] sm:$0xff]
      %v1028 = vld [vmem:[%s905 + $0x201] sm:$0xff]
      %v1029 = vld [vmem:[%s905 + $0x211] sm:$0xff]
      %v1030 = vld [vmem:[%s905 + $0x221] sm:$0xff]
      %v1031 = vld [vmem:[%s905 + $0x231] sm:$0xff]
      %v1032 = vld [vmem:[%s905 + $0x241] sm:$0xff]
      %v1033 = vld [vmem:[%s905 + $0x251] sm:$0xff]
      %v1034 = vld [vmem:[%s905 + $0x281] sm:$0xff]
      %v1035 = vld [vmem:[%s905 + $0x291] sm:$0xff]
      %v1036 = vld [vmem:[%s905 + $0x2a1] sm:$0xff]
      %v1037 = vld [vmem:[%s905 + $0x2b1] sm:$0xff]
      %v1038 = vld [vmem:[%s905 + $0x2c1] sm:$0xff]
      %v1039 = vld [vmem:[%s905 + $0x2d1] sm:$0xff]
      %v1040 = vld [vmem:[%s905 + $0x2e1] sm:$0xff]
      %v1041 = vld [vmem:[%s905 + $0x2f1] sm:$0xff]
      %v1042 = vld [vmem:[%s905 + $0x321] sm:$0xff]
      %v1043 = vld [vmem:[%s905 + $0x331] sm:$0xff]
      %v1044 = vld [vmem:[%s905 + $0x341] sm:$0xff]
      %v1045 = vld [vmem:[%s905 + $0x351] sm:$0xff]
      %v1046 = vld [vmem:[%s905 + $0x361] sm:$0xff]
      %v1047 = vld [vmem:[%s905 + $0x371] sm:$0xff]
      %v1048 = vld [vmem:[%s905 + $0x381] sm:$0xff]
      %v1049 = vld [vmem:[%s905 + $0x391] sm:$0xff]
      %v1050 = vld [vmem:[%s905 + $0x3c1] sm:$0xff]
      %v1051 = vld [vmem:[%s905 + $0x3d1] sm:$0xff]
      %v1052 = vld [vmem:[%s905 + $0x3e1] sm:$0xff]
      %v1053 = vld [vmem:[%s905 + $0x3f1] sm:$0xff]
      %v1054 = vld [vmem:[%s905 + $0x401] sm:$0xff]
      %v1055 = vld [vmem:[%s905 + $0x411] sm:$0xff]
      %v1056 = vld [vmem:[%s905 + $0x421] sm:$0xff]
      %v1057 = vld [vmem:[%s905 + $0x431] sm:$0xff]
      %v1058 = vld [vmem:[%s905 + $0x461] sm:$0xff]
      %v1059 = vld [vmem:[%s905 + $0x471] sm:$0xff]
      %v1060 = vld [vmem:[%s905 + $0x481] sm:$0xff]
      %v1061 = vld [vmem:[%s905 + $0x491] sm:$0xff]
      %v1062 = vld [vmem:[%s905 + $0x4a1] sm:$0xff]
      %v1063 = vld [vmem:[%s905 + $0x4b1] sm:$0xff]
      %v1064 = vld [vmem:[%s905 + $0x4c1] sm:$0xff]
      %v1065 = vld [vmem:[%s905 + $0x4d1] sm:$0xff]
      %v1066 = vpack.c.bf16 %v1003, %v1002
      %v1067 = vpack.c.bf16 %v1005, %v1004
      %v1068 = vpack.c.bf16 %v1007, %v1006
      %v1069 = vpack.c.bf16 %v1009, %v1008
      %v1070 = vpack.c.bf16 %v1011, %v1010
      %v1071 = vpack.c.bf16 %v1013, %v1012
      %v1072 = vpack.c.bf16 %v1015, %v1014
      %v1073 = vpack.c.bf16 %v1017, %v1016
      %v1074 = vpack.c.bf16 %v1019, %v1018
      %v1075 = vpack.c.bf16 %v1021, %v1020
      %v1076 = vpack.c.bf16 %v1023, %v1022
      %v1077 = vpack.c.bf16 %v1025, %v1024
      %v1078 = vpack.c.bf16 %v1027, %v1026
      %v1079 = vpack.c.bf16 %v1029, %v1028
      %v1080 = vpack.c.bf16 %v1031, %v1030
      %v1081 = vpack.c.bf16 %v1033, %v1032
      %v1082 = vpack.c.bf16 %v1035, %v1034
      %v1083 = vpack.c.bf16 %v1037, %v1036
      %v1084 = vpack.c.bf16 %v1039, %v1038
      %v1085 = vpack.c.bf16 %v1041, %v1040
      %v1086 = vpack.c.bf16 %v1043, %v1042
      %v1087 = vpack.c.bf16 %v1045, %v1044
      %v1088 = vpack.c.bf16 %v1047, %v1046
      %v1089 = vpack.c.bf16 %v1049, %v1048
      %v1090 = vpack.c.bf16 %v1051, %v1050
      %v1091 = vpack.c.bf16 %v1053, %v1052
      %v1092 = vpack.c.bf16 %v1055, %v1054
      %v1093 = vpack.c.bf16 %v1057, %v1056
      %v1094 = vpack.c.bf16 %v1059, %v1058
      %v1095 = vpack.c.bf16 %v1061, %v1060
      %v1096 = vpack.c.bf16 %v1063, %v1062
      %v1097 = vpack.c.bf16 %v1065, %v1064
      %v1098 = vld [vmem:[%s905 + $0x2] sm:$0xff]
      %v1099 = vld [vmem:[%s905 + $0x12] sm:$0xff]
      %v1100 = vld [vmem:[%s905 + $0x22] sm:$0xff]
      %v1101 = vld [vmem:[%s905 + $0x32] sm:$0xff]
      %v1102 = vld [vmem:[%s905 + $0x42] sm:$0xff]
      %v1103 = vld [vmem:[%s905 + $0x52] sm:$0xff]
      %v1104 = vld [vmem:[%s905 + $0x62] sm:$0xff]
      %v1105 = vld [vmem:[%s905 + $0x72] sm:$0xff]
      %v1106 = vld [vmem:[%s905 + $0xa2] sm:$0xff]
      %v1107 = vld [vmem:[%s905 + $0xb2] sm:$0xff]
      %v1108 = vld [vmem:[%s905 + $0xc2] sm:$0xff]
      %v1109 = vld [vmem:[%s905 + $0xd2] sm:$0xff]
      %v1110 = vld [vmem:[%s905 + $0xe2] sm:$0xff]
      %v1111 = vld [vmem:[%s905 + $0xf2] sm:$0xff]
      %v1112 = vld [vmem:[%s905 + $0x102] sm:$0xff]
      %v1113 = vld [vmem:[%s905 + $0x112] sm:$0xff]
      %v1114 = vld [vmem:[%s905 + $0x142] sm:$0xff]
      %v1115 = vld [vmem:[%s905 + $0x152] sm:$0xff]
      %v1116 = vld [vmem:[%s905 + $0x162] sm:$0xff]
      %v1117 = vld [vmem:[%s905 + $0x172] sm:$0xff]
      %v1118 = vld [vmem:[%s905 + $0x182] sm:$0xff]
      %v1119 = vld [vmem:[%s905 + $0x192] sm:$0xff]
      %v1120 = vld [vmem:[%s905 + $0x1a2] sm:$0xff]
      %v1121 = vld [vmem:[%s905 + $0x1b2] sm:$0xff]
      %v1122 = vld [vmem:[%s905 + $0x1e2] sm:$0xff]
      %v1123 = vld [vmem:[%s905 + $0x1f2] sm:$0xff]
      %v1124 = vld [vmem:[%s905 + $0x202] sm:$0xff]
      %v1125 = vld [vmem:[%s905 + $0x212] sm:$0xff]
      %v1126 = vld [vmem:[%s905 + $0x222] sm:$0xff]
      %v1127 = vld [vmem:[%s905 + $0x232] sm:$0xff]
      %v1128 = vld [vmem:[%s905 + $0x242] sm:$0xff]
      %v1129 = vld [vmem:[%s905 + $0x252] sm:$0xff]
      %v1130 = vld [vmem:[%s905 + $0x282] sm:$0xff]
      %v1131 = vld [vmem:[%s905 + $0x292] sm:$0xff]
      %v1132 = vld [vmem:[%s905 + $0x2a2] sm:$0xff]
      %v1133 = vld [vmem:[%s905 + $0x2b2] sm:$0xff]
      %v1134 = vld [vmem:[%s905 + $0x2c2] sm:$0xff]
      %v1135 = vld [vmem:[%s905 + $0x2d2] sm:$0xff]
      %v1136 = vld [vmem:[%s905 + $0x2e2] sm:$0xff]
      %v1137 = vld [vmem:[%s905 + $0x2f2] sm:$0xff]
      %v1138 = vld [vmem:[%s905 + $0x322] sm:$0xff]
      %v1139 = vld [vmem:[%s905 + $0x332] sm:$0xff]
      %v1140 = vld [vmem:[%s905 + $0x342] sm:$0xff]
      %v1141 = vld [vmem:[%s905 + $0x352] sm:$0xff]
      %v1142 = vld [vmem:[%s905 + $0x362] sm:$0xff]
      %v1143 = vld [vmem:[%s905 + $0x372] sm:$0xff]
      %v1144 = vld [vmem:[%s905 + $0x382] sm:$0xff]
      %v1145 = vld [vmem:[%s905 + $0x392] sm:$0xff]
      %v1146 = vld [vmem:[%s905 + $0x3c2] sm:$0xff]
      %v1147 = vld [vmem:[%s905 + $0x3d2] sm:$0xff]
      %v1148 = vld [vmem:[%s905 + $0x3e2] sm:$0xff]
      %v1149 = vld [vmem:[%s905 + $0x3f2] sm:$0xff]
      %v1150 = vld [vmem:[%s905 + $0x402] sm:$0xff]
      %v1151 = vld [vmem:[%s905 + $0x412] sm:$0xff]
      %v1152 = vld [vmem:[%s905 + $0x422] sm:$0xff]
      %v1153 = vld [vmem:[%s905 + $0x432] sm:$0xff]
      %v1154 = vld [vmem:[%s905 + $0x462] sm:$0xff]
      %v1155 = vld [vmem:[%s905 + $0x472] sm:$0xff]
      %v1156 = vld [vmem:[%s905 + $0x482] sm:$0xff]
      %v1157 = vld [vmem:[%s905 + $0x492] sm:$0xff]
      %v1158 = vld [vmem:[%s905 + $0x4a2] sm:$0xff]
      %v1159 = vld [vmem:[%s905 + $0x4b2] sm:$0xff]
      %v1160 = vld [vmem:[%s905 + $0x4c2] sm:$0xff]
      %v1161 = vld [vmem:[%s905 + $0x4d2] sm:$0xff]
      %v1162 = vpack.c.bf16 %v1099, %v1098
      %v1163 = vpack.c.bf16 %v1101, %v1100
      %v1164 = vpack.c.bf16 %v1103, %v1102
      %v1165 = vpack.c.bf16 %v1105, %v1104
      %v1166 = vpack.c.bf16 %v1107, %v1106
      %v1167 = vpack.c.bf16 %v1109, %v1108
      %v1168 = vpack.c.bf16 %v1111, %v1110
      %v1169 = vpack.c.bf16 %v1113, %v1112
      %v1170 = vpack.c.bf16 %v1115, %v1114
      %v1171 = vpack.c.bf16 %v1117, %v1116
      %v1172 = vpack.c.bf16 %v1119, %v1118
      %v1173 = vpack.c.bf16 %v1121, %v1120
      %v1174 = vpack.c.bf16 %v1123, %v1122
      %v1175 = vpack.c.bf16 %v1125, %v1124
      %v1176 = vpack.c.bf16 %v1127, %v1126
      %v1177 = vpack.c.bf16 %v1129, %v1128
      %v1178 = vpack.c.bf16 %v1131, %v1130
      %v1179 = vpack.c.bf16 %v1133, %v1132
      %v1180 = vpack.c.bf16 %v1135, %v1134
      %v1181 = vpack.c.bf16 %v1137, %v1136
      %v1182 = vpack.c.bf16 %v1139, %v1138
      %v1183 = vpack.c.bf16 %v1141, %v1140
      %v1184 = vpack.c.bf16 %v1143, %v1142
      %v1185 = vpack.c.bf16 %v1145, %v1144
      %v1186 = vpack.c.bf16 %v1147, %v1146
      %v1187 = vpack.c.bf16 %v1149, %v1148
      %v1188 = vpack.c.bf16 %v1151, %v1150
      %v1189 = vpack.c.bf16 %v1153, %v1152
      %v1190 = vpack.c.bf16 %v1155, %v1154
      %v1191 = vpack.c.bf16 %v1157, %v1156
      %v1192 = vpack.c.bf16 %v1159, %v1158
      %v1193 = vpack.c.bf16 %v1161, %v1160
      %s1194 = scalar_lea.vmem [#allocation2], 32
      %v1195 = vld [vmem:[%s1194] sm:$0xff]
      %v1196 = vld [vmem:[%s1194 + $0x10] sm:$0xff]
      %v1197 = vld [vmem:[%s1194 + $0x20] sm:$0xff]
      %v1198 = vld [vmem:[%s1194 + $0x30] sm:$0xff]
      %v1199 = vld [vmem:[%s1194 + $0x40] sm:$0xff]
      %v1200 = vld [vmem:[%s1194 + $0x50] sm:$0xff]
      %v1201 = vld [vmem:[%s1194 + $0x60] sm:$0xff]
      %v1202 = vld [vmem:[%s1194 + $0x70] sm:$0xff]
      %v1203 = vld [vmem:[%s1194 + $0xa0] sm:$0xff]
      %v1204 = vld [vmem:[%s1194 + $0xb0] sm:$0xff]
      %v1205 = vld [vmem:[%s1194 + $0xc0] sm:$0xff]
      %v1206 = vld [vmem:[%s1194 + $0xd0] sm:$0xff]
      %v1207 = vld [vmem:[%s1194 + $0xe0] sm:$0xff]
      %v1208 = vld [vmem:[%s1194 + $0xf0] sm:$0xff]
      %v1209 = vld [vmem:[%s1194 + $0x100] sm:$0xff]
      %v1210 = vld [vmem:[%s1194 + $0x110] sm:$0xff]
      %v1211 = vld [vmem:[%s1194 + $0x140] sm:$0xff]
      %v1212 = vld [vmem:[%s1194 + $0x150] sm:$0xff]
      %v1213 = vld [vmem:[%s1194 + $0x160] sm:$0xff]
      %v1214 = vld [vmem:[%s1194 + $0x170] sm:$0xff]
      %v1215 = vld [vmem:[%s1194 + $0x180] sm:$0xff]
      %v1216 = vld [vmem:[%s1194 + $0x190] sm:$0xff]
      %v1217 = vld [vmem:[%s1194 + $0x1a0] sm:$0xff]
      %v1218 = vld [vmem:[%s1194 + $0x1b0] sm:$0xff]
      %v1219 = vld [vmem:[%s1194 + $0x1e0] sm:$0xff]
      %v1220 = vld [vmem:[%s1194 + $0x1f0] sm:$0xff]
      %v1221 = vld [vmem:[%s1194 + $0x200] sm:$0xff]
      %v1222 = vld [vmem:[%s1194 + $0x210] sm:$0xff]
      %v1223 = vld [vmem:[%s1194 + $0x220] sm:$0xff]
      %v1224 = vld [vmem:[%s1194 + $0x230] sm:$0xff]
      %v1225 = vld [vmem:[%s1194 + $0x240] sm:$0xff]
      %v1226 = vld [vmem:[%s1194 + $0x250] sm:$0xff]
      %v1227 = vld [vmem:[%s1194 + $0x280] sm:$0xff]
      %v1228 = vld [vmem:[%s1194 + $0x290] sm:$0xff]
      %v1229 = vld [vmem:[%s1194 + $0x2a0] sm:$0xff]
      %v1230 = vld [vmem:[%s1194 + $0x2b0] sm:$0xff]
      %v1231 = vld [vmem:[%s1194 + $0x2c0] sm:$0xff]
      %v1232 = vld [vmem:[%s1194 + $0x2d0] sm:$0xff]
      %v1233 = vld [vmem:[%s1194 + $0x2e0] sm:$0xff]
      %v1234 = vld [vmem:[%s1194 + $0x2f0] sm:$0xff]
      %v1235 = vld [vmem:[%s1194 + $0x320] sm:$0xff]
      %v1236 = vld [vmem:[%s1194 + $0x330] sm:$0xff]
      %v1237 = vld [vmem:[%s1194 + $0x340] sm:$0xff]
      %v1238 = vld [vmem:[%s1194 + $0x350] sm:$0xff]
      %v1239 = vld [vmem:[%s1194 + $0x360] sm:$0xff]
      %v1240 = vld [vmem:[%s1194 + $0x370] sm:$0xff]
      %v1241 = vld [vmem:[%s1194 + $0x380] sm:$0xff]
      %v1242 = vld [vmem:[%s1194 + $0x390] sm:$0xff]
      %v1243 = vld [vmem:[%s1194 + $0x3c0] sm:$0xff]
      %v1244 = vld [vmem:[%s1194 + $0x3d0] sm:$0xff]
      %v1245 = vld [vmem:[%s1194 + $0x3e0] sm:$0xff]
      %v1246 = vld [vmem:[%s1194 + $0x3f0] sm:$0xff]
      %v1247 = vld [vmem:[%s1194 + $0x400] sm:$0xff]
      %v1248 = vld [vmem:[%s1194 + $0x410] sm:$0xff]
      %v1249 = vld [vmem:[%s1194 + $0x420] sm:$0xff]
      %v1250 = vld [vmem:[%s1194 + $0x430] sm:$0xff]
      %v1251 = vld [vmem:[%s1194 + $0x460] sm:$0xff]
      %v1252 = vld [vmem:[%s1194 + $0x470] sm:$0xff]
      %v1253 = vld [vmem:[%s1194 + $0x480] sm:$0xff]
      %v1254 = vld [vmem:[%s1194 + $0x490] sm:$0xff]
      %v1255 = vld [vmem:[%s1194 + $0x4a0] sm:$0xff]
      %v1256 = vld [vmem:[%s1194 + $0x4b0] sm:$0xff]
      %v1257 = vld [vmem:[%s1194 + $0x4c0] sm:$0xff]
      %v1258 = vld [vmem:[%s1194 + $0x4d0] sm:$0xff]
      %v1259 = vpack.c.bf16 %v1196, %v1195
      %v1260 = vpack.c.bf16 %v1198, %v1197
      %v1261 = vpack.c.bf16 %v1200, %v1199
      %v1262 = vpack.c.bf16 %v1202, %v1201
      %v1263 = vpack.c.bf16 %v1204, %v1203
      %v1264 = vpack.c.bf16 %v1206, %v1205
      %v1265 = vpack.c.bf16 %v1208, %v1207
      %v1266 = vpack.c.bf16 %v1210, %v1209
      %v1267 = vpack.c.bf16 %v1212, %v1211
      %v1268 = vpack.c.bf16 %v1214, %v1213
      %v1269 = vpack.c.bf16 %v1216, %v1215
      %v1270 = vpack.c.bf16 %v1218, %v1217
      %v1271 = vpack.c.bf16 %v1220, %v1219
      %v1272 = vpack.c.bf16 %v1222, %v1221
      %v1273 = vpack.c.bf16 %v1224, %v1223
      %v1274 = vpack.c.bf16 %v1226, %v1225
      %v1275 = vpack.c.bf16 %v1228, %v1227
      %v1276 = vpack.c.bf16 %v1230, %v1229
      %v1277 = vpack.c.bf16 %v1232, %v1231
      %v1278 = vpack.c.bf16 %v1234, %v1233
      %v1279 = vpack.c.bf16 %v1236, %v1235
      %v1280 = vpack.c.bf16 %v1238, %v1237
      %v1281 = vpack.c.bf16 %v1240, %v1239
      %v1282 = vpack.c.bf16 %v1242, %v1241
      %v1283 = vpack.c.bf16 %v1244, %v1243
      %v1284 = vpack.c.bf16 %v1246, %v1245
      %v1285 = vpack.c.bf16 %v1248, %v1247
      %v1286 = vpack.c.bf16 %v1250, %v1249
      %v1287 = vpack.c.bf16 %v1252, %v1251
      %v1288 = vpack.c.bf16 %v1254, %v1253
      %v1289 = vpack.c.bf16 %v1256, %v1255
      %v1290 = vpack.c.bf16 %v1258, %v1257
      %v1291 = vld [vmem:[%s1194 + $0x1] sm:$0xff]
      %v1292 = vld [vmem:[%s1194 + $0x11] sm:$0xff]
      %v1293 = vld [vmem:[%s1194 + $0x21] sm:$0xff]
      %v1294 = vld [vmem:[%s1194 + $0x31] sm:$0xff]
      %v1295 = vld [vmem:[%s1194 + $0x41] sm:$0xff]
      %v1296 = vld [vmem:[%s1194 + $0x51] sm:$0xff]
      %v1297 = vld [vmem:[%s1194 + $0x61] sm:$0xff]
      %v1298 = vld [vmem:[%s1194 + $0x71] sm:$0xff]
      %v1299 = vld [vmem:[%s1194 + $0xa1] sm:$0xff]
      %v1300 = vld [vmem:[%s1194 + $0xb1] sm:$0xff]
      %v1301 = vld [vmem:[%s1194 + $0xc1] sm:$0xff]
      %v1302 = vld [vmem:[%s1194 + $0xd1] sm:$0xff]
      %v1303 = vld [vmem:[%s1194 + $0xe1] sm:$0xff]
      %v1304 = vld [vmem:[%s1194 + $0xf1] sm:$0xff]
      %v1305 = vld [vmem:[%s1194 + $0x101] sm:$0xff]
      %v1306 = vld [vmem:[%s1194 + $0x111] sm:$0xff]
      %v1307 = vld [vmem:[%s1194 + $0x141] sm:$0xff]
      %v1308 = vld [vmem:[%s1194 + $0x151] sm:$0xff]
      %v1309 = vld [vmem:[%s1194 + $0x161] sm:$0xff]
      %v1310 = vld [vmem:[%s1194 + $0x171] sm:$0xff]
      %v1311 = vld [vmem:[%s1194 + $0x181] sm:$0xff]
      %v1312 = vld [vmem:[%s1194 + $0x191] sm:$0xff]
      %v1313 = vld [vmem:[%s1194 + $0x1a1] sm:$0xff]
      %v1314 = vld [vmem:[%s1194 + $0x1b1] sm:$0xff]
      %v1315 = vld [vmem:[%s1194 + $0x1e1] sm:$0xff]
      %v1316 = vld [vmem:[%s1194 + $0x1f1] sm:$0xff]
      %v1317 = vld [vmem:[%s1194 + $0x201] sm:$0xff]
      %v1318 = vld [vmem:[%s1194 + $0x211] sm:$0xff]
      %v1319 = vld [vmem:[%s1194 + $0x221] sm:$0xff]
      %v1320 = vld [vmem:[%s1194 + $0x231] sm:$0xff]
      %v1321 = vld [vmem:[%s1194 + $0x241] sm:$0xff]
      %v1322 = vld [vmem:[%s1194 + $0x251] sm:$0xff]
      %v1323 = vld [vmem:[%s1194 + $0x281] sm:$0xff]
      %v1324 = vld [vmem:[%s1194 + $0x291] sm:$0xff]
      %v1325 = vld [vmem:[%s1194 + $0x2a1] sm:$0xff]
      %v1326 = vld [vmem:[%s1194 + $0x2b1] sm:$0xff]
      %v1327 = vld [vmem:[%s1194 + $0x2c1] sm:$0xff]
      %v1328 = vld [vmem:[%s1194 + $0x2d1] sm:$0xff]
      %v1329 = vld [vmem:[%s1194 + $0x2e1] sm:$0xff]
      %v1330 = vld [vmem:[%s1194 + $0x2f1] sm:$0xff]
      %v1331 = vld [vmem:[%s1194 + $0x321] sm:$0xff]
      %v1332 = vld [vmem:[%s1194 + $0x331] sm:$0xff]
      %v1333 = vld [vmem:[%s1194 + $0x341] sm:$0xff]
      %v1334 = vld [vmem:[%s1194 + $0x351] sm:$0xff]
      %v1335 = vld [vmem:[%s1194 + $0x361] sm:$0xff]
      %v1336 = vld [vmem:[%s1194 + $0x371] sm:$0xff]
      %v1337 = vld [vmem:[%s1194 + $0x381] sm:$0xff]
      %v1338 = vld [vmem:[%s1194 + $0x391] sm:$0xff]
      %v1339 = vld [vmem:[%s1194 + $0x3c1] sm:$0xff]
      %v1340 = vld [vmem:[%s1194 + $0x3d1] sm:$0xff]
      %v1341 = vld [vmem:[%s1194 + $0x3e1] sm:$0xff]
      %v1342 = vld [vmem:[%s1194 + $0x3f1] sm:$0xff]
      %v1343 = vld [vmem:[%s1194 + $0x401] sm:$0xff]
      %v1344 = vld [vmem:[%s1194 + $0x411] sm:$0xff]
      %v1345 = vld [vmem:[%s1194 + $0x421] sm:$0xff]
      %v1346 = vld [vmem:[%s1194 + $0x431] sm:$0xff]
      %v1347 = vld [vmem:[%s1194 + $0x461] sm:$0xff]
      %v1348 = vld [vmem:[%s1194 + $0x471] sm:$0xff]
      %v1349 = vld [vmem:[%s1194 + $0x481] sm:$0xff]
      %v1350 = vld [vmem:[%s1194 + $0x491] sm:$0xff]
      %v1351 = vld [vmem:[%s1194 + $0x4a1] sm:$0xff]
      %v1352 = vld [vmem:[%s1194 + $0x4b1] sm:$0xff]
      %v1353 = vld [vmem:[%s1194 + $0x4c1] sm:$0xff]
      %v1354 = vld [vmem:[%s1194 + $0x4d1] sm:$0xff]
      %v1355 = vpack.c.bf16 %v1292, %v1291
      %v1356 = vpack.c.bf16 %v1294, %v1293
      %v1357 = vpack.c.bf16 %v1296, %v1295
      %v1358 = vpack.c.bf16 %v1298, %v1297
      %v1359 = vpack.c.bf16 %v1300, %v1299
      %v1360 = vpack.c.bf16 %v1302, %v1301
      %v1361 = vpack.c.bf16 %v1304, %v1303
      %v1362 = vpack.c.bf16 %v1306, %v1305
      %v1363 = vpack.c.bf16 %v1308, %v1307
      %v1364 = vpack.c.bf16 %v1310, %v1309
      %v1365 = vpack.c.bf16 %v1312, %v1311
      %v1366 = vpack.c.bf16 %v1314, %v1313
      %v1367 = vpack.c.bf16 %v1316, %v1315
      %v1368 = vpack.c.bf16 %v1318, %v1317
      %v1369 = vpack.c.bf16 %v1320, %v1319
      %v1370 = vpack.c.bf16 %v1322, %v1321
      %v1371 = vpack.c.bf16 %v1324, %v1323
      %v1372 = vpack.c.bf16 %v1326, %v1325
      %v1373 = vpack.c.bf16 %v1328, %v1327
      %v1374 = vpack.c.bf16 %v1330, %v1329
      %v1375 = vpack.c.bf16 %v1332, %v1331
      %v1376 = vpack.c.bf16 %v1334, %v1333
      %v1377 = vpack.c.bf16 %v1336, %v1335
      %v1378 = vpack.c.bf16 %v1338, %v1337
      %v1379 = vpack.c.bf16 %v1340, %v1339
      %v1380 = vpack.c.bf16 %v1342, %v1341
      %v1381 = vpack.c.bf16 %v1344, %v1343
      %v1382 = vpack.c.bf16 %v1346, %v1345
      %v1383 = vpack.c.bf16 %v1348, %v1347
      %v1384 = vpack.c.bf16 %v1350, %v1349
      %v1385 = vpack.c.bf16 %v1352, %v1351
      %v1386 = vpack.c.bf16 %v1354, %v1353
      %v1387 = vld [vmem:[%s1194 + $0x2] sm:$0xff]
      %v1388 = vld [vmem:[%s1194 + $0x12] sm:$0xff]
      %v1389 = vld [vmem:[%s1194 + $0x22] sm:$0xff]
      %v1390 = vld [vmem:[%s1194 + $0x32] sm:$0xff]
      %v1391 = vld [vmem:[%s1194 + $0x42] sm:$0xff]
      %v1392 = vld [vmem:[%s1194 + $0x52] sm:$0xff]
      %v1393 = vld [vmem:[%s1194 + $0x62] sm:$0xff]
      %v1394 = vld [vmem:[%s1194 + $0x72] sm:$0xff]
      %v1395 = vld [vmem:[%s1194 + $0xa2] sm:$0xff]
      %v1396 = vld [vmem:[%s1194 + $0xb2] sm:$0xff]
      %v1397 = vld [vmem:[%s1194 + $0xc2] sm:$0xff]
      %v1398 = vld [vmem:[%s1194 + $0xd2] sm:$0xff]
      %v1399 = vld [vmem:[%s1194 + $0xe2] sm:$0xff]
      %v1400 = vld [vmem:[%s1194 + $0xf2] sm:$0xff]
      %v1401 = vld [vmem:[%s1194 + $0x102] sm:$0xff]
      %v1402 = vld [vmem:[%s1194 + $0x112] sm:$0xff]
      %v1403 = vld [vmem:[%s1194 + $0x142] sm:$0xff]
      %v1404 = vld [vmem:[%s1194 + $0x152] sm:$0xff]
      %v1405 = vld [vmem:[%s1194 + $0x162] sm:$0xff]
      %v1406 = vld [vmem:[%s1194 + $0x172] sm:$0xff]
      %v1407 = vld [vmem:[%s1194 + $0x182] sm:$0xff]
      %v1408 = vld [vmem:[%s1194 + $0x192] sm:$0xff]
      %v1409 = vld [vmem:[%s1194 + $0x1a2] sm:$0xff]
      %v1410 = vld [vmem:[%s1194 + $0x1b2] sm:$0xff]
      %v1411 = vld [vmem:[%s1194 + $0x1e2] sm:$0xff]
      %v1412 = vld [vmem:[%s1194 + $0x1f2] sm:$0xff]
      %v1413 = vld [vmem:[%s1194 + $0x202] sm:$0xff]
      %v1414 = vld [vmem:[%s1194 + $0x212] sm:$0xff]
      %v1415 = vld [vmem:[%s1194 + $0x222] sm:$0xff]
      %v1416 = vld [vmem:[%s1194 + $0x232] sm:$0xff]
      %v1417 = vld [vmem:[%s1194 + $0x242] sm:$0xff]
      %v1418 = vld [vmem:[%s1194 + $0x252] sm:$0xff]
      %v1419 = vld [vmem:[%s1194 + $0x282] sm:$0xff]
      %v1420 = vld [vmem:[%s1194 + $0x292] sm:$0xff]
      %v1421 = vld [vmem:[%s1194 + $0x2a2] sm:$0xff]
      %v1422 = vld [vmem:[%s1194 + $0x2b2] sm:$0xff]
      %v1423 = vld [vmem:[%s1194 + $0x2c2] sm:$0xff]
      %v1424 = vld [vmem:[%s1194 + $0x2d2] sm:$0xff]
      %v1425 = vld [vmem:[%s1194 + $0x2e2] sm:$0xff]
      %v1426 = vld [vmem:[%s1194 + $0x2f2] sm:$0xff]
      %v1427 = vld [vmem:[%s1194 + $0x322] sm:$0xff]
      %v1428 = vld [vmem:[%s1194 + $0x332] sm:$0xff]
      %v1429 = vld [vmem:[%s1194 + $0x342] sm:$0xff]
      %v1430 = vld [vmem:[%s1194 + $0x352] sm:$0xff]
      %v1431 = vld [vmem:[%s1194 + $0x362] sm:$0xff]
      %v1432 = vld [vmem:[%s1194 + $0x372] sm:$0xff]
      %v1433 = vld [vmem:[%s1194 + $0x382] sm:$0xff]
      %v1434 = vld [vmem:[%s1194 + $0x392] sm:$0xff]
      %v1435 = vld [vmem:[%s1194 + $0x3c2] sm:$0xff]
      %v1436 = vld [vmem:[%s1194 + $0x3d2] sm:$0xff]
      %v1437 = vld [vmem:[%s1194 + $0x3e2] sm:$0xff]
      %v1438 = vld [vmem:[%s1194 + $0x3f2] sm:$0xff]
      %v1439 = vld [vmem:[%s1194 + $0x402] sm:$0xff]
      %v1440 = vld [vmem:[%s1194 + $0x412] sm:$0xff]
      %v1441 = vld [vmem:[%s1194 + $0x422] sm:$0xff]
      %v1442 = vld [vmem:[%s1194 + $0x432] sm:$0xff]
      %v1443 = vld [vmem:[%s1194 + $0x462] sm:$0xff]
      %v1444 = vld [vmem:[%s1194 + $0x472] sm:$0xff]
      %v1445 = vld [vmem:[%s1194 + $0x482] sm:$0xff]
      %v1446 = vld [vmem:[%s1194 + $0x492] sm:$0xff]
      %v1447 = vld [vmem:[%s1194 + $0x4a2] sm:$0xff]
      %v1448 = vld [vmem:[%s1194 + $0x4b2] sm:$0xff]
      %v1449 = vld [vmem:[%s1194 + $0x4c2] sm:$0xff]
      %v1450 = vld [vmem:[%s1194 + $0x4d2] sm:$0xff]
      %v1451 = vpack.c.bf16 %v1388, %v1387
      %v1452 = vpack.c.bf16 %v1390, %v1389
      %v1453 = vpack.c.bf16 %v1392, %v1391
      %v1454 = vpack.c.bf16 %v1394, %v1393
      %v1455 = vpack.c.bf16 %v1396, %v1395
      %v1456 = vpack.c.bf16 %v1398, %v1397
      %v1457 = vpack.c.bf16 %v1400, %v1399
      %v1458 = vpack.c.bf16 %v1402, %v1401
      %v1459 = vpack.c.bf16 %v1404, %v1403
      %v1460 = vpack.c.bf16 %v1406, %v1405
      %v1461 = vpack.c.bf16 %v1408, %v1407
      %v1462 = vpack.c.bf16 %v1410, %v1409
      %v1463 = vpack.c.bf16 %v1412, %v1411
      %v1464 = vpack.c.bf16 %v1414, %v1413
      %v1465 = vpack.c.bf16 %v1416, %v1415
      %v1466 = vpack.c.bf16 %v1418, %v1417
      %v1467 = vpack.c.bf16 %v1420, %v1419
      %v1468 = vpack.c.bf16 %v1422, %v1421
      %v1469 = vpack.c.bf16 %v1424, %v1423
      %v1470 = vpack.c.bf16 %v1426, %v1425
      %v1471 = vpack.c.bf16 %v1428, %v1427
      %v1472 = vpack.c.bf16 %v1430, %v1429
      %v1473 = vpack.c.bf16 %v1432, %v1431
      %v1474 = vpack.c.bf16 %v1434, %v1433
      %v1475 = vpack.c.bf16 %v1436, %v1435
      %v1476 = vpack.c.bf16 %v1438, %v1437
      %v1477 = vpack.c.bf16 %v1440, %v1439
      %v1478 = vpack.c.bf16 %v1442, %v1441
      %v1479 = vpack.c.bf16 %v1444, %v1443
      %v1480 = vpack.c.bf16 %v1446, %v1445
      %v1481 = vpack.c.bf16 %v1448, %v1447
      %v1482 = vpack.c.bf16 %v1450, %v1449
      %1515 = vrot.lane.b32.xlu0 %v777, 32
      %v1516 = vpop.permute.xlu0 %1515
      %1517 = vrot.lane.b32.xlu0 %v778, 32
      %v1518 = vpop.permute.xlu0 %1517
      %1519 = vrot.lane.b32.xlu0 %v779, 32
      %v1520 = vpop.permute.xlu0 %1519
      %1521 = vrot.lane.b32.xlu0 %v780, 32
      %v1522 = vpop.permute.xlu0 %1521
      %1523 = vrot.lane.b32.xlu0 %v781, 32
      %v1524 = vpop.permute.xlu0 %1523
      %1525 = vrot.lane.b32.xlu0 %v782, 32
      %v1526 = vpop.permute.xlu0 %1525
      %1527 = vrot.lane.b32.xlu0 %v783, 32
      %v1528 = vpop.permute.xlu0 %1527
      %1529 = vrot.lane.b32.xlu0 %v784, 32
      %v1530 = vpop.permute.xlu0 %1529
      %1531 = vrot.lane.b32.xlu0 %v785, 32
      %v1532 = vpop.permute.xlu0 %1531
      %1533 = vrot.lane.b32.xlu0 %v786, 32
      %v1534 = vpop.permute.xlu0 %1533
      %1535 = vrot.lane.b32.xlu0 %v787, 32
      %v1536 = vpop.permute.xlu0 %1535
      %1537 = vrot.lane.b32.xlu0 %v788, 32
      %v1538 = vpop.permute.xlu0 %1537
      %1539 = vrot.lane.b32.xlu0 %v789, 32
      %v1540 = vpop.permute.xlu0 %1539
      %1541 = vrot.lane.b32.xlu0 %v790, 32
      %v1542 = vpop.permute.xlu0 %1541
      %1543 = vrot.lane.b32.xlu0 %v791, 32
      %v1544 = vpop.permute.xlu0 %1543
      %1545 = vrot.lane.b32.xlu0 %v792, 32
      %v1546 = vpop.permute.xlu0 %1545
      %1547 = vrot.lane.b32.xlu0 %v793, 32
      %v1548 = vpop.permute.xlu0 %1547
      %1549 = vrot.lane.b32.xlu0 %v794, 32
      %v1550 = vpop.permute.xlu0 %1549
      %1551 = vrot.lane.b32.xlu0 %v795, 32
      %v1552 = vpop.permute.xlu0 %1551
      %1553 = vrot.lane.b32.xlu0 %v796, 32
      %v1554 = vpop.permute.xlu0 %1553
      %1555 = vrot.lane.b32.xlu0 %v797, 32
      %v1556 = vpop.permute.xlu0 %1555
      %1557 = vrot.lane.b32.xlu0 %v798, 32
      %v1558 = vpop.permute.xlu0 %1557
      %1559 = vrot.lane.b32.xlu0 %v799, 32
      %v1560 = vpop.permute.xlu0 %1559
      %1561 = vrot.lane.b32.xlu0 %v800, 32
      %v1562 = vpop.permute.xlu0 %1561
      %1563 = vrot.lane.b32.xlu0 %v801, 32
      %v1564 = vpop.permute.xlu0 %1563
      %1565 = vrot.lane.b32.xlu0 %v802, 32
      %v1566 = vpop.permute.xlu0 %1565
      %1567 = vrot.lane.b32.xlu0 %v803, 32
      %v1568 = vpop.permute.xlu0 %1567
      %1569 = vrot.lane.b32.xlu0 %v804, 32
      %v1570 = vpop.permute.xlu0 %1569
      %1571 = vrot.lane.b32.xlu0 %v805, 32
      %v1572 = vpop.permute.xlu0 %1571
      %1573 = vrot.lane.b32.xlu0 %v806, 32
      %v1574 = vpop.permute.xlu0 %1573
      %1575 = vrot.lane.b32.xlu0 %v807, 32
      %v1576 = vpop.permute.xlu0 %1575
      %1577 = vrot.lane.b32.xlu0 %v808, 32
      %v1578 = vpop.permute.xlu0 %1577
      %1611 = vrot.lane.b32.xlu0 %v873, 64
      %v1612 = vpop.permute.xlu0 %1611
      %1613 = vrot.lane.b32.xlu0 %v874, 64
      %v1614 = vpop.permute.xlu0 %1613
      %1615 = vrot.lane.b32.xlu0 %v875, 64
      %v1616 = vpop.permute.xlu0 %1615
      %1617 = vrot.lane.b32.xlu0 %v876, 64
      %v1618 = vpop.permute.xlu0 %1617
      %1619 = vrot.lane.b32.xlu0 %v877, 64
      %v1620 = vpop.permute.xlu0 %1619
      %1621 = vrot.lane.b32.xlu0 %v878, 64
      %v1622 = vpop.permute.xlu0 %1621
      %1623 = vrot.lane.b32.xlu0 %v879, 64
      %v1624 = vpop.permute.xlu0 %1623
      %1625 = vrot.lane.b32.xlu0 %v880, 64
      %v1626 = vpop.permute.xlu0 %1625
      %1627 = vrot.lane.b32.xlu0 %v881, 64
      %v1628 = vpop.permute.xlu0 %1627
      %1629 = vrot.lane.b32.xlu0 %v882, 64
      %v1630 = vpop.permute.xlu0 %1629
      %1631 = vrot.lane.b32.xlu0 %v883, 64
      %v1632 = vpop.permute.xlu0 %1631
      %1633 = vrot.lane.b32.xlu0 %v884, 64
      %v1634 = vpop.permute.xlu0 %1633
      %1635 = vrot.lane.b32.xlu0 %v885, 64
      %v1636 = vpop.permute.xlu0 %1635
      %1637 = vrot.lane.b32.xlu0 %v886, 64
      %v1638 = vpop.permute.xlu0 %1637
      %1639 = vrot.lane.b32.xlu0 %v887, 64
      %v1640 = vpop.permute.xlu0 %1639
      %1641 = vrot.lane.b32.xlu0 %v888, 64
      %v1642 = vpop.permute.xlu0 %1641
      %1643 = vrot.lane.b32.xlu0 %v889, 64
      %v1644 = vpop.permute.xlu0 %1643
      %1645 = vrot.lane.b32.xlu0 %v890, 64
      %v1646 = vpop.permute.xlu0 %1645
      %1647 = vrot.lane.b32.xlu0 %v891, 64
      %v1648 = vpop.permute.xlu0 %1647
      %1649 = vrot.lane.b32.xlu0 %v892, 64
      %v1650 = vpop.permute.xlu0 %1649
      %1651 = vrot.lane.b32.xlu0 %v893, 64
      %v1652 = vpop.permute.xlu0 %1651
      %1653 = vrot.lane.b32.xlu0 %v894, 64
      %v1654 = vpop.permute.xlu0 %1653
      %1655 = vrot.lane.b32.xlu0 %v895, 64
      %v1656 = vpop.permute.xlu0 %1655
      %1657 = vrot.lane.b32.xlu0 %v896, 64
      %v1658 = vpop.permute.xlu0 %1657
      %1659 = vrot.lane.b32.xlu0 %v897, 64
      %v1660 = vpop.permute.xlu0 %1659
      %1661 = vrot.lane.b32.xlu0 %v898, 64
      %v1662 = vpop.permute.xlu0 %1661
      %1663 = vrot.lane.b32.xlu0 %v899, 64
      %v1664 = vpop.permute.xlu0 %1663
      %1665 = vrot.lane.b32.xlu0 %v900, 64
      %v1666 = vpop.permute.xlu0 %1665
      %1667 = vrot.lane.b32.xlu0 %v901, 64
      %v1668 = vpop.permute.xlu0 %1667
      %1669 = vrot.lane.b32.xlu0 %v902, 64
      %v1670 = vpop.permute.xlu0 %1669
      %1671 = vrot.lane.b32.xlu0 %v903, 64
      %v1672 = vpop.permute.xlu0 %1671
      %1673 = vrot.lane.b32.xlu0 %v904, 64
      %v1674 = vpop.permute.xlu0 %1673
      %1707 = vrot.lane.b32.xlu0 %v970, 96
      %v1708 = vpop.permute.xlu0 %1707
      %1709 = vrot.lane.b32.xlu0 %v971, 96
      %v1710 = vpop.permute.xlu0 %1709
      %1711 = vrot.lane.b32.xlu0 %v972, 96
      %v1712 = vpop.permute.xlu0 %1711
      %1713 = vrot.lane.b32.xlu0 %v973, 96
      %v1714 = vpop.permute.xlu0 %1713
      %1715 = vrot.lane.b32.xlu0 %v974, 96
      %v1716 = vpop.permute.xlu0 %1715
      %1717 = vrot.lane.b32.xlu0 %v975, 96
      %v1718 = vpop.permute.xlu0 %1717
      %1719 = vrot.lane.b32.xlu0 %v976, 96
      %v1720 = vpop.permute.xlu0 %1719
      %1721 = vrot.lane.b32.xlu0 %v977, 96
      %v1722 = vpop.permute.xlu0 %1721
      %1723 = vrot.lane.b32.xlu0 %v978, 96
      %v1724 = vpop.permute.xlu0 %1723
      %1725 = vrot.lane.b32.xlu0 %v979, 96
      %v1726 = vpop.permute.xlu0 %1725
      %1727 = vrot.lane.b32.xlu0 %v980, 96
      %v1728 = vpop.permute.xlu0 %1727
      %1729 = vrot.lane.b32.xlu0 %v981, 96
      %v1730 = vpop.permute.xlu0 %1729
      %1731 = vrot.lane.b32.xlu0 %v982, 96
      %v1732 = vpop.permute.xlu0 %1731
      %1733 = vrot.lane.b32.xlu0 %v983, 96
      %v1734 = vpop.permute.xlu0 %1733
      %1735 = vrot.lane.b32.xlu0 %v984, 96
      %v1736 = vpop.permute.xlu0 %1735
      %1737 = vrot.lane.b32.xlu0 %v985, 96
      %v1738 = vpop.permute.xlu0 %1737
      %1739 = vrot.lane.b32.xlu0 %v986, 96
      %v1740 = vpop.permute.xlu0 %1739
      %1741 = vrot.lane.b32.xlu0 %v987, 96
      %v1742 = vpop.permute.xlu0 %1741
      %1743 = vrot.lane.b32.xlu0 %v988, 96
      %v1744 = vpop.permute.xlu0 %1743
      %1745 = vrot.lane.b32.xlu0 %v989, 96
      %v1746 = vpop.permute.xlu0 %1745
      %1747 = vrot.lane.b32.xlu0 %v990, 96
      %v1748 = vpop.permute.xlu0 %1747
      %1749 = vrot.lane.b32.xlu0 %v991, 96
      %v1750 = vpop.permute.xlu0 %1749
      %1751 = vrot.lane.b32.xlu0 %v992, 96
      %v1752 = vpop.permute.xlu0 %1751
      %1753 = vrot.lane.b32.xlu0 %v993, 96
      %v1754 = vpop.permute.xlu0 %1753
      %1755 = vrot.lane.b32.xlu0 %v994, 96
      %v1756 = vpop.permute.xlu0 %1755
      %1757 = vrot.lane.b32.xlu0 %v995, 96
      %v1758 = vpop.permute.xlu0 %1757
      %1759 = vrot.lane.b32.xlu0 %v996, 96
      %v1760 = vpop.permute.xlu0 %1759
      %1761 = vrot.lane.b32.xlu0 %v997, 96
      %v1762 = vpop.permute.xlu0 %1761
      %1763 = vrot.lane.b32.xlu0 %v998, 96
      %v1764 = vpop.permute.xlu0 %1763
      %1765 = vrot.lane.b32.xlu0 %v999, 96
      %v1766 = vpop.permute.xlu0 %1765
      %1767 = vrot.lane.b32.xlu0 %v1000, 96
      %v1768 = vpop.permute.xlu0 %1767
      %1769 = vrot.lane.b32.xlu0 %v1001, 96
      %v1770 = vpop.permute.xlu0 %1769
      %1803 = vrot.lane.b32.xlu0 %v1162, 32
      %v1804 = vpop.permute.xlu0 %1803
      %1805 = vrot.lane.b32.xlu0 %v1163, 32
      %v1806 = vpop.permute.xlu0 %1805
      %1807 = vrot.lane.b32.xlu0 %v1164, 32
      %v1808 = vpop.permute.xlu0 %1807
      %1809 = vrot.lane.b32.xlu0 %v1165, 32
      %v1810 = vpop.permute.xlu0 %1809
      %1811 = vrot.lane.b32.xlu0 %v1166, 32
      %v1812 = vpop.permute.xlu0 %1811
      %1813 = vrot.lane.b32.xlu0 %v1167, 32
      %v1814 = vpop.permute.xlu0 %1813
      %1815 = vrot.lane.b32.xlu0 %v1168, 32
      %v1816 = vpop.permute.xlu0 %1815
      %1817 = vrot.lane.b32.xlu0 %v1169, 32
      %v1818 = vpop.permute.xlu0 %1817
      %1819 = vrot.lane.b32.xlu0 %v1170, 32
      %v1820 = vpop.permute.xlu0 %1819
      %1821 = vrot.lane.b32.xlu0 %v1171, 32
      %v1822 = vpop.permute.xlu0 %1821
      %1823 = vrot.lane.b32.xlu0 %v1172, 32
      %v1824 = vpop.permute.xlu0 %1823
      %1825 = vrot.lane.b32.xlu0 %v1173, 32
      %v1826 = vpop.permute.xlu0 %1825
      %1827 = vrot.lane.b32.xlu0 %v1174, 32
      %v1828 = vpop.permute.xlu0 %1827
      %1829 = vrot.lane.b32.xlu0 %v1175, 32
      %v1830 = vpop.permute.xlu0 %1829
      %1831 = vrot.lane.b32.xlu0 %v1176, 32
      %v1832 = vpop.permute.xlu0 %1831
      %1833 = vrot.lane.b32.xlu0 %v1177, 32
      %v1834 = vpop.permute.xlu0 %1833
      %1835 = vrot.lane.b32.xlu0 %v1178, 32
      %v1836 = vpop.permute.xlu0 %1835
      %1837 = vrot.lane.b32.xlu0 %v1179, 32
      %v1838 = vpop.permute.xlu0 %1837
      %1839 = vrot.lane.b32.xlu0 %v1180, 32
      %v1840 = vpop.permute.xlu0 %1839
      %1841 = vrot.lane.b32.xlu0 %v1181, 32
      %v1842 = vpop.permute.xlu0 %1841
      %1843 = vrot.lane.b32.xlu0 %v1182, 32
      %v1844 = vpop.permute.xlu0 %1843
      %1845 = vrot.lane.b32.xlu0 %v1183, 32
      %v1846 = vpop.permute.xlu0 %1845
      %1847 = vrot.lane.b32.xlu0 %v1184, 32
      %v1848 = vpop.permute.xlu0 %1847
      %1849 = vrot.lane.b32.xlu0 %v1185, 32
      %v1850 = vpop.permute.xlu0 %1849
      %1851 = vrot.lane.b32.xlu0 %v1186, 32
      %v1852 = vpop.permute.xlu0 %1851
      %1853 = vrot.lane.b32.xlu0 %v1187, 32
      %v1854 = vpop.permute.xlu0 %1853
      %1855 = vrot.lane.b32.xlu0 %v1188, 32
      %v1856 = vpop.permute.xlu0 %1855
      %1857 = vrot.lane.b32.xlu0 %v1189, 32
      %v1858 = vpop.permute.xlu0 %1857
      %1859 = vrot.lane.b32.xlu0 %v1190, 32
      %v1860 = vpop.permute.xlu0 %1859
      %1861 = vrot.lane.b32.xlu0 %v1191, 32
      %v1862 = vpop.permute.xlu0 %1861
      %1863 = vrot.lane.b32.xlu0 %v1192, 32
      %v1864 = vpop.permute.xlu0 %1863
      %1865 = vrot.lane.b32.xlu0 %v1193, 32
      %v1866 = vpop.permute.xlu0 %1865
      %1899 = vrot.lane.b32.xlu0 %v1259, 64
      %v1900 = vpop.permute.xlu0 %1899
      %1901 = vrot.lane.b32.xlu0 %v1260, 64
      %v1902 = vpop.permute.xlu0 %1901
      %1903 = vrot.lane.b32.xlu0 %v1261, 64
      %v1904 = vpop.permute.xlu0 %1903
      %1905 = vrot.lane.b32.xlu0 %v1262, 64
      %v1906 = vpop.permute.xlu0 %1905
      %1907 = vrot.lane.b32.xlu0 %v1263, 64
      %v1908 = vpop.permute.xlu0 %1907
      %1909 = vrot.lane.b32.xlu0 %v1264, 64
      %v1910 = vpop.permute.xlu0 %1909
      %1911 = vrot.lane.b32.xlu0 %v1265, 64
      %v1912 = vpop.permute.xlu0 %1911
      %1913 = vrot.lane.b32.xlu0 %v1266, 64
      %v1914 = vpop.permute.xlu0 %1913
      %1915 = vrot.lane.b32.xlu0 %v1267, 64
      %v1916 = vpop.permute.xlu0 %1915
      %1917 = vrot.lane.b32.xlu0 %v1268, 64
      %v1918 = vpop.permute.xlu0 %1917
      %1919 = vrot.lane.b32.xlu0 %v1269, 64
      %v1920 = vpop.permute.xlu0 %1919
      %1921 = vrot.lane.b32.xlu0 %v1270, 64
      %v1922 = vpop.permute.xlu0 %1921
      %1923 = vrot.lane.b32.xlu0 %v1271, 64
      %v1924 = vpop.permute.xlu0 %1923
      %1925 = vrot.lane.b32.xlu0 %v1272, 64
      %v1926 = vpop.permute.xlu0 %1925
      %1927 = vrot.lane.b32.xlu0 %v1273, 64
      %v1928 = vpop.permute.xlu0 %1927
      %1929 = vrot.lane.b32.xlu0 %v1274, 64
      %v1930 = vpop.permute.xlu0 %1929
      %1931 = vrot.lane.b32.xlu0 %v1275, 64
      %v1932 = vpop.permute.xlu0 %1931
      %1933 = vrot.lane.b32.xlu0 %v1276, 64
      %v1934 = vpop.permute.xlu0 %1933
      %1935 = vrot.lane.b32.xlu0 %v1277, 64
      %v1936 = vpop.permute.xlu0 %1935
      %1937 = vrot.lane.b32.xlu0 %v1278, 64
      %v1938 = vpop.permute.xlu0 %1937
      %1939 = vrot.lane.b32.xlu0 %v1279, 64
      %v1940 = vpop.permute.xlu0 %1939
      %1941 = vrot.lane.b32.xlu0 %v1280, 64
      %v1942 = vpop.permute.xlu0 %1941
      %1943 = vrot.lane.b32.xlu0 %v1281, 64
      %v1944 = vpop.permute.xlu0 %1943
      %1945 = vrot.lane.b32.xlu0 %v1282, 64
      %v1946 = vpop.permute.xlu0 %1945
      %1947 = vrot.lane.b32.xlu0 %v1283, 64
      %v1948 = vpop.permute.xlu0 %1947
      %1949 = vrot.lane.b32.xlu0 %v1284, 64
      %v1950 = vpop.permute.xlu0 %1949
      %1951 = vrot.lane.b32.xlu0 %v1285, 64
      %v1952 = vpop.permute.xlu0 %1951
      %1953 = vrot.lane.b32.xlu0 %v1286, 64
      %v1954 = vpop.permute.xlu0 %1953
      %1955 = vrot.lane.b32.xlu0 %v1287, 64
      %v1956 = vpop.permute.xlu0 %1955
      %1957 = vrot.lane.b32.xlu0 %v1288, 64
      %v1958 = vpop.permute.xlu0 %1957
      %1959 = vrot.lane.b32.xlu0 %v1289, 64
      %v1960 = vpop.permute.xlu0 %1959
      %1961 = vrot.lane.b32.xlu0 %v1290, 64
      %v1962 = vpop.permute.xlu0 %1961
      %1995 = vrot.lane.b32.xlu0 %v1355, 96
      %v1996 = vpop.permute.xlu0 %1995
      %1997 = vrot.lane.b32.xlu0 %v1356, 96
      %v1998 = vpop.permute.xlu0 %1997
      %1999 = vrot.lane.b32.xlu0 %v1357, 96
      %v2000 = vpop.permute.xlu0 %1999
      %2001 = vrot.lane.b32.xlu0 %v1358, 96
      %v2002 = vpop.permute.xlu0 %2001
      %2003 = vrot.lane.b32.xlu0 %v1359, 96
      %v2004 = vpop.permute.xlu0 %2003
      %2005 = vrot.lane.b32.xlu0 %v1360, 96
      %v2006 = vpop.permute.xlu0 %2005
      %2007 = vrot.lane.b32.xlu0 %v1361, 96
      %v2008 = vpop.permute.xlu0 %2007
      %2009 = vrot.lane.b32.xlu0 %v1362, 96
      %v2010 = vpop.permute.xlu0 %2009
      %2011 = vrot.lane.b32.xlu0 %v1363, 96
      %v2012 = vpop.permute.xlu0 %2011
      %2013 = vrot.lane.b32.xlu0 %v1364, 96
      %v2014 = vpop.permute.xlu0 %2013
      %2015 = vrot.lane.b32.xlu0 %v1365, 96
      %v2016 = vpop.permute.xlu0 %2015
      %2017 = vrot.lane.b32.xlu0 %v1366, 96
      %v2018 = vpop.permute.xlu0 %2017
      %2019 = vrot.lane.b32.xlu0 %v1367, 96
      %v2020 = vpop.permute.xlu0 %2019
      %2021 = vrot.lane.b32.xlu0 %v1368, 96
      %v2022 = vpop.permute.xlu0 %2021
      %2023 = vrot.lane.b32.xlu0 %v1369, 96
      %v2024 = vpop.permute.xlu0 %2023
      %2025 = vrot.lane.b32.xlu0 %v1370, 96
      %v2026 = vpop.permute.xlu0 %2025
      %2027 = vrot.lane.b32.xlu0 %v1371, 96
      %v2028 = vpop.permute.xlu0 %2027
      %2029 = vrot.lane.b32.xlu0 %v1372, 96
      %v2030 = vpop.permute.xlu0 %2029
      %2031 = vrot.lane.b32.xlu0 %v1373, 96
      %v2032 = vpop.permute.xlu0 %2031
      %2033 = vrot.lane.b32.xlu0 %v1374, 96
      %v2034 = vpop.permute.xlu0 %2033
      %2035 = vrot.lane.b32.xlu0 %v1375, 96
      %v2036 = vpop.permute.xlu0 %2035
      %2037 = vrot.lane.b32.xlu0 %v1376, 96
      %v2038 = vpop.permute.xlu0 %2037
      %2039 = vrot.lane.b32.xlu0 %v1377, 96
      %v2040 = vpop.permute.xlu0 %2039
      %2041 = vrot.lane.b32.xlu0 %v1378, 96
      %v2042 = vpop.permute.xlu0 %2041
      %2043 = vrot.lane.b32.xlu0 %v1379, 96
      %v2044 = vpop.permute.xlu0 %2043
      %2045 = vrot.lane.b32.xlu0 %v1380, 96
      %v2046 = vpop.permute.xlu0 %2045
      %2047 = vrot.lane.b32.xlu0 %v1381, 96
      %v2048 = vpop.permute.xlu0 %2047
      %2049 = vrot.lane.b32.xlu0 %v1382, 96
      %v2050 = vpop.permute.xlu0 %2049
      %2051 = vrot.lane.b32.xlu0 %v1383, 96
      %v2052 = vpop.permute.xlu0 %2051
      %2053 = vrot.lane.b32.xlu0 %v1384, 96
      %v2054 = vpop.permute.xlu0 %2053
      %2055 = vrot.lane.b32.xlu0 %v1385, 96
      %v2056 = vpop.permute.xlu0 %2055
      %2057 = vrot.lane.b32.xlu0 %v1386, 96
      %v2058 = vpop.permute.xlu0 %2057
      %vm2059 = vcmask 261120
      %v2062 = vsel %vm2059, %v681, %v1516
      %v2065 = vsel %vm2059, %v682, %v1518
      %v2068 = vsel %vm2059, %v683, %v1520
      %v2071 = vsel %vm2059, %v684, %v1522
      %v2074 = vsel %vm2059, %v685, %v1524
      %v2077 = vsel %vm2059, %v686, %v1526
      %v2080 = vsel %vm2059, %v687, %v1528
      %v2083 = vsel %vm2059, %v688, %v1530
      %v2086 = vsel %vm2059, %v689, %v1532
      %v2089 = vsel %vm2059, %v690, %v1534
      %v2092 = vsel %vm2059, %v691, %v1536
      %v2095 = vsel %vm2059, %v692, %v1538
      %v2098 = vsel %vm2059, %v693, %v1540
      %v2101 = vsel %vm2059, %v694, %v1542
      %v2104 = vsel %vm2059, %v695, %v1544
      %v2107 = vsel %vm2059, %v696, %v1546
      %v2110 = vsel %vm2059, %v697, %v1548
      %v2113 = vsel %vm2059, %v698, %v1550
      %v2116 = vsel %vm2059, %v699, %v1552
      %v2119 = vsel %vm2059, %v700, %v1554
      %v2122 = vsel %vm2059, %v701, %v1556
      %v2125 = vsel %vm2059, %v702, %v1558
      %v2128 = vsel %vm2059, %v703, %v1560
      %v2131 = vsel %vm2059, %v704, %v1562
      %v2134 = vsel %vm2059, %v705, %v1564
      %v2137 = vsel %vm2059, %v706, %v1566
      %v2140 = vsel %vm2059, %v707, %v1568
      %v2143 = vsel %vm2059, %v708, %v1570
      %v2146 = vsel %vm2059, %v709, %v1572
      %v2149 = vsel %vm2059, %v710, %v1574
      %v2152 = vsel %vm2059, %v711, %v1576
      %v2155 = vsel %vm2059, %v712, %v1578
      %vm2156 = vcmask 523264
      %v2158 = vsel %vm2156, %v2062, %v1612
      %v2160 = vsel %vm2156, %v2065, %v1614
      %v2162 = vsel %vm2156, %v2068, %v1616
      %v2164 = vsel %vm2156, %v2071, %v1618
      %v2166 = vsel %vm2156, %v2074, %v1620
      %v2168 = vsel %vm2156, %v2077, %v1622
      %v2170 = vsel %vm2156, %v2080, %v1624
      %v2172 = vsel %vm2156, %v2083, %v1626
      %v2174 = vsel %vm2156, %v2086, %v1628
      %v2176 = vsel %vm2156, %v2089, %v1630
      %v2178 = vsel %vm2156, %v2092, %v1632
      %v2180 = vsel %vm2156, %v2095, %v1634
      %v2182 = vsel %vm2156, %v2098, %v1636
      %v2184 = vsel %vm2156, %v2101, %v1638
      %v2186 = vsel %vm2156, %v2104, %v1640
      %v2188 = vsel %vm2156, %v2107, %v1642
      %v2190 = vsel %vm2156, %v2110, %v1644
      %v2192 = vsel %vm2156, %v2113, %v1646
      %v2194 = vsel %vm2156, %v2116, %v1648
      %v2196 = vsel %vm2156, %v2119, %v1650
      %v2198 = vsel %vm2156, %v2122, %v1652
      %v2200 = vsel %vm2156, %v2125, %v1654
      %v2202 = vsel %vm2156, %v2128, %v1656
      %v2204 = vsel %vm2156, %v2131, %v1658
      %v2206 = vsel %vm2156, %v2134, %v1660
      %v2208 = vsel %vm2156, %v2137, %v1662
      %v2210 = vsel %vm2156, %v2140, %v1664
      %v2212 = vsel %vm2156, %v2143, %v1666
      %v2214 = vsel %vm2156, %v2146, %v1668
      %v2216 = vsel %vm2156, %v2149, %v1670
      %v2218 = vsel %vm2156, %v2152, %v1672
      %v2220 = vsel %vm2156, %v2155, %v1674
      %vm2221 = vcmask 785408
      %v2223 = vsel %vm2221, %v2158, %v1708
      %v2226 = vsel %vm2221, %v2160, %v1710
      %v2229 = vsel %vm2221, %v2162, %v1712
      %v2232 = vsel %vm2221, %v2164, %v1714
      %v2235 = vsel %vm2221, %v2166, %v1716
      %v2238 = vsel %vm2221, %v2168, %v1718
      %v2241 = vsel %vm2221, %v2170, %v1720
      %v2244 = vsel %vm2221, %v2172, %v1722
      %v2247 = vsel %vm2221, %v2174, %v1724
      %v2250 = vsel %vm2221, %v2176, %v1726
      %v2253 = vsel %vm2221, %v2178, %v1728
      %v2256 = vsel %vm2221, %v2180, %v1730
      %v2259 = vsel %vm2221, %v2182, %v1732
      %v2262 = vsel %vm2221, %v2184, %v1734
      %v2265 = vsel %vm2221, %v2186, %v1736
      %v2268 = vsel %vm2221, %v2188, %v1738
      %v2271 = vsel %vm2221, %v2190, %v1740
      %v2274 = vsel %vm2221, %v2192, %v1742
      %v2277 = vsel %vm2221, %v2194, %v1744
      %v2280 = vsel %vm2221, %v2196, %v1746
      %v2283 = vsel %vm2221, %v2198, %v1748
      %v2286 = vsel %vm2221, %v2200, %v1750
      %v2289 = vsel %vm2221, %v2202, %v1752
      %v2292 = vsel %vm2221, %v2204, %v1754
      %v2295 = vsel %vm2221, %v2206, %v1756
      %v2298 = vsel %vm2221, %v2208, %v1758
      %v2301 = vsel %vm2221, %v2210, %v1760
      %v2304 = vsel %vm2221, %v2212, %v1762
      %v2307 = vsel %vm2221, %v2214, %v1764
      %v2310 = vsel %vm2221, %v2216, %v1766
      %v2313 = vsel %vm2221, %v2218, %v1768
      %v2316 = vsel %vm2221, %v2220, %v1770
      %v2320 = vsel %vm2059, %v1066, %v1804
      %v2323 = vsel %vm2059, %v1067, %v1806
      %v2326 = vsel %vm2059, %v1068, %v1808
      %v2329 = vsel %vm2059, %v1069, %v1810
      %v2332 = vsel %vm2059, %v1070, %v1812
      %v2335 = vsel %vm2059, %v1071, %v1814
      %v2338 = vsel %vm2059, %v1072, %v1816
      %v2341 = vsel %vm2059, %v1073, %v1818
      %v2344 = vsel %vm2059, %v1074, %v1820
      %v2347 = vsel %vm2059, %v1075, %v1822
      %v2350 = vsel %vm2059, %v1076, %v1824
      %v2353 = vsel %vm2059, %v1077, %v1826
      %v2356 = vsel %vm2059, %v1078, %v1828
      %v2359 = vsel %vm2059, %v1079, %v1830
      %v2362 = vsel %vm2059, %v1080, %v1832
      %v2365 = vsel %vm2059, %v1081, %v1834
      %v2368 = vsel %vm2059, %v1082, %v1836
      %v2371 = vsel %vm2059, %v1083, %v1838
      %v2374 = vsel %vm2059, %v1084, %v1840
      %v2377 = vsel %vm2059, %v1085, %v1842
      %v2380 = vsel %vm2059, %v1086, %v1844
      %v2383 = vsel %vm2059, %v1087, %v1846
      %v2386 = vsel %vm2059, %v1088, %v1848
      %v2389 = vsel %vm2059, %v1089, %v1850
      %v2392 = vsel %vm2059, %v1090, %v1852
      %v2395 = vsel %vm2059, %v1091, %v1854
      %v2398 = vsel %vm2059, %v1092, %v1856
      %v2401 = vsel %vm2059, %v1093, %v1858
      %v2404 = vsel %vm2059, %v1094, %v1860
      %v2407 = vsel %vm2059, %v1095, %v1862
      %v2410 = vsel %vm2059, %v1096, %v1864
      %v2413 = vsel %vm2059, %v1097, %v1866
      %v2415 = vsel %vm2156, %v2320, %v1900
      %v2417 = vsel %vm2156, %v2323, %v1902
      %v2419 = vsel %vm2156, %v2326, %v1904
      %v2421 = vsel %vm2156, %v2329, %v1906
      %v2423 = vsel %vm2156, %v2332, %v1908
      %v2425 = vsel %vm2156, %v2335, %v1910
      %v2427 = vsel %vm2156, %v2338, %v1912
      %v2429 = vsel %vm2156, %v2341, %v1914
      %v2431 = vsel %vm2156, %v2344, %v1916
      %v2433 = vsel %vm2156, %v2347, %v1918
      %v2435 = vsel %vm2156, %v2350, %v1920
      %v2437 = vsel %vm2156, %v2353, %v1922
      %v2439 = vsel %vm2156, %v2356, %v1924
      %v2441 = vsel %vm2156, %v2359, %v1926
      %v2443 = vsel %vm2156, %v2362, %v1928
      %v2445 = vsel %vm2156, %v2365, %v1930
      %v2447 = vsel %vm2156, %v2368, %v1932
      %v2449 = vsel %vm2156, %v2371, %v1934
      %v2451 = vsel %vm2156, %v2374, %v1936
      %v2453 = vsel %vm2156, %v2377, %v1938
      %v2455 = vsel %vm2156, %v2380, %v1940
      %v2457 = vsel %vm2156, %v2383, %v1942
      %v2459 = vsel %vm2156, %v2386, %v1944
      %v2461 = vsel %vm2156, %v2389, %v1946
      %v2463 = vsel %vm2156, %v2392, %v1948
      %v2465 = vsel %vm2156, %v2395, %v1950
      %v2467 = vsel %vm2156, %v2398, %v1952
      %v2469 = vsel %vm2156, %v2401, %v1954
      %v2471 = vsel %vm2156, %v2404, %v1956
      %v2473 = vsel %vm2156, %v2407, %v1958
      %v2475 = vsel %vm2156, %v2410, %v1960
      %v2477 = vsel %vm2156, %v2413, %v1962
      %v2479 = vsel %vm2221, %v2415, %v1996
      %v2482 = vsel %vm2221, %v2417, %v1998
      %v2485 = vsel %vm2221, %v2419, %v2000
      %v2488 = vsel %vm2221, %v2421, %v2002
      %v2491 = vsel %vm2221, %v2423, %v2004
      %v2494 = vsel %vm2221, %v2425, %v2006
      %v2497 = vsel %vm2221, %v2427, %v2008
      %v2500 = vsel %vm2221, %v2429, %v2010
      %v2503 = vsel %vm2221, %v2431, %v2012
      %v2506 = vsel %vm2221, %v2433, %v2014
      %v2509 = vsel %vm2221, %v2435, %v2016
      %v2512 = vsel %vm2221, %v2437, %v2018
      %v2515 = vsel %vm2221, %v2439, %v2020
      %v2518 = vsel %vm2221, %v2441, %v2022
      %v2521 = vsel %vm2221, %v2443, %v2024
      %v2524 = vsel %vm2221, %v2445, %v2026
      %v2527 = vsel %vm2221, %v2447, %v2028
      %v2530 = vsel %vm2221, %v2449, %v2030
      %v2533 = vsel %vm2221, %v2451, %v2032
      %v2536 = vsel %vm2221, %v2453, %v2034
      %v2539 = vsel %vm2221, %v2455, %v2036
      %v2542 = vsel %vm2221, %v2457, %v2038
      %v2545 = vsel %vm2221, %v2459, %v2040
      %v2548 = vsel %vm2221, %v2461, %v2042
      %v2551 = vsel %vm2221, %v2463, %v2044
      %v2554 = vsel %vm2221, %v2465, %v2046
      %v2557 = vsel %vm2221, %v2467, %v2048
      %v2560 = vsel %vm2221, %v2469, %v2050
      %v2563 = vsel %vm2221, %v2471, %v2052
      %v2566 = vsel %vm2221, %v2473, %v2054
      %v2569 = vsel %vm2221, %v2475, %v2056
      %v2572 = vsel %vm2221, %v2477, %v2058
      %p2574 = scmp.lt.s32.totalorder %s23, 4
      // Predicated region
      $region45: #{_lambda_.1} parent=39 // pred_check
        %p2575 = pneg %p2574
      $region46: #{_lambda_.1} parent=39 // pred_check_branch
        %2577 = sbr.rel (%p2575) target = $region48
      $region47: #{_lambda_.1} parent=39 // pred_region
        %p2578 = scmp.lt.s32.totalorder %s23, 3
        %s2579 = scalar_select %p2578, %s23, 3
        %s2580 = smul.u32 %s2579, 36
        %s2581 = smul.addr %s2580, 4
        %s2582 = scalar_lea.vmem %s1, %s2581
        %v2583 = vld [vmem:[%s2582] sm:$0xf]
        %v2584 = vld [vmem:[%s2582 + $0x4] sm:$0xf]
        %v2585 = vld [vmem:[%s2582 + $0x8] sm:$0xf]
        %v2586 = vld [vmem:[%s2582 + $0xc] sm:$0xf]
        %v2587 = vld [vmem:[%s2582 + $0x10] sm:$0xf]
        %v2588 = vld [vmem:[%s2582 + $0x14] sm:$0xf]
        %v2589 = vld [vmem:[%s2582 + $0x18] sm:$0xf]
        %v2590 = vld [vmem:[%s2582 + $0x1c] sm:$0xf]
        %v2591 = vld [vmem:[%s2582 + $0x20] sm:$0xf]
        %v2592 = vld [vmem:[%s2582 + $0x24] sm:$0xf]
        %v2593 = vld [vmem:[%s2582 + $0x28] sm:$0xf]
        %v2594 = vld [vmem:[%s2582 + $0x2c] sm:$0xf]
        %v2595 = vld [vmem:[%s2582 + $0x30] sm:$0xf]
        %v2596 = vld [vmem:[%s2582 + $0x34] sm:$0xf]
        %v2597 = vld [vmem:[%s2582 + $0x38] sm:$0xf]
        %v2598 = vld [vmem:[%s2582 + $0x3c] sm:$0xf]
        %v2599 = vld [vmem:[%s2582 + $0x40] sm:$0xf]
        %v2600 = vld [vmem:[%s2582 + $0x44] sm:$0xf]
        %v2601 = vld [vmem:[%s2582 + $0x48] sm:$0xf]
        %v2602 = vld [vmem:[%s2582 + $0x4c] sm:$0xf]
        %v2603 = vld [vmem:[%s2582 + $0x50] sm:$0xf]
        %v2604 = vld [vmem:[%s2582 + $0x54] sm:$0xf]
        %v2605 = vld [vmem:[%s2582 + $0x58] sm:$0xf]
        %v2606 = vld [vmem:[%s2582 + $0x5c] sm:$0xf]
        %v2607 = vld [vmem:[%s2582 + $0x60] sm:$0xf]
        %v2608 = vld [vmem:[%s2582 + $0x64] sm:$0xf]
        %v2609 = vld [vmem:[%s2582 + $0x68] sm:$0xf]
        %v2610 = vld [vmem:[%s2582 + $0x6c] sm:$0xf]
        %v2611 = vld [vmem:[%s2582 + $0x70] sm:$0xf]
        %v2612 = vld [vmem:[%s2582 + $0x74] sm:$0xf]
        %v2613 = vld [vmem:[%s2582 + $0x78] sm:$0xf]
        %v2614 = vld [vmem:[%s2582 + $0x7c] sm:$0xf]
        %v2615 = vld [vmem:[%s2582 + $0x80] sm:$0xf]
        %v2616 = vld [vmem:[%s2582 + $0x84] sm:$0xf]
        %v2617 = vld [vmem:[%s2582 + $0x88] sm:$0xf]
        %v2618 = vld [vmem:[%s2582 + $0x8c] sm:$0xf]
        %s2619 = scalar_lea.vmem %s2, %s2579
        %v2620 = vld [vmem:[%s2619] sm:$0x1]
        %v2622 = vlaneseq
        %v2623 = vshrl.u32 %v2622, 7
        %v2624 = vsub.s32 0, %v2623
        %v2625 = vrot.slane %v2620, %v2624
        %v2663 = vunpack.c.l.b16 %v2583
        %v2664 = vunpack.c.l.b16 %v2584
        %v2665 = vunpack.c.l.b16 %v2585
        %v2666 = vunpack.c.l.b16 %v2586
        %v2667 = vunpack.c.l.b16 %v2587
        %v2668 = vunpack.c.l.b16 %v2588
        %v2669 = vunpack.c.l.b16 %v2589
        %v2670 = vunpack.c.l.b16 %v2590
        %v2671 = vunpack.c.l.b16 %v2591
        %v2672 = vunpack.c.l.b16 %v2592
        %v2673 = vunpack.c.l.b16 %v2593
        %v2674 = vunpack.c.l.b16 %v2594
        %v2675 = vunpack.c.l.b16 %v2595
        %v2676 = vunpack.c.l.b16 %v2596
        %v2677 = vunpack.c.l.b16 %v2597
        %v2678 = vunpack.c.l.b16 %v2598
        %v2679 = vunpack.c.l.b16 %v2599
        %v2680 = vunpack.c.l.b16 %v2600
        %v2681 = vunpack.c.l.b16 %v2601
        %v2682 = vunpack.c.l.b16 %v2602
        %v2683 = vunpack.c.l.b16 %v2603
        %v2684 = vunpack.c.l.b16 %v2604
        %v2685 = vunpack.c.l.b16 %v2605
        %v2686 = vunpack.c.l.b16 %v2606
        %v2687 = vunpack.c.l.b16 %v2607
        %v2688 = vunpack.c.l.b16 %v2608
        %v2689 = vunpack.c.l.b16 %v2609
        %v2690 = vunpack.c.l.b16 %v2610
        %v2691 = vunpack.c.l.b16 %v2611
        %v2692 = vunpack.c.l.b16 %v2612
        %v2693 = vunpack.c.l.b16 %v2613
        %v2694 = vunpack.c.l.b16 %v2614
        %v2695 = vunpack.c.l.b16 %v2615
        %v2696 = vunpack.c.l.b16 %v2616
        %v2697 = vunpack.c.l.b16 %v2617
        %v2698 = vunpack.c.l.b16 %v2618
        %v2699 = vpack.c.b16 %v2664, %v2663
        %v2700 = vpack.c.b16 %v2666, %v2665
        %v2701 = vpack.c.b16 %v2668, %v2667
        %v2702 = vpack.c.b16 %v2670, %v2669
        %v2703 = vpack.c.b16 %v2672, %v2671
        %v2704 = vpack.c.b16 %v2674, %v2673
        %v2705 = vpack.c.b16 %v2676, %v2675
        %v2706 = vpack.c.b16 %v2678, %v2677
        %v2707 = vpack.c.b16 %v2680, %v2679
        %v2708 = vpack.c.b16 %v2682, %v2681
        %v2709 = vpack.c.b16 %v2684, %v2683
        %v2710 = vpack.c.b16 %v2686, %v2685
        %v2711 = vpack.c.b16 %v2688, %v2687
        %v2712 = vpack.c.b16 %v2690, %v2689
        %v2713 = vpack.c.b16 %v2692, %v2691
        %v2714 = vpack.c.b16 %v2694, %v2693
        %v2715 = vpack.c.b16 %v2696, %v2695
        %v2716 = vpack.c.b16 %v2698, %v2697
        %v2736 = vsel %vm2059, %v1451, 0
        %v2739 = vsel %vm2059, %v1452, 0
        %v2742 = vsel %vm2059, %v1453, 0
        %v2745 = vsel %vm2059, %v1454, 0
        %v2748 = vsel %vm2059, %v1455, 0
        %v2751 = vsel %vm2059, %v1456, 0
        %v2754 = vsel %vm2059, %v1457, 0
        %v2757 = vsel %vm2059, %v1458, 0
        %v2760 = vsel %vm2059, %v1459, 0
        %v2763 = vsel %vm2059, %v1460, 0
        %v2766 = vsel %vm2059, %v1461, 0
        %v2769 = vsel %vm2059, %v1462, 0
        %v2772 = vsel %vm2059, %v1463, 0
        %v2775 = vsel %vm2059, %v1464, 0
        %v2778 = vsel %vm2059, %v1465, 0
        %v2781 = vsel %vm2059, %v1466, 0
        %v2784 = vsel %vm2059, %v1467, 0
        %v2787 = vsel %vm2059, %v1468, 0
        %v2790 = vsel %vm2059, %v1469, 0
        %v2793 = vsel %vm2059, %v1470, 0
        %v2796 = vsel %vm2059, %v1471, 0
        %v2799 = vsel %vm2059, %v1472, 0
        %v2802 = vsel %vm2059, %v1473, 0
        %v2805 = vsel %vm2059, %v1474, 0
        %v2808 = vsel %vm2059, %v1475, 0
        %v2811 = vsel %vm2059, %v1476, 0
        %v2814 = vsel %vm2059, %v1477, 0
        %v2817 = vsel %vm2059, %v1478, 0
        %v2820 = vsel %vm2059, %v1479, 0
        %v2823 = vsel %vm2059, %v1480, 0
        %v2826 = vsel %vm2059, %v1481, 0
        %v2829 = vsel %vm2059, %v1482, 0
        %2831 = vmatprep.subr.bf16.mxu0 0
        %2832 = vmatpush1.bf16.msra.mxu0 %v2699
        %2833 = vmatprep.subr.bf16.mxu0 0
        %2834 = vmatpush1.bf16.msra.mxu0 %v2700
        %2835 = vmatprep.subr.bf16.mxu0 0
        %2836 = vmatpush1.bf16.msra.mxu0 %v2701
        %2837 = vmatprep.subr.bf16.mxu0 0
        %2838 = vmatpush1.bf16.msra.mxu0 %v2702
        %2839 = vmatprep.subr.bf16.mxu0 0
        %2840 = vmatpush1.bf16.msra.mxu0 %v2703
        %2841 = vmatprep.subr.bf16.mxu0 0
        %2842 = vmatpush1.bf16.msra.mxu0 %v2704
        %2843 = vmatprep.subr.bf16.mxu0 0
        %2844 = vmatpush1.bf16.msra.mxu0 %v2705
        %2845 = vmatprep.subr.bf16.mxu0 0
        %2846 = vmatpush1.bf16.msra.mxu0 %v2706
        %2847 = vmatprep.subr.bf16.mxu0 0
        %2848 = vmatpush1.bf16.msra.mxu0 %v2707
        %2849 = vmatprep.subr.bf16.mxu0 0
        %2850 = vmatpush1.bf16.msra.mxu0 %v2708
        %2851 = vmatprep.subr.bf16.mxu0 0
        %2852 = vmatpush1.bf16.msra.mxu0 %v2709
        %2853 = vmatprep.subr.bf16.mxu0 0
        %2854 = vmatpush1.bf16.msra.mxu0 %v2710
        %2855 = vmatprep.subr.bf16.mxu0 0
        %2856 = vmatpush1.bf16.msra.mxu0 %v2711
        %2857 = vmatprep.subr.bf16.mxu0 0
        %2858 = vmatpush1.bf16.msra.mxu0 %v2712
        %2859 = vmatprep.subr.bf16.mxu0 0
        %2860 = vmatpush1.bf16.msra.mxu0 %v2713
        %2861 = vmatprep.subr.bf16.mxu0 0
        %2862 = vmatpush1.bf16.msra.mxu0 %v2714
        %2863 = vmatprep.mubr.bf16.mxu0 %v2479
        %2864 = vmatmul.mubr.bf16.gmra.mrb[0].mxu0 %v2223
        %v2865 = vpop.f32.mrb[0].mxu0
        %v2866 = vadd.f32 %v2625, %v2865
        %v2867 = vpop.f32.mrb[0].mxu0
        %v2868 = vpop.f32.mrb[0].mxu0
        %v2869 = vadd.f32 %v2625, %v2868
        %v2870 = vpop.f32.mrb[0].mxu0
        %2871 = vmatprep.mubr.bf16.mxu0 %v2482
        %2872 = vmatmul.mubr.bf16.gmra.mrb[0].mxu0 %v2226
        %v2873 = vpop.f32.mrb[0].mxu0
        %v2874 = vadd.f32 %v2625, %v2873
        %v2875 = vpop.f32.mrb[0].mxu0
        %v2876 = vpop.f32.mrb[0].mxu0
        %v2877 = vadd.f32 %v2625, %v2876
        %v2878 = vpop.f32.mrb[0].mxu0
        %2879 = vmatprep.mubr.bf16.mxu0 %v2485
        %2880 = vmatmul.mubr.bf16.gmra.mrb[0].mxu0 %v2229
        %v2881 = vpop.f32.mrb[0].mxu0
        %v2882 = vadd.f32 %v2625, %v2881
        %v2883 = vpop.f32.mrb[0].mxu0
        %v2884 = vpop.f32.mrb[0].mxu0
        %v2885 = vadd.f32 %v2625, %v2884
        %v2886 = vpop.f32.mrb[0].mxu0
        %2887 = vmatprep.mubr.bf16.mxu0 %v2488
        %2888 = vmatmul.mubr.bf16.gmra.mrb[0].mxu0 %v2232
        %v2889 = vpop.f32.mrb[0].mxu0
        %v2890 = vadd.f32 %v2625, %v2889
        %v2891 = vpop.f32.mrb[0].mxu0
        %v2892 = vpop.f32.mrb[0].mxu0
        %v2893 = vadd.f32 %v2625, %v2892
        %v2894 = vpop.f32.mrb[0].mxu0
        %2895 = vmatprep.mubr.bf16.mxu0 %v2491
        %2896 = vmatmul.mubr.bf16.gmra.mrb[0].mxu0 %v2235
        %v2897 = vpop.f32.mrb[0].mxu0
        %v2898 = vadd.f32 %v2625, %v2897
        %v2899 = vpop.f32.mrb[0].mxu0
        %v2900 = vpop.f32.mrb[0].mxu0
        %v2901 = vadd.f32 %v2625, %v2900
        %v2902 = vpop.f32.mrb[0].mxu0
        %2903 = vmatprep.mubr.bf16.mxu0 %v2494
        %2904 = vmatmul.mubr.bf16.gmra.mrb[0].mxu0 %v2238
        %v2905 = vpop.f32.mrb[0].mxu0
        %v2906 = vadd.f32 %v2625, %v2905
        %v2907 = vpop.f32.mrb[0].mxu0
        %v2908 = vpop.f32.mrb[0].mxu0
        %v2909 = vadd.f32 %v2625, %v2908
        %v2910 = vpop.f32.mrb[0].mxu0
        %2911 = vmatprep.mubr.bf16.mxu0 %v2497
        %2912 = vmatmul.mubr.bf16.gmra.mrb[0].mxu0 %v2241
        %v2913 = vpop.f32.mrb[0].mxu0
        %v2914 = vadd.f32 %v2625, %v2913
        %v2915 = vpop.f32.mrb[0].mxu0
        %v2916 = vpop.f32.mrb[0].mxu0
        %v2917 = vadd.f32 %v2625, %v2916
        %v2918 = vpop.f32.mrb[0].mxu0
        %2919 = vmatprep.mubr.bf16.mxu0 %v2500
        %2920 = vmatmul.mubr.bf16.gmra.mrb[0].mxu0 %v2244
        %v2921 = vpop.f32.mrb[0].mxu0
        %v2922 = vadd.f32 %v2625, %v2921
        %v2923 = vpop.f32.mrb[0].mxu0
        %v2924 = vpop.f32.mrb[0].mxu0
        %v2925 = vadd.f32 %v2625, %v2924
        %v2926 = vpop.f32.mrb[0].mxu0
        %2927 = vmatprep.mubr.bf16.mxu0 %v2503
        %2928 = vmatmul.mubr.bf16.gmra.mrb[0].mxu0 %v2247
        %v2929 = vpop.f32.mrb[0].mxu0
        %v2930 = vadd.f32 %v2625, %v2929
        %v2931 = vpop.f32.mrb[0].mxu0
        %v2932 = vpop.f32.mrb[0].mxu0
        %v2933 = vadd.f32 %v2625, %v2932
        %v2934 = vpop.f32.mrb[0].mxu0
        %2935 = vmatprep.mubr.bf16.mxu0 %v2506
        %2936 = vmatmul.mubr.bf16.gmra.mrb[0].mxu0 %v2250
        %v2937 = vpop.f32.mrb[0].mxu0
        %v2938 = vadd.f32 %v2625, %v2937
        %v2939 = vpop.f32.mrb[0].mxu0
        %v2940 = vpop.f32.mrb[0].mxu0
        %v2941 = vadd.f32 %v2625, %v2940
        %v2942 = vpop.f32.mrb[0].mxu0
        %2943 = vmatprep.mubr.bf16.mxu0 %v2509
        %2944 = vmatmul.mubr.bf16.gmra.mrb[0].mxu0 %v2253
        %v2945 = vpop.f32.mrb[0].mxu0
        %v2946 = vadd.f32 %v2625, %v2945
        %v2947 = vpop.f32.mrb[0].mxu0
        %v2948 = vpop.f32.mrb[0].mxu0
        %v2949 = vadd.f32 %v2625, %v2948
        %v2950 = vpop.f32.mrb[0].mxu0
        %2951 = vmatprep.mubr.bf16.mxu0 %v2512
        %2952 = vmatmul.mubr.bf16.gmra.mrb[0].mxu0 %v2256
        %v2953 = vpop.f32.mrb[0].mxu0
        %v2954 = vadd.f32 %v2625, %v2953
        %v2955 = vpop.f32.mrb[0].mxu0
        %v2956 = vpop.f32.mrb[0].mxu0
        %v2957 = vadd.f32 %v2625, %v2956
        %v2958 = vpop.f32.mrb[0].mxu0
        %2959 = vmatprep.mubr.bf16.mxu0 %v2515
        %2960 = vmatmul.mubr.bf16.gmra.mrb[0].mxu0 %v2259
        %v2961 = vpop.f32.mrb[0].mxu0
        %v2962 = vadd.f32 %v2625, %v2961
        %v2963 = vpop.f32.mrb[0].mxu0
        %v2964 = vpop.f32.mrb[0].mxu0
        %v2965 = vadd.f32 %v2625, %v2964
        %v2966 = vpop.f32.mrb[0].mxu0
        %2967 = vmatprep.mubr.bf16.mxu0 %v2518
        %2968 = vmatmul.mubr.bf16.gmra.mrb[0].mxu0 %v2262
        %v2969 = vpop.f32.mrb[0].mxu0
        %v2970 = vadd.f32 %v2625, %v2969
        %v2971 = vpop.f32.mrb[0].mxu0
        %v2972 = vpop.f32.mrb[0].mxu0
        %v2973 = vadd.f32 %v2625, %v2972
        %v2974 = vpop.f32.mrb[0].mxu0
        %2975 = vmatprep.mubr.bf16.mxu0 %v2521
        %2976 = vmatmul.mubr.bf16.gmra.mrb[0].mxu0 %v2265
        %v2977 = vpop.f32.mrb[0].mxu0
        %v2978 = vadd.f32 %v2625, %v2977
        %v2979 = vpop.f32.mrb[0].mxu0
        %v2980 = vpop.f32.mrb[0].mxu0
        %v2981 = vadd.f32 %v2625, %v2980
        %v2982 = vpop.f32.mrb[0].mxu0
        %2983 = vmatprep.mubr.bf16.mxu0 %v2524
        %2984 = vmatmul.mubr.bf16.gmra.mrb[0].mxu0 %v2268
        %v2985 = vpop.f32.mrb[0].mxu0
        %v2986 = vadd.f32 %v2625, %v2985
        %v2987 = vpop.f32.mrb[0].mxu0
        %v2988 = vpop.f32.mrb[0].mxu0
        %v2989 = vadd.f32 %v2625, %v2988
        %v2990 = vpop.f32.mrb[0].mxu0
        %2991 = vmatprep.mubr.bf16.mxu0 %v2527
        %2992 = vmatmul.mubr.bf16.gmra.mrb[0].mxu0 %v2271
        %v2993 = vpop.f32.mrb[0].mxu0
        %v2994 = vadd.f32 %v2625, %v2993
        %v2995 = vpop.f32.mrb[0].mxu0
        %v2996 = vpop.f32.mrb[0].mxu0
        %v2997 = vadd.f32 %v2625, %v2996
        %v2998 = vpop.f32.mrb[0].mxu0
        %2999 = vmatprep.mubr.bf16.mxu0 %v2530
        %3000 = vmatmul.mubr.bf16.gmra.mrb[0].mxu0 %v2274
        %v3001 = vpop.f32.mrb[0].mxu0
        %v3002 = vadd.f32 %v2625, %v3001
        %v3003 = vpop.f32.mrb[0].mxu0
        %v3004 = vpop.f32.mrb[0].mxu0
        %v3005 = vadd.f32 %v2625, %v3004
        %v3006 = vpop.f32.mrb[0].mxu0
        %3007 = vmatprep.mubr.bf16.mxu0 %v2533
        %3008 = vmatmul.mubr.bf16.gmra.mrb[0].mxu0 %v2277
        %v3009 = vpop.f32.mrb[0].mxu0
        %v3010 = vadd.f32 %v2625, %v3009
        %v3011 = vpop.f32.mrb[0].mxu0
        %v3012 = vpop.f32.mrb[0].mxu0
        %v3013 = vadd.f32 %v2625, %v3012
        %v3014 = vpop.f32.mrb[0].mxu0
        %3015 = vmatprep.mubr.bf16.mxu0 %v2536
        %3016 = vmatmul.mubr.bf16.gmra.mrb[0].mxu0 %v2280
        %v3017 = vpop.f32.mrb[0].mxu0
        %v3018 = vadd.f32 %v2625, %v3017
        %v3019 = vpop.f32.mrb[0].mxu0
        %v3020 = vpop.f32.mrb[0].mxu0
        %v3021 = vadd.f32 %v2625, %v3020
        %v3022 = vpop.f32.mrb[0].mxu0
        %3023 = vmatprep.mubr.bf16.mxu0 %v2539
        %3024 = vmatmul.mubr.bf16.gmra.mrb[0].mxu0 %v2283
        %v3025 = vpop.f32.mrb[0].mxu0
        %v3026 = vadd.f32 %v2625, %v3025
        %v3027 = vpop.f32.mrb[0].mxu0
        %v3028 = vpop.f32.mrb[0].mxu0
        %v3029 = vadd.f32 %v2625, %v3028
        %v3030 = vpop.f32.mrb[0].mxu0
        %3031 = vmatprep.mubr.bf16.mxu0 %v2542
        %3032 = vmatmul.mubr.bf16.gmra.mrb[0].mxu0 %v2286
        %v3033 = vpop.f32.mrb[0].mxu0
        %v3034 = vadd.f32 %v2625, %v3033
        %v3035 = vpop.f32.mrb[0].mxu0
        %v3036 = vpop.f32.mrb[0].mxu0
        %v3037 = vadd.f32 %v2625, %v3036
        %v3038 = vpop.f32.mrb[0].mxu0
        %3039 = vmatprep.mubr.bf16.mxu0 %v2545
        %3040 = vmatmul.mubr.bf16.gmra.mrb[0].mxu0 %v2289
        %v3041 = vpop.f32.mrb[0].mxu0
        %v3042 = vadd.f32 %v2625, %v3041
        %v3043 = vpop.f32.mrb[0].mxu0
        %v3044 = vpop.f32.mrb[0].mxu0
        %v3045 = vadd.f32 %v2625, %v3044
        %v3046 = vpop.f32.mrb[0].mxu0
        %3047 = vmatprep.mubr.bf16.mxu0 %v2548
        %3048 = vmatmul.mubr.bf16.gmra.mrb[0].mxu0 %v2292
        %v3049 = vpop.f32.mrb[0].mxu0
        %v3050 = vadd.f32 %v2625, %v3049
        %v3051 = vpop.f32.mrb[0].mxu0
        %v3052 = vpop.f32.mrb[0].mxu0
        %v3053 = vadd.f32 %v2625, %v3052
        %v3054 = vpop.f32.mrb[0].mxu0
        %3055 = vmatprep.mubr.bf16.mxu0 %v2551
        %3056 = vmatmul.mubr.bf16.gmra.mrb[0].mxu0 %v2295
        %v3057 = vpop.f32.mrb[0].mxu0
        %v3058 = vadd.f32 %v2625, %v3057
        %v3059 = vpop.f32.mrb[0].mxu0
        %v3060 = vpop.f32.mrb[0].mxu0
        %v3061 = vadd.f32 %v2625, %v3060
        %v3062 = vpop.f32.mrb[0].mxu0
        %3063 = vmatprep.mubr.bf16.mxu0 %v2554
        %3064 = vmatmul.mubr.bf16.gmra.mrb[0].mxu0 %v2298
        %v3065 = vpop.f32.mrb[0].mxu0
        %v3066 = vadd.f32 %v2625, %v3065
        %v3067 = vpop.f32.mrb[0].mxu0
        %v3068 = vpop.f32.mrb[0].mxu0
        %v3069 = vadd.f32 %v2625, %v3068
        %v3070 = vpop.f32.mrb[0].mxu0
        %3071 = vmatprep.mubr.bf16.mxu0 %v2557
        %3072 = vmatmul.mubr.bf16.gmra.mrb[0].mxu0 %v2301
        %v3073 = vpop.f32.mrb[0].mxu0
        %v3074 = vadd.f32 %v2625, %v3073
        %v3075 = vpop.f32.mrb[0].mxu0
        %v3076 = vpop.f32.mrb[0].mxu0
        %v3077 = vadd.f32 %v2625, %v3076
        %v3078 = vpop.f32.mrb[0].mxu0
        %3079 = vmatprep.mubr.bf16.mxu0 %v2560
        %3080 = vmatmul.mubr.bf16.gmra.mrb[0].mxu0 %v2304
        %v3081 = vpop.f32.mrb[0].mxu0
        %v3082 = vadd.f32 %v2625, %v3081
        %v3083 = vpop.f32.mrb[0].mxu0
        %v3084 = vpop.f32.mrb[0].mxu0
        %v3085 = vadd.f32 %v2625, %v3084
        %v3086 = vpop.f32.mrb[0].mxu0
        %3087 = vmatprep.mubr.bf16.mxu0 %v2563
        %3088 = vmatmul.mubr.bf16.gmra.mrb[0].mxu0 %v2307
        %v3089 = vpop.f32.mrb[0].mxu0
        %v3090 = vadd.f32 %v2625, %v3089
        %v3091 = vpop.f32.mrb[0].mxu0
        %v3092 = vpop.f32.mrb[0].mxu0
        %v3093 = vadd.f32 %v2625, %v3092
        %v3094 = vpop.f32.mrb[0].mxu0
        %3095 = vmatprep.mubr.bf16.mxu0 %v2566
        %3096 = vmatmul.mubr.bf16.gmra.mrb[0].mxu0 %v2310
        %v3097 = vpop.f32.mrb[0].mxu0
        %v3098 = vadd.f32 %v2625, %v3097
        %v3099 = vpop.f32.mrb[0].mxu0
        %v3100 = vpop.f32.mrb[0].mxu0
        %v3101 = vadd.f32 %v2625, %v3100
        %v3102 = vpop.f32.mrb[0].mxu0
        %3103 = vmatprep.mubr.bf16.mxu0 %v2569
        %3104 = vmatmul.mubr.bf16.gmra.mrb[0].mxu0 %v2313
        %v3105 = vpop.f32.mrb[0].mxu0
        %v3106 = vadd.f32 %v2625, %v3105
        %v3107 = vpop.f32.mrb[0].mxu0
        %v3108 = vpop.f32.mrb[0].mxu0
        %v3109 = vadd.f32 %v2625, %v3108
        %v3110 = vpop.f32.mrb[0].mxu0
        %3111 = vmatprep.mubr.bf16.mxu0 %v2572
        %3112 = vmatmul.mubr.bf16.gmra.mrb[0].mxu0 %v2316
        %v3113 = vpop.f32.mrb[0].mxu0
        %v3114 = vadd.f32 %v2625, %v3113
        %v3115 = vpop.f32.mrb[0].mxu0
        %v3116 = vpop.f32.mrb[0].mxu0
        %v3117 = vadd.f32 %v2625, %v3116
        %v3118 = vpop.f32.mrb[0].mxu0
        %3119 = vdwg.mxu0
        %3120 = vmatprep.subr.bf16.mxu0 0
        %3121 = vmatpush1.bf16.msra.mxu0 %v2715
        %3122 = vmatprep.subr.bf16.mxu0 0
        %3123 = vmatpush1.bf16.msra.mxu0 %v2716
        %3124 = vmatprep.subr.bf16.mxu0 0
        %3125 = vmatpush1.bf16.msra.mxu0 0
        %3126 = vmatprep.subr.bf16.mxu0 0
        %3127 = vmatpush1.bf16.msra.mxu0 0
        %3128 = vmatprep.subr.bf16.mxu0 0
        %3129 = vmatpush1.bf16.msra.mxu0 0
        %3130 = vmatprep.subr.bf16.mxu0 0
        %3131 = vmatpush1.bf16.msra.mxu0 0
        %3132 = vmatprep.subr.bf16.mxu0 0
        %3133 = vmatpush1.bf16.msra.mxu0 0
        %3134 = vmatprep.subr.bf16.mxu0 0
        %3135 = vmatpush1.bf16.msra.mxu0 0
        %3136 = vmatprep.subr.bf16.mxu0 0
        %3137 = vmatpush1.bf16.msra.mxu0 0
        %3138 = vmatprep.subr.bf16.mxu0 0
        %3139 = vmatpush1.bf16.msra.mxu0 0
        %3140 = vmatprep.subr.bf16.mxu0 0
        %3141 = vmatpush1.bf16.msra.mxu0 0
        %3142 = vmatprep.subr.bf16.mxu0 0
        %3143 = vmatpush1.bf16.msra.mxu0 0
        %3144 = vmatprep.subr.bf16.mxu0 0
        %3145 = vmatpush1.bf16.msra.mxu0 0
        %3146 = vmatprep.subr.bf16.mxu0 0
        %3147 = vmatpush1.bf16.msra.mxu0 0
        %3148 = vmatprep.subr.bf16.mxu0 0
        %3149 = vmatpush1.bf16.msra.mxu0 0
        %3150 = vmatprep.subr.bf16.mxu0 0
        %3151 = vmatpush1.bf16.msra.mxu0 0
        %3152 = vmatprep.mubr.bf16.mxu0 0
        %3153 = vmatmul.mubr.bf16.gmra.mrb[0].mxu0 %v2736
        %v3154 = vpop.f32.mrb[0].mxu0
        %v3155 = vadd.f32 %v2866, %v3154
        %v3156 = vpop.f32.mrb[0].mxu0
        %v3157 = vpop.f32.mrb[0].mxu0
        %v3158 = vadd.f32 %v2869, %v3157
        %v3159 = vpop.f32.mrb[0].mxu0
        %3160 = vmatprep.mubr.bf16.mxu0 0
        %3161 = vmatmul.mubr.bf16.gmra.mrb[0].mxu0 %v2739
        %v3162 = vpop.f32.mrb[0].mxu0
        %v3163 = vadd.f32 %v2874, %v3162
        %v3164 = vpop.f32.mrb[0].mxu0
        %v3165 = vpop.f32.mrb[0].mxu0
        %v3166 = vadd.f32 %v2877, %v3165
        %v3167 = vpop.f32.mrb[0].mxu0
        %3168 = vmatprep.mubr.bf16.mxu0 0
        %3169 = vmatmul.mubr.bf16.gmra.mrb[0].mxu0 %v2742
        %v3170 = vpop.f32.mrb[0].mxu0
        %v3171 = vadd.f32 %v2882, %v3170
        %v3172 = vpop.f32.mrb[0].mxu0
        %v3173 = vpop.f32.mrb[0].mxu0
        %v3174 = vadd.f32 %v2885, %v3173
        %v3175 = vpop.f32.mrb[0].mxu0
        %3176 = vmatprep.mubr.bf16.mxu0 0
        %3177 = vmatmul.mubr.bf16.gmra.mrb[0].mxu0 %v2745
        %v3178 = vpop.f32.mrb[0].mxu0
        %v3179 = vadd.f32 %v2890, %v3178
        %v3180 = vpop.f32.mrb[0].mxu0
        %v3181 = vpop.f32.mrb[0].mxu0
        %v3182 = vadd.f32 %v2893, %v3181
        %v3183 = vpop.f32.mrb[0].mxu0
        %3184 = vmatprep.mubr.bf16.mxu0 0
        %3185 = vmatmul.mubr.bf16.gmra.mrb[0].mxu0 %v2748
        %v3186 = vpop.f32.mrb[0].mxu0
        %v3187 = vadd.f32 %v2898, %v3186
        %v3188 = vpop.f32.mrb[0].mxu0
        %v3189 = vpop.f32.mrb[0].mxu0
        %v3190 = vadd.f32 %v2901, %v3189
        %v3191 = vpop.f32.mrb[0].mxu0
        %3192 = vmatprep.mubr.bf16.mxu0 0
        %3193 = vmatmul.mubr.bf16.gmra.mrb[0].mxu0 %v2751
        %v3194 = vpop.f32.mrb[0].mxu0
        %v3195 = vadd.f32 %v2906, %v3194
        %v3196 = vpop.f32.mrb[0].mxu0
        %v3197 = vpop.f32.mrb[0].mxu0
        %v3198 = vadd.f32 %v2909, %v3197
        %v3199 = vpop.f32.mrb[0].mxu0
        %3200 = vmatprep.mubr.bf16.mxu0 0
        %3201 = vmatmul.mubr.bf16.gmra.mrb[0].mxu0 %v2754
        %v3202 = vpop.f32.mrb[0].mxu0
        %v3203 = vadd.f32 %v2914, %v3202
        %v3204 = vpop.f32.mrb[0].mxu0
        %v3205 = vpop.f32.mrb[0].mxu0
        %v3206 = vadd.f32 %v2917, %v3205
        %v3207 = vpop.f32.mrb[0].mxu0
        %3208 = vmatprep.mubr.bf16.mxu0 0
        %3209 = vmatmul.mubr.bf16.gmra.mrb[0].mxu0 %v2757
        %v3210 = vpop.f32.mrb[0].mxu0
        %v3211 = vadd.f32 %v2922, %v3210
        %v3212 = vpop.f32.mrb[0].mxu0
        %v3213 = vpop.f32.mrb[0].mxu0
        %v3214 = vadd.f32 %v2925, %v3213
        %v3215 = vpop.f32.mrb[0].mxu0
        %3216 = vmatprep.mubr.bf16.mxu0 0
        %3217 = vmatmul.mubr.bf16.gmra.mrb[0].mxu0 %v2760
        %v3218 = vpop.f32.mrb[0].mxu0
        %v3219 = vadd.f32 %v2930, %v3218
        %v3220 = vpop.f32.mrb[0].mxu0
        %v3221 = vpop.f32.mrb[0].mxu0
        %v3222 = vadd.f32 %v2933, %v3221
        %v3223 = vpop.f32.mrb[0].mxu0
        %3224 = vmatprep.mubr.bf16.mxu0 0
        %3225 = vmatmul.mubr.bf16.gmra.mrb[0].mxu0 %v2763
        %v3226 = vpop.f32.mrb[0].mxu0
        %v3227 = vadd.f32 %v2938, %v3226
        %v3228 = vpop.f32.mrb[0].mxu0
        %v3229 = vpop.f32.mrb[0].mxu0
        %v3230 = vadd.f32 %v2941, %v3229
        %v3231 = vpop.f32.mrb[0].mxu0
        %3232 = vmatprep.mubr.bf16.mxu0 0
        %3233 = vmatmul.mubr.bf16.gmra.mrb[0].mxu0 %v2766
        %v3234 = vpop.f32.mrb[0].mxu0
        %v3235 = vadd.f32 %v2946, %v3234
        %v3236 = vpop.f32.mrb[0].mxu0
        %v3237 = vpop.f32.mrb[0].mxu0
        %v3238 = vadd.f32 %v2949, %v3237
        %v3239 = vpop.f32.mrb[0].mxu0
        %3240 = vmatprep.mubr.bf16.mxu0 0
        %3241 = vmatmul.mubr.bf16.gmra.mrb[0].mxu0 %v2769
        %v3242 = vpop.f32.mrb[0].mxu0
        %v3243 = vadd.f32 %v2954, %v3242
        %v3244 = vpop.f32.mrb[0].mxu0
        %v3245 = vpop.f32.mrb[0].mxu0
        %v3246 = vadd.f32 %v2957, %v3245
        %v3247 = vpop.f32.mrb[0].mxu0
        %3248 = vmatprep.mubr.bf16.mxu0 0
        %3249 = vmatmul.mubr.bf16.gmra.mrb[0].mxu0 %v2772
        %v3250 = vpop.f32.mrb[0].mxu0
        %v3251 = vadd.f32 %v2962, %v3250
        %v3252 = vpop.f32.mrb[0].mxu0
        %v3253 = vpop.f32.mrb[0].mxu0
        %v3254 = vadd.f32 %v2965, %v3253
        %v3255 = vpop.f32.mrb[0].mxu0
        %3256 = vmatprep.mubr.bf16.mxu0 0
        %3257 = vmatmul.mubr.bf16.gmra.mrb[0].mxu0 %v2775
        %v3258 = vpop.f32.mrb[0].mxu0
        %v3259 = vadd.f32 %v2970, %v3258
        %v3260 = vpop.f32.mrb[0].mxu0
        %v3261 = vpop.f32.mrb[0].mxu0
        %v3262 = vadd.f32 %v2973, %v3261
        %v3263 = vpop.f32.mrb[0].mxu0
        %3264 = vmatprep.mubr.bf16.mxu0 0
        %3265 = vmatmul.mubr.bf16.gmra.mrb[0].mxu0 %v2778
        %v3266 = vpop.f32.mrb[0].mxu0
        %v3267 = vadd.f32 %v2978, %v3266
        %v3268 = vpop.f32.mrb[0].mxu0
        %v3269 = vpop.f32.mrb[0].mxu0
        %v3270 = vadd.f32 %v2981, %v3269
        %v3271 = vpop.f32.mrb[0].mxu0
        %3272 = vmatprep.mubr.bf16.mxu0 0
        %3273 = vmatmul.mubr.bf16.gmra.mrb[0].mxu0 %v2781
        %v3274 = vpop.f32.mrb[0].mxu0
        %v3275 = vadd.f32 %v2986, %v3274
        %v3276 = vpop.f32.mrb[0].mxu0
        %v3277 = vpop.f32.mrb[0].mxu0
        %v3278 = vadd.f32 %v2989, %v3277
        %v3279 = vpop.f32.mrb[0].mxu0
        %3280 = vmatprep.mubr.bf16.mxu0 0
        %3281 = vmatmul.mubr.bf16.gmra.mrb[0].mxu0 %v2784
        %v3282 = vpop.f32.mrb[0].mxu0
        %v3283 = vadd.f32 %v2994, %v3282
        %v3284 = vpop.f32.mrb[0].mxu0
        %v3285 = vpop.f32.mrb[0].mxu0
        %v3286 = vadd.f32 %v2997, %v3285
        %v3287 = vpop.f32.mrb[0].mxu0
        %3288 = vmatprep.mubr.bf16.mxu0 0
        %3289 = vmatmul.mubr.bf16.gmra.mrb[0].mxu0 %v2787
        %v3290 = vpop.f32.mrb[0].mxu0
        %v3291 = vadd.f32 %v3002, %v3290
        %v3292 = vpop.f32.mrb[0].mxu0
        %v3293 = vpop.f32.mrb[0].mxu0
        %v3294 = vadd.f32 %v3005, %v3293
        %v3295 = vpop.f32.mrb[0].mxu0
        %3296 = vmatprep.mubr.bf16.mxu0 0
        %3297 = vmatmul.mubr.bf16.gmra.mrb[0].mxu0 %v2790
        %v3298 = vpop.f32.mrb[0].mxu0
        %v3299 = vadd.f32 %v3010, %v3298
        %v3300 = vpop.f32.mrb[0].mxu0
        %v3301 = vpop.f32.mrb[0].mxu0
        %v3302 = vadd.f32 %v3013, %v3301
        %v3303 = vpop.f32.mrb[0].mxu0
        %3304 = vmatprep.mubr.bf16.mxu0 0
        %3305 = vmatmul.mubr.bf16.gmra.mrb[0].mxu0 %v2793
        %v3306 = vpop.f32.mrb[0].mxu0
        %v3307 = vadd.f32 %v3018, %v3306
        %v3308 = vpop.f32.mrb[0].mxu0
        %v3309 = vpop.f32.mrb[0].mxu0
        %v3310 = vadd.f32 %v3021, %v3309
        %v3311 = vpop.f32.mrb[0].mxu0
        %3312 = vmatprep.mubr.bf16.mxu0 0
        %3313 = vmatmul.mubr.bf16.gmra.mrb[0].mxu0 %v2796
        %v3314 = vpop.f32.mrb[0].mxu0
        %v3315 = vadd.f32 %v3026, %v3314
        %v3316 = vpop.f32.mrb[0].mxu0
        %v3317 = vpop.f32.mrb[0].mxu0
        %v3318 = vadd.f32 %v3029, %v3317
        %v3319 = vpop.f32.mrb[0].mxu0
        %3320 = vmatprep.mubr.bf16.mxu0 0
        %3321 = vmatmul.mubr.bf16.gmra.mrb[0].mxu0 %v2799
        %v3322 = vpop.f32.mrb[0].mxu0
        %v3323 = vadd.f32 %v3034, %v3322
        %v3324 = vpop.f32.mrb[0].mxu0
        %v3325 = vpop.f32.mrb[0].mxu0
        %v3326 = vadd.f32 %v3037, %v3325
        %v3327 = vpop.f32.mrb[0].mxu0
        %3328 = vmatprep.mubr.bf16.mxu0 0
        %3329 = vmatmul.mubr.bf16.gmra.mrb[0].mxu0 %v2802
        %v3330 = vpop.f32.mrb[0].mxu0
        %v3331 = vadd.f32 %v3042, %v3330
        %v3332 = vpop.f32.mrb[0].mxu0
        %v3333 = vpop.f32.mrb[0].mxu0
        %v3334 = vadd.f32 %v3045, %v3333
        %v3335 = vpop.f32.mrb[0].mxu0
        %3336 = vmatprep.mubr.bf16.mxu0 0
        %3337 = vmatmul.mubr.bf16.gmra.mrb[0].mxu0 %v2805
        %v3338 = vpop.f32.mrb[0].mxu0
        %v3339 = vadd.f32 %v3050, %v3338
        %v3340 = vpop.f32.mrb[0].mxu0
        %v3341 = vpop.f32.mrb[0].mxu0
        %v3342 = vadd.f32 %v3053, %v3341
        %v3343 = vpop.f32.mrb[0].mxu0
        %3344 = vmatprep.mubr.bf16.mxu0 0
        %3345 = vmatmul.mubr.bf16.gmra.mrb[0].mxu0 %v2808
        %v3346 = vpop.f32.mrb[0].mxu0
        %v3347 = vadd.f32 %v3058, %v3346
        %v3348 = vpop.f32.mrb[0].mxu0
        %v3349 = vpop.f32.mrb[0].mxu0
        %v3350 = vadd.f32 %v3061, %v3349
        %v3351 = vpop.f32.mrb[0].mxu0
        %3352 = vmatprep.mubr.bf16.mxu0 0
        %3353 = vmatmul.mubr.bf16.gmra.mrb[0].mxu0 %v2811
        %v3354 = vpop.f32.mrb[0].mxu0
        %v3355 = vadd.f32 %v3066, %v3354
        %v3356 = vpop.f32.mrb[0].mxu0
        %v3357 = vpop.f32.mrb[0].mxu0
        %v3358 = vadd.f32 %v3069, %v3357
        %v3359 = vpop.f32.mrb[0].mxu0
        %3360 = vmatprep.mubr.bf16.mxu0 0
        %3361 = vmatmul.mubr.bf16.gmra.mrb[0].mxu0 %v2814
        %v3362 = vpop.f32.mrb[0].mxu0
        %v3363 = vadd.f32 %v3074, %v3362
        %v3364 = vpop.f32.mrb[0].mxu0
        %v3365 = vpop.f32.mrb[0].mxu0
        %v3366 = vadd.f32 %v3077, %v3365
        %v3367 = vpop.f32.mrb[0].mxu0
        %3368 = vmatprep.mubr.bf16.mxu0 0
        %3369 = vmatmul.mubr.bf16.gmra.mrb[0].mxu0 %v2817
        %v3370 = vpop.f32.mrb[0].mxu0
        %v3371 = vadd.f32 %v3082, %v3370
        %v3372 = vpop.f32.mrb[0].mxu0
        %v3373 = vpop.f32.mrb[0].mxu0
        %v3374 = vadd.f32 %v3085, %v3373
        %v3375 = vpop.f32.mrb[0].mxu0
        %3376 = vmatprep.mubr.bf16.mxu0 0
        %3377 = vmatmul.mubr.bf16.gmra.mrb[0].mxu0 %v2820
        %v3378 = vpop.f32.mrb[0].mxu0
        %v3379 = vadd.f32 %v3090, %v3378
        %v3380 = vpop.f32.mrb[0].mxu0
        %v3381 = vpop.f32.mrb[0].mxu0
        %v3382 = vadd.f32 %v3093, %v3381
        %v3383 = vpop.f32.mrb[0].mxu0
        %3384 = vmatprep.mubr.bf16.mxu0 0
        %3385 = vmatmul.mubr.bf16.gmra.mrb[0].mxu0 %v2823
        %v3386 = vpop.f32.mrb[0].mxu0
        %v3387 = vadd.f32 %v3098, %v3386
        %v3388 = vpop.f32.mrb[0].mxu0
        %v3389 = vpop.f32.mrb[0].mxu0
        %v3390 = vadd.f32 %v3101, %v3389
        %v3391 = vpop.f32.mrb[0].mxu0
        %3392 = vmatprep.mubr.bf16.mxu0 0
        %3393 = vmatmul.mubr.bf16.gmra.mrb[0].mxu0 %v2826
        %v3394 = vpop.f32.mrb[0].mxu0
        %v3395 = vadd.f32 %v3106, %v3394
        %v3396 = vpop.f32.mrb[0].mxu0
        %v3397 = vpop.f32.mrb[0].mxu0
        %v3398 = vadd.f32 %v3109, %v3397
        %v3399 = vpop.f32.mrb[0].mxu0
        %3400 = vmatprep.mubr.bf16.mxu0 0
        %3401 = vmatmul.mubr.bf16.gmra.mrb[0].mxu0 %v2829
        %v3402 = vpop.f32.mrb[0].mxu0
        %v3403 = vadd.f32 %v3114, %v3402
        %v3404 = vpop.f32.mrb[0].mxu0
        %v3405 = vpop.f32.mrb[0].mxu0
        %v3406 = vadd.f32 %v3117, %v3405
        %v3407 = vpop.f32.mrb[0].mxu0
        %3408 = vdwg.mxu0
        %v3409 = vmax.f32 %v3155, 0.0
        %v3410 = vmax.f32 %v3158, 0.0
        %v3411 = vmax.f32 %v3163, 0.0
        %v3412 = vmax.f32 %v3166, 0.0
        %v3413 = vmax.f32 %v3171, 0.0
        %v3414 = vmax.f32 %v3174, 0.0
        %v3415 = vmax.f32 %v3179, 0.0
        %v3416 = vmax.f32 %v3182, 0.0
        %v3417 = vmax.f32 %v3187, 0.0
        %v3418 = vmax.f32 %v3190, 0.0
        %v3419 = vmax.f32 %v3195, 0.0
        %v3420 = vmax.f32 %v3198, 0.0
        %v3421 = vmax.f32 %v3203, 0.0
        %v3422 = vmax.f32 %v3206, 0.0
        %v3423 = vmax.f32 %v3211, 0.0
        %v3424 = vmax.f32 %v3214, 0.0
        %v3425 = vmax.f32 %v3219, 0.0
        %v3426 = vmax.f32 %v3222, 0.0
        %v3427 = vmax.f32 %v3227, 0.0
        %v3428 = vmax.f32 %v3230, 0.0
        %v3429 = vmax.f32 %v3235, 0.0
        %v3430 = vmax.f32 %v3238, 0.0
        %v3431 = vmax.f32 %v3243, 0.0
        %v3432 = vmax.f32 %v3246, 0.0
        %v3433 = vmax.f32 %v3251, 0.0
        %v3434 = vmax.f32 %v3254, 0.0
        %v3435 = vmax.f32 %v3259, 0.0
        %v3436 = vmax.f32 %v3262, 0.0
        %v3437 = vmax.f32 %v3267, 0.0
        %v3438 = vmax.f32 %v3270, 0.0
        %v3439 = vmax.f32 %v3275, 0.0
        %v3440 = vmax.f32 %v3278, 0.0
        %v3441 = vmax.f32 %v3283, 0.0
        %v3442 = vmax.f32 %v3286, 0.0
        %v3443 = vmax.f32 %v3291, 0.0
        %v3444 = vmax.f32 %v3294, 0.0
        %v3445 = vmax.f32 %v3299, 0.0
        %v3446 = vmax.f32 %v3302, 0.0
        %v3447 = vmax.f32 %v3307, 0.0
        %v3448 = vmax.f32 %v3310, 0.0
        %v3449 = vmax.f32 %v3315, 0.0
        %v3450 = vmax.f32 %v3318, 0.0
        %v3451 = vmax.f32 %v3323, 0.0
        %v3452 = vmax.f32 %v3326, 0.0
        %v3453 = vmax.f32 %v3331, 0.0
        %v3454 = vmax.f32 %v3334, 0.0
        %v3455 = vmax.f32 %v3339, 0.0
        %v3456 = vmax.f32 %v3342, 0.0
        %v3457 = vmax.f32 %v3347, 0.0
        %v3458 = vmax.f32 %v3350, 0.0
        %v3459 = vmax.f32 %v3355, 0.0
        %v3460 = vmax.f32 %v3358, 0.0
        %v3461 = vmax.f32 %v3363, 0.0
        %v3462 = vmax.f32 %v3366, 0.0
        %v3463 = vmax.f32 %v3371, 0.0
        %v3464 = vmax.f32 %v3374, 0.0
        %v3465 = vmax.f32 %v3379, 0.0
        %v3466 = vmax.f32 %v3382, 0.0
        %v3467 = vmax.f32 %v3387, 0.0
        %v3468 = vmax.f32 %v3390, 0.0
        %v3469 = vmax.f32 %v3395, 0.0
        %v3470 = vmax.f32 %v3398, 0.0
        %v3471 = vmax.f32 %v3403, 0.0
        %v3472 = vmax.f32 %v3406, 0.0
        %3473 = vst.msk [vmem:[%s905 + $0x1] sm:$0xff] %vm2059, %v3409
        %3474 = vst.msk [vmem:[%s905 + $0x11] sm:$0xff] %vm2059, %v3410
        %3475 = vst.msk [vmem:[%s905 + $0x21] sm:$0xff] %vm2059, %v3411
        %3476 = vst.msk [vmem:[%s905 + $0x31] sm:$0xff] %vm2059, %v3412
        %3477 = vst.msk [vmem:[%s905 + $0x41] sm:$0xff] %vm2059, %v3413
        %3478 = vst.msk [vmem:[%s905 + $0x51] sm:$0xff] %vm2059, %v3414
        %3479 = vst.msk [vmem:[%s905 + $0x61] sm:$0xff] %vm2059, %v3415
        %3480 = vst.msk [vmem:[%s905 + $0x71] sm:$0xff] %vm2059, %v3416
        %3481 = vst.msk [vmem:[%s905 + $0xa1] sm:$0xff] %vm2059, %v3417
        %3482 = vst.msk [vmem:[%s905 + $0xb1] sm:$0xff] %vm2059, %v3418
        %3483 = vst.msk [vmem:[%s905 + $0xc1] sm:$0xff] %vm2059, %v3419
        %3484 = vst.msk [vmem:[%s905 + $0xd1] sm:$0xff] %vm2059, %v3420
        %3485 = vst.msk [vmem:[%s905 + $0xe1] sm:$0xff] %vm2059, %v3421
        %3486 = vst.msk [vmem:[%s905 + $0xf1] sm:$0xff] %vm2059, %v3422
        %3487 = vst.msk [vmem:[%s905 + $0x101] sm:$0xff] %vm2059, %v3423
        %3488 = vst.msk [vmem:[%s905 + $0x111] sm:$0xff] %vm2059, %v3424
        %3489 = vst.msk [vmem:[%s905 + $0x141] sm:$0xff] %vm2059, %v3425
        %3490 = vst.msk [vmem:[%s905 + $0x151] sm:$0xff] %vm2059, %v3426
        %3491 = vst.msk [vmem:[%s905 + $0x161] sm:$0xff] %vm2059, %v3427
        %3492 = vst.msk [vmem:[%s905 + $0x171] sm:$0xff] %vm2059, %v3428
        %3493 = vst.msk [vmem:[%s905 + $0x181] sm:$0xff] %vm2059, %v3429
        %3494 = vst.msk [vmem:[%s905 + $0x191] sm:$0xff] %vm2059, %v3430
        %3495 = vst.msk [vmem:[%s905 + $0x1a1] sm:$0xff] %vm2059, %v3431
        %3496 = vst.msk [vmem:[%s905 + $0x1b1] sm:$0xff] %vm2059, %v3432
        %3497 = vst.msk [vmem:[%s905 + $0x1e1] sm:$0xff] %vm2059, %v3433
        %3498 = vst.msk [vmem:[%s905 + $0x1f1] sm:$0xff] %vm2059, %v3434
        %3499 = vst.msk [vmem:[%s905 + $0x201] sm:$0xff] %vm2059, %v3435
        %3500 = vst.msk [vmem:[%s905 + $0x211] sm:$0xff] %vm2059, %v3436
        %3501 = vst.msk [vmem:[%s905 + $0x221] sm:$0xff] %vm2059, %v3437
        %3502 = vst.msk [vmem:[%s905 + $0x231] sm:$0xff] %vm2059, %v3438
        %3503 = vst.msk [vmem:[%s905 + $0x241] sm:$0xff] %vm2059, %v3439
        %3504 = vst.msk [vmem:[%s905 + $0x251] sm:$0xff] %vm2059, %v3440
        %3505 = vst.msk [vmem:[%s905 + $0x281] sm:$0xff] %vm2059, %v3441
        %3506 = vst.msk [vmem:[%s905 + $0x291] sm:$0xff] %vm2059, %v3442
        %3507 = vst.msk [vmem:[%s905 + $0x2a1] sm:$0xff] %vm2059, %v3443
        %3508 = vst.msk [vmem:[%s905 + $0x2b1] sm:$0xff] %vm2059, %v3444
        %3509 = vst.msk [vmem:[%s905 + $0x2c1] sm:$0xff] %vm2059, %v3445
        %3510 = vst.msk [vmem:[%s905 + $0x2d1] sm:$0xff] %vm2059, %v3446
        %3511 = vst.msk [vmem:[%s905 + $0x2e1] sm:$0xff] %vm2059, %v3447
        %3512 = vst.msk [vmem:[%s905 + $0x2f1] sm:$0xff] %vm2059, %v3448
        %3513 = vst.msk [vmem:[%s905 + $0x321] sm:$0xff] %vm2059, %v3449
        %3514 = vst.msk [vmem:[%s905 + $0x331] sm:$0xff] %vm2059, %v3450
        %3515 = vst.msk [vmem:[%s905 + $0x341] sm:$0xff] %vm2059, %v3451
        %3516 = vst.msk [vmem:[%s905 + $0x351] sm:$0xff] %vm2059, %v3452
        %3517 = vst.msk [vmem:[%s905 + $0x361] sm:$0xff] %vm2059, %v3453
        %3518 = vst.msk [vmem:[%s905 + $0x371] sm:$0xff] %vm2059, %v3454
        %3519 = vst.msk [vmem:[%s905 + $0x381] sm:$0xff] %vm2059, %v3455
        %3520 = vst.msk [vmem:[%s905 + $0x391] sm:$0xff] %vm2059, %v3456
        %3521 = vst.msk [vmem:[%s905 + $0x3c1] sm:$0xff] %vm2059, %v3457
        %3522 = vst.msk [vmem:[%s905 + $0x3d1] sm:$0xff] %vm2059, %v3458
        %3523 = vst.msk [vmem:[%s905 + $0x3e1] sm:$0xff] %vm2059, %v3459
        %3524 = vst.msk [vmem:[%s905 + $0x3f1] sm:$0xff] %vm2059, %v3460
        %3525 = vst.msk [vmem:[%s905 + $0x401] sm:$0xff] %vm2059, %v3461
        %3526 = vst.msk [vmem:[%s905 + $0x411] sm:$0xff] %vm2059, %v3462
        %3527 = vst.msk [vmem:[%s905 + $0x421] sm:$0xff] %vm2059, %v3463
        %3528 = vst.msk [vmem:[%s905 + $0x431] sm:$0xff] %vm2059, %v3464
        %3529 = vst.msk [vmem:[%s905 + $0x461] sm:$0xff] %vm2059, %v3465
        %3530 = vst.msk [vmem:[%s905 + $0x471] sm:$0xff] %vm2059, %v3466
        %3531 = vst.msk [vmem:[%s905 + $0x481] sm:$0xff] %vm2059, %v3467
        %3532 = vst.msk [vmem:[%s905 + $0x491] sm:$0xff] %vm2059, %v3468
        %3533 = vst.msk [vmem:[%s905 + $0x4a1] sm:$0xff] %vm2059, %v3469
        %3534 = vst.msk [vmem:[%s905 + $0x4b1] sm:$0xff] %vm2059, %v3470
        %3535 = vst.msk [vmem:[%s905 + $0x4c1] sm:$0xff] %vm2059, %v3471
        %3536 = vst.msk [vmem:[%s905 + $0x4d1] sm:$0xff] %vm2059, %v3472
      $region48: #{_lambda_.1} parent=39 // pred_fallthru
        _
      %p3537 = scmp.eq.s32.totalorder %s23, 3
      // Predicated region
      $region49: #{_lambda_.1} parent=39 // pred_check
        %p3538 = pneg %p3537
      $region50: #{_lambda_.1} parent=39 // pred_check_branch
        %3540 = sbr.rel (%p3538) target = $region52
      $region51: #{_lambda_.1} parent=39 // pred_region
        %v3541 = vld [vmem:[%s905 + $0x1] sm:$0xff]
        %v3542 = vld [vmem:[%s905 + $0x11] sm:$0xff]
        %v3543 = vld [vmem:[%s905 + $0x21] sm:$0xff]
        %v3544 = vld [vmem:[%s905 + $0x31] sm:$0xff]
        %v3545 = vld [vmem:[%s905 + $0x41] sm:$0xff]
        %v3546 = vld [vmem:[%s905 + $0x51] sm:$0xff]
        %v3547 = vld [vmem:[%s905 + $0x61] sm:$0xff]
        %v3548 = vld [vmem:[%s905 + $0x71] sm:$0xff]
        %v3549 = vld [vmem:[%s905 + $0xa1] sm:$0xff]
        %v3550 = vld [vmem:[%s905 + $0xb1] sm:$0xff]
        %v3551 = vld [vmem:[%s905 + $0xc1] sm:$0xff]
        %v3552 = vld [vmem:[%s905 + $0xd1] sm:$0xff]
        %v3553 = vld [vmem:[%s905 + $0xe1] sm:$0xff]
        %v3554 = vld [vmem:[%s905 + $0xf1] sm:$0xff]
        %v3555 = vld [vmem:[%s905 + $0x101] sm:$0xff]
        %v3556 = vld [vmem:[%s905 + $0x111] sm:$0xff]
        %v3557 = vld [vmem:[%s905 + $0x141] sm:$0xff]
        %v3558 = vld [vmem:[%s905 + $0x151] sm:$0xff]
        %v3559 = vld [vmem:[%s905 + $0x161] sm:$0xff]
        %v3560 = vld [vmem:[%s905 + $0x171] sm:$0xff]
        %v3561 = vld [vmem:[%s905 + $0x181] sm:$0xff]
        %v3562 = vld [vmem:[%s905 + $0x191] sm:$0xff]
        %v3563 = vld [vmem:[%s905 + $0x1a1] sm:$0xff]
        %v3564 = vld [vmem:[%s905 + $0x1b1] sm:$0xff]
        %v3565 = vld [vmem:[%s905 + $0x1e1] sm:$0xff]
        %v3566 = vld [vmem:[%s905 + $0x1f1] sm:$0xff]
        %v3567 = vld [vmem:[%s905 + $0x201] sm:$0xff]
        %v3568 = vld [vmem:[%s905 + $0x211] sm:$0xff]
        %v3569 = vld [vmem:[%s905 + $0x221] sm:$0xff]
        %v3570 = vld [vmem:[%s905 + $0x231] sm:$0xff]
        %v3571 = vld [vmem:[%s905 + $0x241] sm:$0xff]
        %v3572 = vld [vmem:[%s905 + $0x251] sm:$0xff]
        %v3573 = vld [vmem:[%s905 + $0x281] sm:$0xff]
        %v3574 = vld [vmem:[%s905 + $0x291] sm:$0xff]
        %v3575 = vld [vmem:[%s905 + $0x2a1] sm:$0xff]
        %v3576 = vld [vmem:[%s905 + $0x2b1] sm:$0xff]
        %v3577 = vld [vmem:[%s905 + $0x2c1] sm:$0xff]
        %v3578 = vld [vmem:[%s905 + $0x2d1] sm:$0xff]
        %v3579 = vld [vmem:[%s905 + $0x2e1] sm:$0xff]
        %v3580 = vld [vmem:[%s905 + $0x2f1] sm:$0xff]
        %v3581 = vld [vmem:[%s905 + $0x321] sm:$0xff]
        %v3582 = vld [vmem:[%s905 + $0x331] sm:$0xff]
        %v3583 = vld [vmem:[%s905 + $0x341] sm:$0xff]
        %v3584 = vld [vmem:[%s905 + $0x351] sm:$0xff]
        %v3585 = vld [vmem:[%s905 + $0x361] sm:$0xff]
        %v3586 = vld [vmem:[%s905 + $0x371] sm:$0xff]
        %v3587 = vld [vmem:[%s905 + $0x381] sm:$0xff]
        %v3588 = vld [vmem:[%s905 + $0x391] sm:$0xff]
        %v3589 = vld [vmem:[%s905 + $0x3c1] sm:$0xff]
        %v3590 = vld [vmem:[%s905 + $0x3d1] sm:$0xff]
        %v3591 = vld [vmem:[%s905 + $0x3e1] sm:$0xff]
        %v3592 = vld [vmem:[%s905 + $0x3f1] sm:$0xff]
        %v3593 = vld [vmem:[%s905 + $0x401] sm:$0xff]
        %v3594 = vld [vmem:[%s905 + $0x411] sm:$0xff]
        %v3595 = vld [vmem:[%s905 + $0x421] sm:$0xff]
        %v3596 = vld [vmem:[%s905 + $0x431] sm:$0xff]
        %v3597 = vld [vmem:[%s905 + $0x461] sm:$0xff]
        %v3598 = vld [vmem:[%s905 + $0x471] sm:$0xff]
        %v3599 = vld [vmem:[%s905 + $0x481] sm:$0xff]
        %v3600 = vld [vmem:[%s905 + $0x491] sm:$0xff]
        %v3601 = vld [vmem:[%s905 + $0x4a1] sm:$0xff]
        %v3602 = vld [vmem:[%s905 + $0x4b1] sm:$0xff]
        %v3603 = vld [vmem:[%s905 + $0x4c1] sm:$0xff]
        %v3604 = vld [vmem:[%s905 + $0x4d1] sm:$0xff]
        %3605 = vst.msk [vmem:[%s279] sm:$0xff] %vm2059, %v3541
        %3606 = vst.msk [vmem:[%s279 + $0x8] sm:$0xff] %vm2059, %v3542
        %3607 = vst.msk [vmem:[%s279 + $0x10] sm:$0xff] %vm2059, %v3543
        %3608 = vst.msk [vmem:[%s279 + $0x18] sm:$0xff] %vm2059, %v3544
        %3609 = vst.msk [vmem:[%s279 + $0x20] sm:$0xff] %vm2059, %v3545
        %3610 = vst.msk [vmem:[%s279 + $0x28] sm:$0xff] %vm2059, %v3546
        %3611 = vst.msk [vmem:[%s279 + $0x30] sm:$0xff] %vm2059, %v3547
        %3612 = vst.msk [vmem:[%s279 + $0x38] sm:$0xff] %vm2059, %v3548
        %3613 = vst.msk [vmem:[%s279 + $0x40] sm:$0xff] %vm2059, %v3549
        %3614 = vst.msk [vmem:[%s279 + $0x48] sm:$0xff] %vm2059, %v3550
        %3615 = vst.msk [vmem:[%s279 + $0x50] sm:$0xff] %vm2059, %v3551
        %3616 = vst.msk [vmem:[%s279 + $0x58] sm:$0xff] %vm2059, %v3552
        %3617 = vst.msk [vmem:[%s279 + $0x60] sm:$0xff] %vm2059, %v3553
        %3618 = vst.msk [vmem:[%s279 + $0x68] sm:$0xff] %vm2059, %v3554
        %3619 = vst.msk [vmem:[%s279 + $0x70] sm:$0xff] %vm2059, %v3555
        %3620 = vst.msk [vmem:[%s279 + $0x78] sm:$0xff] %vm2059, %v3556
        %3621 = vst.msk [vmem:[%s279 + $0x80] sm:$0xff] %vm2059, %v3557
        %3622 = vst.msk [vmem:[%s279 + $0x88] sm:$0xff] %vm2059, %v3558
        %3623 = vst.msk [vmem:[%s279 + $0x90] sm:$0xff] %vm2059, %v3559
        %3624 = vst.msk [vmem:[%s279 + $0x98] sm:$0xff] %vm2059, %v3560
        %3625 = vst.msk [vmem:[%s279 + $0xa0] sm:$0xff] %vm2059, %v3561
        %3626 = vst.msk [vmem:[%s279 + $0xa8] sm:$0xff] %vm2059, %v3562
        %3627 = vst.msk [vmem:[%s279 + $0xb0] sm:$0xff] %vm2059, %v3563
        %3628 = vst.msk [vmem:[%s279 + $0xb8] sm:$0xff] %vm2059, %v3564
        %3629 = vst.msk [vmem:[%s279 + $0xc0] sm:$0xff] %vm2059, %v3565
        %3630 = vst.msk [vmem:[%s279 + $0xc8] sm:$0xff] %vm2059, %v3566
        %3631 = vst.msk [vmem:[%s279 + $0xd0] sm:$0xff] %vm2059, %v3567
        %3632 = vst.msk [vmem:[%s279 + $0xd8] sm:$0xff] %vm2059, %v3568
        %3633 = vst.msk [vmem:[%s279 + $0xe0] sm:$0xff] %vm2059, %v3569
        %3634 = vst.msk [vmem:[%s279 + $0xe8] sm:$0xff] %vm2059, %v3570
        %3635 = vst.msk [vmem:[%s279 + $0xf0] sm:$0xff] %vm2059, %v3571
        %3636 = vst.msk [vmem:[%s279 + $0xf8] sm:$0xff] %vm2059, %v3572
        %3637 = vst.msk [vmem:[%s279 + $0x100] sm:$0xff] %vm2059, %v3573
        %3638 = vst.msk [vmem:[%s279 + $0x108] sm:$0xff] %vm2059, %v3574
        %3639 = vst.msk [vmem:[%s279 + $0x110] sm:$0xff] %vm2059, %v3575
        %3640 = vst.msk [vmem:[%s279 + $0x118] sm:$0xff] %vm2059, %v3576
        %3641 = vst.msk [vmem:[%s279 + $0x120] sm:$0xff] %vm2059, %v3577
        %3642 = vst.msk [vmem:[%s279 + $0x128] sm:$0xff] %vm2059, %v3578
        %3643 = vst.msk [vmem:[%s279 + $0x130] sm:$0xff] %vm2059, %v3579
        %3644 = vst.msk [vmem:[%s279 + $0x138] sm:$0xff] %vm2059, %v3580
        %3645 = vst.msk [vmem:[%s279 + $0x140] sm:$0xff] %vm2059, %v3581
        %3646 = vst.msk [vmem:[%s279 + $0x148] sm:$0xff] %vm2059, %v3582
        %3647 = vst.msk [vmem:[%s279 + $0x150] sm:$0xff] %vm2059, %v3583
        %3648 = vst.msk [vmem:[%s279 + $0x158] sm:$0xff] %vm2059, %v3584
        %3649 = vst.msk [vmem:[%s279 + $0x160] sm:$0xff] %vm2059, %v3585
        %3650 = vst.msk [vmem:[%s279 + $0x168] sm:$0xff] %vm2059, %v3586
        %3651 = vst.msk [vmem:[%s279 + $0x170] sm:$0xff] %vm2059, %v3587
        %3652 = vst.msk [vmem:[%s279 + $0x178] sm:$0xff] %vm2059, %v3588
        %3653 = vst.msk [vmem:[%s279 + $0x180] sm:$0xff] %vm2059, %v3589
        %3654 = vst.msk [vmem:[%s279 + $0x188] sm:$0xff] %vm2059, %v3590
        %3655 = vst.msk [vmem:[%s279 + $0x190] sm:$0xff] %vm2059, %v3591
        %3656 = vst.msk [vmem:[%s279 + $0x198] sm:$0xff] %vm2059, %v3592
        %3657 = vst.msk [vmem:[%s279 + $0x1a0] sm:$0xff] %vm2059, %v3593
        %3658 = vst.msk [vmem:[%s279 + $0x1a8] sm:$0xff] %vm2059, %v3594
        %3659 = vst.msk [vmem:[%s279 + $0x1b0] sm:$0xff] %vm2059, %v3595
        %3660 = vst.msk [vmem:[%s279 + $0x1b8] sm:$0xff] %vm2059, %v3596
        %3661 = vst.msk [vmem:[%s279 + $0x1c0] sm:$0xff] %vm2059, %v3597
        %3662 = vst.msk [vmem:[%s279 + $0x1c8] sm:$0xff] %vm2059, %v3598
        %3663 = vst.msk [vmem:[%s279 + $0x1d0] sm:$0xff] %vm2059, %v3599
        %3664 = vst.msk [vmem:[%s279 + $0x1d8] sm:$0xff] %vm2059, %v3600
        %3665 = vst.msk [vmem:[%s279 + $0x1e0] sm:$0xff] %vm2059, %v3601
        %3666 = vst.msk [vmem:[%s279 + $0x1e8] sm:$0xff] %vm2059, %v3602
        %3667 = vst.msk [vmem:[%s279 + $0x1f0] sm:$0xff] %vm2059, %v3603
        %3668 = vst.msk [vmem:[%s279 + $0x1f8] sm:$0xff] %vm2059, %v3604
      $region52: #{_lambda_.1} parent=39 // pred_fallthru
        _
      %p3669 = scmp.eq.s32.totalorder %s23, 4
      // Predicated region
      $region53: #{_lambda_.1} parent=39 // pred_check
        %p3670 = pneg %p3669
      $region54: #{_lambda_.1} parent=39 // pred_check_branch
        %3672 = sbr.rel (%p3670) target = $region56
      $region55: #{_lambda_.1} parent=39 // pred_region
        %v3673 = vld [vmem:[%s3] sm:$0xf]
        %v3674 = vld [vmem:[%s3 + $0x4] sm:$0xf]
        %v3675 = vld [vmem:[%s3 + $0x8] sm:$0xf]
        %v3676 = vld [vmem:[%s3 + $0xc] sm:$0xf]
        %v3677 = vld [vmem:[%s3 + $0x10] sm:$0xf]
        %v3678 = vld [vmem:[%s3 + $0x14] sm:$0xf]
        %v3679 = vld [vmem:[%s3 + $0x18] sm:$0xf]
        %v3680 = vld [vmem:[%s3 + $0x1c] sm:$0xf]
        %v3681 = vld [vmem:[%s3 + $0x20] sm:$0xf]
        %v3682 = vld [vmem:[%s3 + $0x24] sm:$0xf]
        %v3683 = vld [vmem:[%s3 + $0x28] sm:$0xf]
        %v3684 = vld [vmem:[%s3 + $0x2c] sm:$0xf]
        %v3685 = vld [vmem:[%s3 + $0x30] sm:$0xf]
        %v3686 = vld [vmem:[%s3 + $0x34] sm:$0xf]
        %v3687 = vld [vmem:[%s3 + $0x38] sm:$0xf]
        %v3688 = vld [vmem:[%s3 + $0x3c] sm:$0xf]
        %v3689 = vld [vmem:[%s3 + $0x40] sm:$0xf]
        %v3690 = vld [vmem:[%s3 + $0x44] sm:$0xf]
        %v3691 = vld [vmem:[%s3 + $0x48] sm:$0xf]
        %v3692 = vld [vmem:[%s3 + $0x4c] sm:$0xf]
        %v3693 = vld [vmem:[%s3 + $0x50] sm:$0xf]
        %v3694 = vld [vmem:[%s3 + $0x54] sm:$0xf]
        %v3695 = vld [vmem:[%s3 + $0x58] sm:$0xf]
        %v3696 = vld [vmem:[%s3 + $0x5c] sm:$0xf]
        %v3697 = vld [vmem:[%s3 + $0x60] sm:$0xf]
        %v3698 = vld [vmem:[%s3 + $0x64] sm:$0xf]
        %v3699 = vld [vmem:[%s3 + $0x68] sm:$0xf]
        %v3700 = vld [vmem:[%s3 + $0x6c] sm:$0xf]
        %v3701 = vld [vmem:[%s3 + $0x70] sm:$0xf]
        %v3702 = vld [vmem:[%s3 + $0x74] sm:$0xf]
        %v3703 = vld [vmem:[%s3 + $0x78] sm:$0xf]
        %v3704 = vld [vmem:[%s3 + $0x7c] sm:$0xf]
        %v3705 = vld [vmem:[%s3 + $0x80] sm:$0xf]
        %v3706 = vld [vmem:[%s3 + $0x84] sm:$0xf]
        %v3707 = vld [vmem:[%s3 + $0x88] sm:$0xf]
        %v3708 = vld [vmem:[%s3 + $0x8c] sm:$0xf]
        %v3709 = vld [vmem:[%s4] sm:$0x1]
        %v3711 = vlaneseq
        %v3712 = vshrl.u32 %v3711, 7
        %v3713 = vsub.s32 0, %v3712
        %v3714 = vrot.slane %v3709, %v3713
        %v3752 = vunpack.c.l.b16 %v3673
        %v3753 = vunpack.c.l.b16 %v3674
        %v3754 = vunpack.c.l.b16 %v3675
        %v3755 = vunpack.c.l.b16 %v3676
        %v3756 = vunpack.c.l.b16 %v3677
        %v3757 = vunpack.c.l.b16 %v3678
        %v3758 = vunpack.c.l.b16 %v3679
        %v3759 = vunpack.c.l.b16 %v3680
        %v3760 = vunpack.c.l.b16 %v3681
        %v3761 = vunpack.c.l.b16 %v3682
        %v3762 = vunpack.c.l.b16 %v3683
        %v3763 = vunpack.c.l.b16 %v3684
        %v3764 = vunpack.c.l.b16 %v3685
        %v3765 = vunpack.c.l.b16 %v3686
        %v3766 = vunpack.c.l.b16 %v3687
        %v3767 = vunpack.c.l.b16 %v3688
        %v3768 = vunpack.c.l.b16 %v3689
        %v3769 = vunpack.c.l.b16 %v3690
        %v3770 = vunpack.c.l.b16 %v3691
        %v3771 = vunpack.c.l.b16 %v3692
        %v3772 = vunpack.c.l.b16 %v3693
        %v3773 = vunpack.c.l.b16 %v3694
        %v3774 = vunpack.c.l.b16 %v3695
        %v3775 = vunpack.c.l.b16 %v3696
        %v3776 = vunpack.c.l.b16 %v3697
        %v3777 = vunpack.c.l.b16 %v3698
        %v3778 = vunpack.c.l.b16 %v3699
        %v3779 = vunpack.c.l.b16 %v3700
        %v3780 = vunpack.c.l.b16 %v3701
        %v3781 = vunpack.c.l.b16 %v3702
        %v3782 = vunpack.c.l.b16 %v3703
        %v3783 = vunpack.c.l.b16 %v3704
        %v3784 = vunpack.c.l.b16 %v3705
        %v3785 = vunpack.c.l.b16 %v3706
        %v3786 = vunpack.c.l.b16 %v3707
        %v3787 = vunpack.c.l.b16 %v3708
        %v3788 = vpack.c.b16 %v3753, %v3752
        %v3789 = vpack.c.b16 %v3755, %v3754
        %v3790 = vpack.c.b16 %v3757, %v3756
        %v3791 = vpack.c.b16 %v3759, %v3758
        %v3792 = vpack.c.b16 %v3761, %v3760
        %v3793 = vpack.c.b16 %v3763, %v3762
        %v3794 = vpack.c.b16 %v3765, %v3764
        %v3795 = vpack.c.b16 %v3767, %v3766
        %v3796 = vpack.c.b16 %v3769, %v3768
        %v3797 = vpack.c.b16 %v3771, %v3770
        %v3798 = vpack.c.b16 %v3773, %v3772
        %v3799 = vpack.c.b16 %v3775, %v3774
        %v3800 = vpack.c.b16 %v3777, %v3776
        %v3801 = vpack.c.b16 %v3779, %v3778
        %v3802 = vpack.c.b16 %v3781, %v3780
        %v3803 = vpack.c.b16 %v3783, %v3782
        %v3804 = vpack.c.b16 %v3785, %v3784
        %v3805 = vpack.c.b16 %v3787, %v3786
        %v3825 = vsel %vm2059, %v1451, 0
        %v3828 = vsel %vm2059, %v1452, 0
        %v3831 = vsel %vm2059, %v1453, 0
        %v3834 = vsel %vm2059, %v1454, 0
        %v3837 = vsel %vm2059, %v1455, 0
        %v3840 = vsel %vm2059, %v1456, 0
        %v3843 = vsel %vm2059, %v1457, 0
        %v3846 = vsel %vm2059, %v1458, 0
        %v3849 = vsel %vm2059, %v1459, 0
        %v3852 = vsel %vm2059, %v1460, 0
        %v3855 = vsel %vm2059, %v1461, 0
        %v3858 = vsel %vm2059, %v1462, 0
        %v3861 = vsel %vm2059, %v1463, 0
        %v3864 = vsel %vm2059, %v1464, 0
        %v3867 = vsel %vm2059, %v1465, 0
        %v3870 = vsel %vm2059, %v1466, 0
        %v3873 = vsel %vm2059, %v1467, 0
        %v3876 = vsel %vm2059, %v1468, 0
        %v3879 = vsel %vm2059, %v1469, 0
        %v3882 = vsel %vm2059, %v1470, 0
        %v3885 = vsel %vm2059, %v1471, 0
        %v3888 = vsel %vm2059, %v1472, 0
        %v3891 = vsel %vm2059, %v1473, 0
        %v3894 = vsel %vm2059, %v1474, 0
        %v3897 = vsel %vm2059, %v1475, 0
        %v3900 = vsel %vm2059, %v1476, 0
        %v3903 = vsel %vm2059, %v1477, 0
        %v3906 = vsel %vm2059, %v1478, 0
        %v3909 = vsel %vm2059, %v1479, 0
        %v3912 = vsel %vm2059, %v1480, 0
        %v3915 = vsel %vm2059, %v1481, 0
        %v3918 = vsel %vm2059, %v1482, 0
        %3920 = vmatprep.subr.bf16.mxu0 0
        %3921 = vmatpush1.bf16.msra.mxu0 %v3788
        %3922 = vmatprep.subr.bf16.mxu0 0
        %3923 = vmatpush1.bf16.msra.mxu0 %v3789
        %3924 = vmatprep.subr.bf16.mxu0 0
        %3925 = vmatpush1.bf16.msra.mxu0 %v3790
        %3926 = vmatprep.subr.bf16.mxu0 0
        %3927 = vmatpush1.bf16.msra.mxu0 %v3791
        %3928 = vmatprep.subr.bf16.mxu0 0
        %3929 = vmatpush1.bf16.msra.mxu0 %v3792
        %3930 = vmatprep.subr.bf16.mxu0 0
        %3931 = vmatpush1.bf16.msra.mxu0 %v3793
        %3932 = vmatprep.subr.bf16.mxu0 0
        %3933 = vmatpush1.bf16.msra.mxu0 %v3794
        %3934 = vmatprep.subr.bf16.mxu0 0
        %3935 = vmatpush1.bf16.msra.mxu0 %v3795
        %3936 = vmatprep.subr.bf16.mxu0 0
        %3937 = vmatpush1.bf16.msra.mxu0 %v3796
        %3938 = vmatprep.subr.bf16.mxu0 0
        %3939 = vmatpush1.bf16.msra.mxu0 %v3797
        %3940 = vmatprep.subr.bf16.mxu0 0
        %3941 = vmatpush1.bf16.msra.mxu0 %v3798
        %3942 = vmatprep.subr.bf16.mxu0 0
        %3943 = vmatpush1.bf16.msra.mxu0 %v3799
        %3944 = vmatprep.subr.bf16.mxu0 0
        %3945 = vmatpush1.bf16.msra.mxu0 %v3800
        %3946 = vmatprep.subr.bf16.mxu0 0
        %3947 = vmatpush1.bf16.msra.mxu0 %v3801
        %3948 = vmatprep.subr.bf16.mxu0 0
        %3949 = vmatpush1.bf16.msra.mxu0 %v3802
        %3950 = vmatprep.subr.bf16.mxu0 0
        %3951 = vmatpush1.bf16.msra.mxu0 %v3803
        %3952 = vmatprep.mubr.bf16.mxu0 %v2479
        %3953 = vmatmul.mubr.bf16.gmra.mrb[0].mxu0 %v2223
        %v3954 = vpop.f32.mrb[0].mxu0
        %v3955 = vadd.f32 %v3714, %v3954
        %v3956 = vpop.f32.mrb[0].mxu0
        %v3957 = vpop.f32.mrb[0].mxu0
        %v3958 = vadd.f32 %v3714, %v3957
        %v3959 = vpop.f32.mrb[0].mxu0
        %3960 = vmatprep.mubr.bf16.mxu0 %v2482
        %3961 = vmatmul.mubr.bf16.gmra.mrb[0].mxu0 %v2226
        %v3962 = vpop.f32.mrb[0].mxu0
        %v3963 = vadd.f32 %v3714, %v3962
        %v3964 = vpop.f32.mrb[0].mxu0
        %v3965 = vpop.f32.mrb[0].mxu0
        %v3966 = vadd.f32 %v3714, %v3965
        %v3967 = vpop.f32.mrb[0].mxu0
        %3968 = vmatprep.mubr.bf16.mxu0 %v2485
        %3969 = vmatmul.mubr.bf16.gmra.mrb[0].mxu0 %v2229
        %v3970 = vpop.f32.mrb[0].mxu0
        %v3971 = vadd.f32 %v3714, %v3970
        %v3972 = vpop.f32.mrb[0].mxu0
        %v3973 = vpop.f32.mrb[0].mxu0
        %v3974 = vadd.f32 %v3714, %v3973
        %v3975 = vpop.f32.mrb[0].mxu0
        %3976 = vmatprep.mubr.bf16.mxu0 %v2488
        %3977 = vmatmul.mubr.bf16.gmra.mrb[0].mxu0 %v2232
        %v3978 = vpop.f32.mrb[0].mxu0
        %v3979 = vadd.f32 %v3714, %v3978
        %v3980 = vpop.f32.mrb[0].mxu0
        %v3981 = vpop.f32.mrb[0].mxu0
        %v3982 = vadd.f32 %v3714, %v3981
        %v3983 = vpop.f32.mrb[0].mxu0
        %3984 = vmatprep.mubr.bf16.mxu0 %v2491
        %3985 = vmatmul.mubr.bf16.gmra.mrb[0].mxu0 %v2235
        %v3986 = vpop.f32.mrb[0].mxu0
        %v3987 = vadd.f32 %v3714, %v3986
        %v3988 = vpop.f32.mrb[0].mxu0
        %v3989 = vpop.f32.mrb[0].mxu0
        %v3990 = vadd.f32 %v3714, %v3989
        %v3991 = vpop.f32.mrb[0].mxu0
        %3992 = vmatprep.mubr.bf16.mxu0 %v2494
        %3993 = vmatmul.mubr.bf16.gmra.mrb[0].mxu0 %v2238
        %v3994 = vpop.f32.mrb[0].mxu0
        %v3995 = vadd.f32 %v3714, %v3994
        %v3996 = vpop.f32.mrb[0].mxu0
        %v3997 = vpop.f32.mrb[0].mxu0
        %v3998 = vadd.f32 %v3714, %v3997
        %v3999 = vpop.f32.mrb[0].mxu0
        %4000 = vmatprep.mubr.bf16.mxu0 %v2497
        %4001 = vmatmul.mubr.bf16.gmra.mrb[0].mxu0 %v2241
        %v4002 = vpop.f32.mrb[0].mxu0
        %v4003 = vadd.f32 %v3714, %v4002
        %v4004 = vpop.f32.mrb[0].mxu0
        %v4005 = vpop.f32.mrb[0].mxu0
        %v4006 = vadd.f32 %v3714, %v4005
        %v4007 = vpop.f32.mrb[0].mxu0
        %4008 = vmatprep.mubr.bf16.mxu0 %v2500
        %4009 = vmatmul.mubr.bf16.gmra.mrb[0].mxu0 %v2244
        %v4010 = vpop.f32.mrb[0].mxu0
        %v4011 = vadd.f32 %v3714, %v4010
        %v4012 = vpop.f32.mrb[0].mxu0
        %v4013 = vpop.f32.mrb[0].mxu0
        %v4014 = vadd.f32 %v3714, %v4013
        %v4015 = vpop.f32.mrb[0].mxu0
        %4016 = vmatprep.mubr.bf16.mxu0 %v2503
        %4017 = vmatmul.mubr.bf16.gmra.mrb[0].mxu0 %v2247
        %v4018 = vpop.f32.mrb[0].mxu0
        %v4019 = vadd.f32 %v3714, %v4018
        %v4020 = vpop.f32.mrb[0].mxu0
        %v4021 = vpop.f32.mrb[0].mxu0
        %v4022 = vadd.f32 %v3714, %v4021
        %v4023 = vpop.f32.mrb[0].mxu0
        %4024 = vmatprep.mubr.bf16.mxu0 %v2506
        %4025 = vmatmul.mubr.bf16.gmra.mrb[0].mxu0 %v2250
        %v4026 = vpop.f32.mrb[0].mxu0
        %v4027 = vadd.f32 %v3714, %v4026
        %v4028 = vpop.f32.mrb[0].mxu0
        %v4029 = vpop.f32.mrb[0].mxu0
        %v4030 = vadd.f32 %v3714, %v4029
        %v4031 = vpop.f32.mrb[0].mxu0
        %4032 = vmatprep.mubr.bf16.mxu0 %v2509
        %4033 = vmatmul.mubr.bf16.gmra.mrb[0].mxu0 %v2253
        %v4034 = vpop.f32.mrb[0].mxu0
        %v4035 = vadd.f32 %v3714, %v4034
        %v4036 = vpop.f32.mrb[0].mxu0
        %v4037 = vpop.f32.mrb[0].mxu0
        %v4038 = vadd.f32 %v3714, %v4037
        %v4039 = vpop.f32.mrb[0].mxu0
        %4040 = vmatprep.mubr.bf16.mxu0 %v2512
        %4041 = vmatmul.mubr.bf16.gmra.mrb[0].mxu0 %v2256
        %v4042 = vpop.f32.mrb[0].mxu0
        %v4043 = vadd.f32 %v3714, %v4042
        %v4044 = vpop.f32.mrb[0].mxu0
        %v4045 = vpop.f32.mrb[0].mxu0
        %v4046 = vadd.f32 %v3714, %v4045
        %v4047 = vpop.f32.mrb[0].mxu0
        %4048 = vmatprep.mubr.bf16.mxu0 %v2515
        %4049 = vmatmul.mubr.bf16.gmra.mrb[0].mxu0 %v2259
        %v4050 = vpop.f32.mrb[0].mxu0
        %v4051 = vadd.f32 %v3714, %v4050
        %v4052 = vpop.f32.mrb[0].mxu0
        %v4053 = vpop.f32.mrb[0].mxu0
        %v4054 = vadd.f32 %v3714, %v4053
        %v4055 = vpop.f32.mrb[0].mxu0
        %4056 = vmatprep.mubr.bf16.mxu0 %v2518
        %4057 = vmatmul.mubr.bf16.gmra.mrb[0].mxu0 %v2262
        %v4058 = vpop.f32.mrb[0].mxu0
        %v4059 = vadd.f32 %v3714, %v4058
        %v4060 = vpop.f32.mrb[0].mxu0
        %v4061 = vpop.f32.mrb[0].mxu0
        %v4062 = vadd.f32 %v3714, %v4061
        %v4063 = vpop.f32.mrb[0].mxu0
        %4064 = vmatprep.mubr.bf16.mxu0 %v2521
        %4065 = vmatmul.mubr.bf16.gmra.mrb[0].mxu0 %v2265
        %v4066 = vpop.f32.mrb[0].mxu0
        %v4067 = vadd.f32 %v3714, %v4066
        %v4068 = vpop.f32.mrb[0].mxu0
        %v4069 = vpop.f32.mrb[0].mxu0
        %v4070 = vadd.f32 %v3714, %v4069
        %v4071 = vpop.f32.mrb[0].mxu0
        %4072 = vmatprep.mubr.bf16.mxu0 %v2524
        %4073 = vmatmul.mubr.bf16.gmra.mrb[0].mxu0 %v2268
        %v4074 = vpop.f32.mrb[0].mxu0
        %v4075 = vadd.f32 %v3714, %v4074
        %v4076 = vpop.f32.mrb[0].mxu0
        %v4077 = vpop.f32.mrb[0].mxu0
        %v4078 = vadd.f32 %v3714, %v4077
        %v4079 = vpop.f32.mrb[0].mxu0
        %4080 = vmatprep.mubr.bf16.mxu0 %v2527
        %4081 = vmatmul.mubr.bf16.gmra.mrb[0].mxu0 %v2271
        %v4082 = vpop.f32.mrb[0].mxu0
        %v4083 = vadd.f32 %v3714, %v4082
        %v4084 = vpop.f32.mrb[0].mxu0
        %v4085 = vpop.f32.mrb[0].mxu0
        %v4086 = vadd.f32 %v3714, %v4085
        %v4087 = vpop.f32.mrb[0].mxu0
        %4088 = vmatprep.mubr.bf16.mxu0 %v2530
        %4089 = vmatmul.mubr.bf16.gmra.mrb[0].mxu0 %v2274
        %v4090 = vpop.f32.mrb[0].mxu0
        %v4091 = vadd.f32 %v3714, %v4090
        %v4092 = vpop.f32.mrb[0].mxu0
        %v4093 = vpop.f32.mrb[0].mxu0
        %v4094 = vadd.f32 %v3714, %v4093
        %v4095 = vpop.f32.mrb[0].mxu0
        %4096 = vmatprep.mubr.bf16.mxu0 %v2533
        %4097 = vmatmul.mubr.bf16.gmra.mrb[0].mxu0 %v2277
        %v4098 = vpop.f32.mrb[0].mxu0
        %v4099 = vadd.f32 %v3714, %v4098
        %v4100 = vpop.f32.mrb[0].mxu0
        %v4101 = vpop.f32.mrb[0].mxu0
        %v4102 = vadd.f32 %v3714, %v4101
        %v4103 = vpop.f32.mrb[0].mxu0
        %4104 = vmatprep.mubr.bf16.mxu0 %v2536
        %4105 = vmatmul.mubr.bf16.gmra.mrb[0].mxu0 %v2280
        %v4106 = vpop.f32.mrb[0].mxu0
        %v4107 = vadd.f32 %v3714, %v4106
        %v4108 = vpop.f32.mrb[0].mxu0
        %v4109 = vpop.f32.mrb[0].mxu0
        %v4110 = vadd.f32 %v3714, %v4109
        %v4111 = vpop.f32.mrb[0].mxu0
        %4112 = vmatprep.mubr.bf16.mxu0 %v2539
        %4113 = vmatmul.mubr.bf16.gmra.mrb[0].mxu0 %v2283
        %v4114 = vpop.f32.mrb[0].mxu0
        %v4115 = vadd.f32 %v3714, %v4114
        %v4116 = vpop.f32.mrb[0].mxu0
        %v4117 = vpop.f32.mrb[0].mxu0
        %v4118 = vadd.f32 %v3714, %v4117
        %v4119 = vpop.f32.mrb[0].mxu0
        %4120 = vmatprep.mubr.bf16.mxu0 %v2542
        %4121 = vmatmul.mubr.bf16.gmra.mrb[0].mxu0 %v2286
        %v4122 = vpop.f32.mrb[0].mxu0
        %v4123 = vadd.f32 %v3714, %v4122
        %v4124 = vpop.f32.mrb[0].mxu0
        %v4125 = vpop.f32.mrb[0].mxu0
        %v4126 = vadd.f32 %v3714, %v4125
        %v4127 = vpop.f32.mrb[0].mxu0
        %4128 = vmatprep.mubr.bf16.mxu0 %v2545
        %4129 = vmatmul.mubr.bf16.gmra.mrb[0].mxu0 %v2289
        %v4130 = vpop.f32.mrb[0].mxu0
        %v4131 = vadd.f32 %v3714, %v4130
        %v4132 = vpop.f32.mrb[0].mxu0
        %v4133 = vpop.f32.mrb[0].mxu0
        %v4134 = vadd.f32 %v3714, %v4133
        %v4135 = vpop.f32.mrb[0].mxu0
        %4136 = vmatprep.mubr.bf16.mxu0 %v2548
        %4137 = vmatmul.mubr.bf16.gmra.mrb[0].mxu0 %v2292
        %v4138 = vpop.f32.mrb[0].mxu0
        %v4139 = vadd.f32 %v3714, %v4138
        %v4140 = vpop.f32.mrb[0].mxu0
        %v4141 = vpop.f32.mrb[0].mxu0
        %v4142 = vadd.f32 %v3714, %v4141
        %v4143 = vpop.f32.mrb[0].mxu0
        %4144 = vmatprep.mubr.bf16.mxu0 %v2551
        %4145 = vmatmul.mubr.bf16.gmra.mrb[0].mxu0 %v2295
        %v4146 = vpop.f32.mrb[0].mxu0
        %v4147 = vadd.f32 %v3714, %v4146
        %v4148 = vpop.f32.mrb[0].mxu0
        %v4149 = vpop.f32.mrb[0].mxu0
        %v4150 = vadd.f32 %v3714, %v4149
        %v4151 = vpop.f32.mrb[0].mxu0
        %4152 = vmatprep.mubr.bf16.mxu0 %v2554
        %4153 = vmatmul.mubr.bf16.gmra.mrb[0].mxu0 %v2298
        %v4154 = vpop.f32.mrb[0].mxu0
        %v4155 = vadd.f32 %v3714, %v4154
        %v4156 = vpop.f32.mrb[0].mxu0
        %v4157 = vpop.f32.mrb[0].mxu0
        %v4158 = vadd.f32 %v3714, %v4157
        %v4159 = vpop.f32.mrb[0].mxu0
        %4160 = vmatprep.mubr.bf16.mxu0 %v2557
        %4161 = vmatmul.mubr.bf16.gmra.mrb[0].mxu0 %v2301
        %v4162 = vpop.f32.mrb[0].mxu0
        %v4163 = vadd.f32 %v3714, %v4162
        %v4164 = vpop.f32.mrb[0].mxu0
        %v4165 = vpop.f32.mrb[0].mxu0
        %v4166 = vadd.f32 %v3714, %v4165
        %v4167 = vpop.f32.mrb[0].mxu0
        %4168 = vmatprep.mubr.bf16.mxu0 %v2560
        %4169 = vmatmul.mubr.bf16.gmra.mrb[0].mxu0 %v2304
        %v4170 = vpop.f32.mrb[0].mxu0
        %v4171 = vadd.f32 %v3714, %v4170
        %v4172 = vpop.f32.mrb[0].mxu0
        %v4173 = vpop.f32.mrb[0].mxu0
        %v4174 = vadd.f32 %v3714, %v4173
        %v4175 = vpop.f32.mrb[0].mxu0
        %4176 = vmatprep.mubr.bf16.mxu0 %v2563
        %4177 = vmatmul.mubr.bf16.gmra.mrb[0].mxu0 %v2307
        %v4178 = vpop.f32.mrb[0].mxu0
        %v4179 = vadd.f32 %v3714, %v4178
        %v4180 = vpop.f32.mrb[0].mxu0
        %v4181 = vpop.f32.mrb[0].mxu0
        %v4182 = vadd.f32 %v3714, %v4181
        %v4183 = vpop.f32.mrb[0].mxu0
        %4184 = vmatprep.mubr.bf16.mxu0 %v2566
        %4185 = vmatmul.mubr.bf16.gmra.mrb[0].mxu0 %v2310
        %v4186 = vpop.f32.mrb[0].mxu0
        %v4187 = vadd.f32 %v3714, %v4186
        %v4188 = vpop.f32.mrb[0].mxu0
        %v4189 = vpop.f32.mrb[0].mxu0
        %v4190 = vadd.f32 %v3714, %v4189
        %v4191 = vpop.f32.mrb[0].mxu0
        %4192 = vmatprep.mubr.bf16.mxu0 %v2569
        %4193 = vmatmul.mubr.bf16.gmra.mrb[0].mxu0 %v2313
        %v4194 = vpop.f32.mrb[0].mxu0
        %v4195 = vadd.f32 %v3714, %v4194
        %v4196 = vpop.f32.mrb[0].mxu0
        %v4197 = vpop.f32.mrb[0].mxu0
        %v4198 = vadd.f32 %v3714, %v4197
        %v4199 = vpop.f32.mrb[0].mxu0
        %4200 = vmatprep.mubr.bf16.mxu0 %v2572
        %4201 = vmatmul.mubr.bf16.gmra.mrb[0].mxu0 %v2316
        %v4202 = vpop.f32.mrb[0].mxu0
        %v4203 = vadd.f32 %v3714, %v4202
        %v4204 = vpop.f32.mrb[0].mxu0
        %v4205 = vpop.f32.mrb[0].mxu0
        %v4206 = vadd.f32 %v3714, %v4205
        %v4207 = vpop.f32.mrb[0].mxu0
        %4208 = vdwg.mxu0
        %4209 = vmatprep.subr.bf16.mxu0 0
        %4210 = vmatpush1.bf16.msra.mxu0 %v3804
        %4211 = vmatprep.subr.bf16.mxu0 0
        %4212 = vmatpush1.bf16.msra.mxu0 %v3805
        %4213 = vmatprep.subr.bf16.mxu0 0
        %4214 = vmatpush1.bf16.msra.mxu0 0
        %4215 = vmatprep.subr.bf16.mxu0 0
        %4216 = vmatpush1.bf16.msra.mxu0 0
        %4217 = vmatprep.subr.bf16.mxu0 0
        %4218 = vmatpush1.bf16.msra.mxu0 0
        %4219 = vmatprep.subr.bf16.mxu0 0
        %4220 = vmatpush1.bf16.msra.mxu0 0
        %4221 = vmatprep.subr.bf16.mxu0 0
        %4222 = vmatpush1.bf16.msra.mxu0 0
        %4223 = vmatprep.subr.bf16.mxu0 0
        %4224 = vmatpush1.bf16.msra.mxu0 0
        %4225 = vmatprep.subr.bf16.mxu0 0
        %4226 = vmatpush1.bf16.msra.mxu0 0
        %4227 = vmatprep.subr.bf16.mxu0 0
        %4228 = vmatpush1.bf16.msra.mxu0 0
        %4229 = vmatprep.subr.bf16.mxu0 0
        %4230 = vmatpush1.bf16.msra.mxu0 0
        %4231 = vmatprep.subr.bf16.mxu0 0
        %4232 = vmatpush1.bf16.msra.mxu0 0
        %4233 = vmatprep.subr.bf16.mxu0 0
        %4234 = vmatpush1.bf16.msra.mxu0 0
        %4235 = vmatprep.subr.bf16.mxu0 0
        %4236 = vmatpush1.bf16.msra.mxu0 0
        %4237 = vmatprep.subr.bf16.mxu0 0
        %4238 = vmatpush1.bf16.msra.mxu0 0
        %4239 = vmatprep.subr.bf16.mxu0 0
        %4240 = vmatpush1.bf16.msra.mxu0 0
        %4241 = vmatprep.mubr.bf16.mxu0 0
        %4242 = vmatmul.mubr.bf16.gmra.mrb[0].mxu0 %v3825
        %v4243 = vpop.f32.mrb[0].mxu0
        %v4244 = vadd.f32 %v3955, %v4243
        %v4245 = vpop.f32.mrb[0].mxu0
        %v4246 = vpop.f32.mrb[0].mxu0
        %v4247 = vadd.f32 %v3958, %v4246
        %v4248 = vpop.f32.mrb[0].mxu0
        %4249 = vmatprep.mubr.bf16.mxu0 0
        %4250 = vmatmul.mubr.bf16.gmra.mrb[0].mxu0 %v3828
        %v4251 = vpop.f32.mrb[0].mxu0
        %v4252 = vadd.f32 %v3963, %v4251
        %v4253 = vpop.f32.mrb[0].mxu0
        %v4254 = vpop.f32.mrb[0].mxu0
        %v4255 = vadd.f32 %v3966, %v4254
        %v4256 = vpop.f32.mrb[0].mxu0
        %4257 = vmatprep.mubr.bf16.mxu0 0
        %4258 = vmatmul.mubr.bf16.gmra.mrb[0].mxu0 %v3831
        %v4259 = vpop.f32.mrb[0].mxu0
        %v4260 = vadd.f32 %v3971, %v4259
        %v4261 = vpop.f32.mrb[0].mxu0
        %v4262 = vpop.f32.mrb[0].mxu0
        %v4263 = vadd.f32 %v3974, %v4262
        %v4264 = vpop.f32.mrb[0].mxu0
        %4265 = vmatprep.mubr.bf16.mxu0 0
        %4266 = vmatmul.mubr.bf16.gmra.mrb[0].mxu0 %v3834
        %v4267 = vpop.f32.mrb[0].mxu0
        %v4268 = vadd.f32 %v3979, %v4267
        %v4269 = vpop.f32.mrb[0].mxu0
        %v4270 = vpop.f32.mrb[0].mxu0
        %v4271 = vadd.f32 %v3982, %v4270
        %v4272 = vpop.f32.mrb[0].mxu0
        %4273 = vmatprep.mubr.bf16.mxu0 0
        %4274 = vmatmul.mubr.bf16.gmra.mrb[0].mxu0 %v3837
        %v4275 = vpop.f32.mrb[0].mxu0
        %v4276 = vadd.f32 %v3987, %v4275
        %v4277 = vpop.f32.mrb[0].mxu0
        %v4278 = vpop.f32.mrb[0].mxu0
        %v4279 = vadd.f32 %v3990, %v4278
        %v4280 = vpop.f32.mrb[0].mxu0
        %4281 = vmatprep.mubr.bf16.mxu0 0
        %4282 = vmatmul.mubr.bf16.gmra.mrb[0].mxu0 %v3840
        %v4283 = vpop.f32.mrb[0].mxu0
        %v4284 = vadd.f32 %v3995, %v4283
        %v4285 = vpop.f32.mrb[0].mxu0
        %v4286 = vpop.f32.mrb[0].mxu0
        %v4287 = vadd.f32 %v3998, %v4286
        %v4288 = vpop.f32.mrb[0].mxu0
        %4289 = vmatprep.mubr.bf16.mxu0 0
        %4290 = vmatmul.mubr.bf16.gmra.mrb[0].mxu0 %v3843
        %v4291 = vpop.f32.mrb[0].mxu0
        %v4292 = vadd.f32 %v4003, %v4291
        %v4293 = vpop.f32.mrb[0].mxu0
        %v4294 = vpop.f32.mrb[0].mxu0
        %v4295 = vadd.f32 %v4006, %v4294
        %v4296 = vpop.f32.mrb[0].mxu0
        %4297 = vmatprep.mubr.bf16.mxu0 0
        %4298 = vmatmul.mubr.bf16.gmra.mrb[0].mxu0 %v3846
        %v4299 = vpop.f32.mrb[0].mxu0
        %v4300 = vadd.f32 %v4011, %v4299
        %v4301 = vpop.f32.mrb[0].mxu0
        %v4302 = vpop.f32.mrb[0].mxu0
        %v4303 = vadd.f32 %v4014, %v4302
        %v4304 = vpop.f32.mrb[0].mxu0
        %4305 = vmatprep.mubr.bf16.mxu0 0
        %4306 = vmatmul.mubr.bf16.gmra.mrb[0].mxu0 %v3849
        %v4307 = vpop.f32.mrb[0].mxu0
        %v4308 = vadd.f32 %v4019, %v4307
        %v4309 = vpop.f32.mrb[0].mxu0
        %v4310 = vpop.f32.mrb[0].mxu0
        %v4311 = vadd.f32 %v4022, %v4310
        %v4312 = vpop.f32.mrb[0].mxu0
        %4313 = vmatprep.mubr.bf16.mxu0 0
        %4314 = vmatmul.mubr.bf16.gmra.mrb[0].mxu0 %v3852
        %v4315 = vpop.f32.mrb[0].mxu0
        %v4316 = vadd.f32 %v4027, %v4315
        %v4317 = vpop.f32.mrb[0].mxu0
        %v4318 = vpop.f32.mrb[0].mxu0
        %v4319 = vadd.f32 %v4030, %v4318
        %v4320 = vpop.f32.mrb[0].mxu0
        %4321 = vmatprep.mubr.bf16.mxu0 0
        %4322 = vmatmul.mubr.bf16.gmra.mrb[0].mxu0 %v3855
        %v4323 = vpop.f32.mrb[0].mxu0
        %v4324 = vadd.f32 %v4035, %v4323
        %v4325 = vpop.f32.mrb[0].mxu0
        %v4326 = vpop.f32.mrb[0].mxu0
        %v4327 = vadd.f32 %v4038, %v4326
        %v4328 = vpop.f32.mrb[0].mxu0
        %4329 = vmatprep.mubr.bf16.mxu0 0
        %4330 = vmatmul.mubr.bf16.gmra.mrb[0].mxu0 %v3858
        %v4331 = vpop.f32.mrb[0].mxu0
        %v4332 = vadd.f32 %v4043, %v4331
        %v4333 = vpop.f32.mrb[0].mxu0
        %v4334 = vpop.f32.mrb[0].mxu0
        %v4335 = vadd.f32 %v4046, %v4334
        %v4336 = vpop.f32.mrb[0].mxu0
        %4337 = vmatprep.mubr.bf16.mxu0 0
        %4338 = vmatmul.mubr.bf16.gmra.mrb[0].mxu0 %v3861
        %v4339 = vpop.f32.mrb[0].mxu0
        %v4340 = vadd.f32 %v4051, %v4339
        %v4341 = vpop.f32.mrb[0].mxu0
        %v4342 = vpop.f32.mrb[0].mxu0
        %v4343 = vadd.f32 %v4054, %v4342
        %v4344 = vpop.f32.mrb[0].mxu0
        %4345 = vmatprep.mubr.bf16.mxu0 0
        %4346 = vmatmul.mubr.bf16.gmra.mrb[0].mxu0 %v3864
        %v4347 = vpop.f32.mrb[0].mxu0
        %v4348 = vadd.f32 %v4059, %v4347
        %v4349 = vpop.f32.mrb[0].mxu0
        %v4350 = vpop.f32.mrb[0].mxu0
        %v4351 = vadd.f32 %v4062, %v4350
        %v4352 = vpop.f32.mrb[0].mxu0
        %4353 = vmatprep.mubr.bf16.mxu0 0
        %4354 = vmatmul.mubr.bf16.gmra.mrb[0].mxu0 %v3867
        %v4355 = vpop.f32.mrb[0].mxu0
        %v4356 = vadd.f32 %v4067, %v4355
        %v4357 = vpop.f32.mrb[0].mxu0
        %v4358 = vpop.f32.mrb[0].mxu0
        %v4359 = vadd.f32 %v4070, %v4358
        %v4360 = vpop.f32.mrb[0].mxu0
        %4361 = vmatprep.mubr.bf16.mxu0 0
        %4362 = vmatmul.mubr.bf16.gmra.mrb[0].mxu0 %v3870
        %v4363 = vpop.f32.mrb[0].mxu0
        %v4364 = vadd.f32 %v4075, %v4363
        %v4365 = vpop.f32.mrb[0].mxu0
        %v4366 = vpop.f32.mrb[0].mxu0
        %v4367 = vadd.f32 %v4078, %v4366
        %v4368 = vpop.f32.mrb[0].mxu0
        %4369 = vmatprep.mubr.bf16.mxu0 0
        %4370 = vmatmul.mubr.bf16.gmra.mrb[0].mxu0 %v3873
        %v4371 = vpop.f32.mrb[0].mxu0
        %v4372 = vadd.f32 %v4083, %v4371
        %v4373 = vpop.f32.mrb[0].mxu0
        %v4374 = vpop.f32.mrb[0].mxu0
        %v4375 = vadd.f32 %v4086, %v4374
        %v4376 = vpop.f32.mrb[0].mxu0
        %4377 = vmatprep.mubr.bf16.mxu0 0
        %4378 = vmatmul.mubr.bf16.gmra.mrb[0].mxu0 %v3876
        %v4379 = vpop.f32.mrb[0].mxu0
        %v4380 = vadd.f32 %v4091, %v4379
        %v4381 = vpop.f32.mrb[0].mxu0
        %v4382 = vpop.f32.mrb[0].mxu0
        %v4383 = vadd.f32 %v4094, %v4382
        %v4384 = vpop.f32.mrb[0].mxu0
        %4385 = vmatprep.mubr.bf16.mxu0 0
        %4386 = vmatmul.mubr.bf16.gmra.mrb[0].mxu0 %v3879
        %v4387 = vpop.f32.mrb[0].mxu0
        %v4388 = vadd.f32 %v4099, %v4387
        %v4389 = vpop.f32.mrb[0].mxu0
        %v4390 = vpop.f32.mrb[0].mxu0
        %v4391 = vadd.f32 %v4102, %v4390
        %v4392 = vpop.f32.mrb[0].mxu0
        %4393 = vmatprep.mubr.bf16.mxu0 0
        %4394 = vmatmul.mubr.bf16.gmra.mrb[0].mxu0 %v3882
        %v4395 = vpop.f32.mrb[0].mxu0
        %v4396 = vadd.f32 %v4107, %v4395
        %v4397 = vpop.f32.mrb[0].mxu0
        %v4398 = vpop.f32.mrb[0].mxu0
        %v4399 = vadd.f32 %v4110, %v4398
        %v4400 = vpop.f32.mrb[0].mxu0
        %4401 = vmatprep.mubr.bf16.mxu0 0
        %4402 = vmatmul.mubr.bf16.gmra.mrb[0].mxu0 %v3885
        %v4403 = vpop.f32.mrb[0].mxu0
        %v4404 = vadd.f32 %v4115, %v4403
        %v4405 = vpop.f32.mrb[0].mxu0
        %v4406 = vpop.f32.mrb[0].mxu0
        %v4407 = vadd.f32 %v4118, %v4406
        %v4408 = vpop.f32.mrb[0].mxu0
        %4409 = vmatprep.mubr.bf16.mxu0 0
        %4410 = vmatmul.mubr.bf16.gmra.mrb[0].mxu0 %v3888
        %v4411 = vpop.f32.mrb[0].mxu0
        %v4412 = vadd.f32 %v4123, %v4411
        %v4413 = vpop.f32.mrb[0].mxu0
        %v4414 = vpop.f32.mrb[0].mxu0
        %v4415 = vadd.f32 %v4126, %v4414
        %v4416 = vpop.f32.mrb[0].mxu0
        %4417 = vmatprep.mubr.bf16.mxu0 0
        %4418 = vmatmul.mubr.bf16.gmra.mrb[0].mxu0 %v3891
        %v4419 = vpop.f32.mrb[0].mxu0
        %v4420 = vadd.f32 %v4131, %v4419
        %v4421 = vpop.f32.mrb[0].mxu0
        %v4422 = vpop.f32.mrb[0].mxu0
        %v4423 = vadd.f32 %v4134, %v4422
        %v4424 = vpop.f32.mrb[0].mxu0
        %4425 = vmatprep.mubr.bf16.mxu0 0
        %4426 = vmatmul.mubr.bf16.gmra.mrb[0].mxu0 %v3894
        %v4427 = vpop.f32.mrb[0].mxu0
        %v4428 = vadd.f32 %v4139, %v4427
        %v4429 = vpop.f32.mrb[0].mxu0
        %v4430 = vpop.f32.mrb[0].mxu0
        %v4431 = vadd.f32 %v4142, %v4430
        %v4432 = vpop.f32.mrb[0].mxu0
        %4433 = vmatprep.mubr.bf16.mxu0 0
        %4434 = vmatmul.mubr.bf16.gmra.mrb[0].mxu0 %v3897
        %v4435 = vpop.f32.mrb[0].mxu0
        %v4436 = vadd.f32 %v4147, %v4435
        %v4437 = vpop.f32.mrb[0].mxu0
        %v4438 = vpop.f32.mrb[0].mxu0
        %v4439 = vadd.f32 %v4150, %v4438
        %v4440 = vpop.f32.mrb[0].mxu0
        %4441 = vmatprep.mubr.bf16.mxu0 0
        %4442 = vmatmul.mubr.bf16.gmra.mrb[0].mxu0 %v3900
        %v4443 = vpop.f32.mrb[0].mxu0
        %v4444 = vadd.f32 %v4155, %v4443
        %v4445 = vpop.f32.mrb[0].mxu0
        %v4446 = vpop.f32.mrb[0].mxu0
        %v4447 = vadd.f32 %v4158, %v4446
        %v4448 = vpop.f32.mrb[0].mxu0
        %4449 = vmatprep.mubr.bf16.mxu0 0
        %4450 = vmatmul.mubr.bf16.gmra.mrb[0].mxu0 %v3903
        %v4451 = vpop.f32.mrb[0].mxu0
        %v4452 = vadd.f32 %v4163, %v4451
        %v4453 = vpop.f32.mrb[0].mxu0
        %v4454 = vpop.f32.mrb[0].mxu0
        %v4455 = vadd.f32 %v4166, %v4454
        %v4456 = vpop.f32.mrb[0].mxu0
        %4457 = vmatprep.mubr.bf16.mxu0 0
        %4458 = vmatmul.mubr.bf16.gmra.mrb[0].mxu0 %v3906
        %v4459 = vpop.f32.mrb[0].mxu0
        %v4460 = vadd.f32 %v4171, %v4459
        %v4461 = vpop.f32.mrb[0].mxu0
        %v4462 = vpop.f32.mrb[0].mxu0
        %v4463 = vadd.f32 %v4174, %v4462
        %v4464 = vpop.f32.mrb[0].mxu0
        %4465 = vmatprep.mubr.bf16.mxu0 0
        %4466 = vmatmul.mubr.bf16.gmra.mrb[0].mxu0 %v3909
        %v4467 = vpop.f32.mrb[0].mxu0
        %v4468 = vadd.f32 %v4179, %v4467
        %v4469 = vpop.f32.mrb[0].mxu0
        %v4470 = vpop.f32.mrb[0].mxu0
        %v4471 = vadd.f32 %v4182, %v4470
        %v4472 = vpop.f32.mrb[0].mxu0
        %4473 = vmatprep.mubr.bf16.mxu0 0
        %4474 = vmatmul.mubr.bf16.gmra.mrb[0].mxu0 %v3912
        %v4475 = vpop.f32.mrb[0].mxu0
        %v4476 = vadd.f32 %v4187, %v4475
        %v4477 = vpop.f32.mrb[0].mxu0
        %v4478 = vpop.f32.mrb[0].mxu0
        %v4479 = vadd.f32 %v4190, %v4478
        %v4480 = vpop.f32.mrb[0].mxu0
        %4481 = vmatprep.mubr.bf16.mxu0 0
        %4482 = vmatmul.mubr.bf16.gmra.mrb[0].mxu0 %v3915
        %v4483 = vpop.f32.mrb[0].mxu0
        %v4484 = vadd.f32 %v4195, %v4483
        %v4485 = vpop.f32.mrb[0].mxu0
        %v4486 = vpop.f32.mrb[0].mxu0
        %v4487 = vadd.f32 %v4198, %v4486
        %v4488 = vpop.f32.mrb[0].mxu0
        %4489 = vmatprep.mubr.bf16.mxu0 0
        %4490 = vmatmul.mubr.bf16.gmra.mrb[0].mxu0 %v3918
        %v4491 = vpop.f32.mrb[0].mxu0
        %v4492 = vadd.f32 %v4203, %v4491
        %v4493 = vpop.f32.mrb[0].mxu0
        %v4494 = vpop.f32.mrb[0].mxu0
        %v4495 = vadd.f32 %v4206, %v4494
        %v4496 = vpop.f32.mrb[0].mxu0
        %4497 = vdwg.mxu0
        %4498 = vst [vmem:[%s286] sm:$0xff] %v4244
        %4499 = vst [vmem:[%s286 + $0x8] sm:$0xff] %v4247
        %4500 = vst [vmem:[%s286 + $0x10] sm:$0xff] %v4252
        %4501 = vst [vmem:[%s286 + $0x18] sm:$0xff] %v4255
        %4502 = vst [vmem:[%s286 + $0x20] sm:$0xff] %v4260
        %4503 = vst [vmem:[%s286 + $0x28] sm:$0xff] %v4263
        %4504 = vst [vmem:[%s286 + $0x30] sm:$0xff] %v4268
        %4505 = vst [vmem:[%s286 + $0x38] sm:$0xff] %v4271
        %4506 = vst [vmem:[%s286 + $0x40] sm:$0xff] %v4276
        %4507 = vst [vmem:[%s286 + $0x48] sm:$0xff] %v4279
        %4508 = vst [vmem:[%s286 + $0x50] sm:$0xff] %v4284
        %4509 = vst [vmem:[%s286 + $0x58] sm:$0xff] %v4287
        %4510 = vst [vmem:[%s286 + $0x60] sm:$0xff] %v4292
        %4511 = vst [vmem:[%s286 + $0x68] sm:$0xff] %v4295
        %4512 = vst [vmem:[%s286 + $0x70] sm:$0xff] %v4300
        %4513 = vst [vmem:[%s286 + $0x78] sm:$0xff] %v4303
        %4514 = vst [vmem:[%s286 + $0x80] sm:$0xff] %v4308
        %4515 = vst [vmem:[%s286 + $0x88] sm:$0xff] %v4311
        %4516 = vst [vmem:[%s286 + $0x90] sm:$0xff] %v4316
        %4517 = vst [vmem:[%s286 + $0x98] sm:$0xff] %v4319
        %4518 = vst [vmem:[%s286 + $0xa0] sm:$0xff] %v4324
        %4519 = vst [vmem:[%s286 + $0xa8] sm:$0xff] %v4327
        %4520 = vst [vmem:[%s286 + $0xb0] sm:$0xff] %v4332
        %4521 = vst [vmem:[%s286 + $0xb8] sm:$0xff] %v4335
        %4522 = vst [vmem:[%s286 + $0xc0] sm:$0xff] %v4340
        %4523 = vst [vmem:[%s286 + $0xc8] sm:$0xff] %v4343
        %4524 = vst [vmem:[%s286 + $0xd0] sm:$0xff] %v4348
        %4525 = vst [vmem:[%s286 + $0xd8] sm:$0xff] %v4351
        %4526 = vst [vmem:[%s286 + $0xe0] sm:$0xff] %v4356
        %4527 = vst [vmem:[%s286 + $0xe8] sm:$0xff] %v4359
        %4528 = vst [vmem:[%s286 + $0xf0] sm:$0xff] %v4364
        %4529 = vst [vmem:[%s286 + $0xf8] sm:$0xff] %v4367
        %4530 = vst [vmem:[%s286 + $0x100] sm:$0xff] %v4372
        %4531 = vst [vmem:[%s286 + $0x108] sm:$0xff] %v4375
        %4532 = vst [vmem:[%s286 + $0x110] sm:$0xff] %v4380
        %4533 = vst [vmem:[%s286 + $0x118] sm:$0xff] %v4383
        %4534 = vst [vmem:[%s286 + $0x120] sm:$0xff] %v4388
        %4535 = vst [vmem:[%s286 + $0x128] sm:$0xff] %v4391
        %4536 = vst [vmem:[%s286 + $0x130] sm:$0xff] %v4396
        %4537 = vst [vmem:[%s286 + $0x138] sm:$0xff] %v4399
        %4538 = vst [vmem:[%s286 + $0x140] sm:$0xff] %v4404
        %4539 = vst [vmem:[%s286 + $0x148] sm:$0xff] %v4407
        %4540 = vst [vmem:[%s286 + $0x150] sm:$0xff] %v4412
        %4541 = vst [vmem:[%s286 + $0x158] sm:$0xff] %v4415
        %4542 = vst [vmem:[%s286 + $0x160] sm:$0xff] %v4420
        %4543 = vst [vmem:[%s286 + $0x168] sm:$0xff] %v4423
        %4544 = vst [vmem:[%s286 + $0x170] sm:$0xff] %v4428
        %4545 = vst [vmem:[%s286 + $0x178] sm:$0xff] %v4431
        %4546 = vst [vmem:[%s286 + $0x180] sm:$0xff] %v4436
        %4547 = vst [vmem:[%s286 + $0x188] sm:$0xff] %v4439
        %4548 = vst [vmem:[%s286 + $0x190] sm:$0xff] %v4444
        %4549 = vst [vmem:[%s286 + $0x198] sm:$0xff] %v4447
        %4550 = vst [vmem:[%s286 + $0x1a0] sm:$0xff] %v4452
        %4551 = vst [vmem:[%s286 + $0x1a8] sm:$0xff] %v4455
        %4552 = vst [vmem:[%s286 + $0x1b0] sm:$0xff] %v4460
        %4553 = vst [vmem:[%s286 + $0x1b8] sm:$0xff] %v4463
        %4554 = vst [vmem:[%s286 + $0x1c0] sm:$0xff] %v4468
        %4555 = vst [vmem:[%s286 + $0x1c8] sm:$0xff] %v4471
        %4556 = vst [vmem:[%s286 + $0x1d0] sm:$0xff] %v4476
        %4557 = vst [vmem:[%s286 + $0x1d8] sm:$0xff] %v4479
        %4558 = vst [vmem:[%s286 + $0x1e0] sm:$0xff] %v4484
        %4559 = vst [vmem:[%s286 + $0x1e8] sm:$0xff] %v4487
        %4560 = vst [vmem:[%s286 + $0x1f0] sm:$0xff] %v4492
        %4561 = vst [vmem:[%s286 + $0x1f8] sm:$0xff] %v4495
      $region56: #{_lambda_.1} parent=39 // pred_fallthru
        _
      %s4562 = smul.u32 8, %s22
      %p4563 = scmp.lt.s32.totalorder %s4562, 7
      %s4564 = scalar_select %p4563, %s4562, 7
      %s4565 = smul.addr %s4564, 8
      %s4566 = smul.addr %s4565, 8
      %s4567 = scalar_lea.vmem %s5, %s4566
      %s4568 = smul.u32 8, %s22
      %p4569 = scmp.lt.s32.totalorder %s4568, 7
      %s4570 = scalar_select %p4569, %s4568, 7
      %s4571 = smul.addr %s4570, 8
      %s4572 = smul.addr %s4571, 8
      %s4573 = scalar_lea.vmem %s6, %s4572
      // Predicated region
      $region57: #{_lambda_.1} parent=39 // pred_check
        %p4574 = pneg %p158
      $region58: #{_lambda_.1} parent=39 // pred_check_branch
        %4576 = sbr.rel (%p4574) target = $region60
      $region59: #{_lambda_.1} parent=39 // pred_region
        %s4577 = smul.u32 8, %s22
      $region60: #{_lambda_.1} parent=39 // pred_fallthru
        _
      // Predicated region
      $region61: #{_lambda_.1} parent=39 // pred_check
        %p4578 = pneg %p184
      $region62: #{_lambda_.1} parent=39 // pred_check_branch
        %4580 = sbr.rel (%p4578) target = $region64
      $region63: #{_lambda_.1} parent=39 // pred_region
        %s4581 = smul.u32 8, %s22
      $region64: #{_lambda_.1} parent=39 // pred_fallthru
        _
      // Predicated region
      $region65: #{_lambda_.1} parent=39 // pred_check
        %p4582 = pneg %p158
      $region66: #{_lambda_.1} parent=39 // pred_check_branch
        %4584 = sbr.rel (%p4582) target = $region68
      $region67: #{_lambda_.1} parent=39 // pred_region
        %s4585 = smul.u32 8, %s22
        %p4586 = scmp.lt.s32.totalorder %s4585, 7
        %s4587 = scalar_select %p4586, %s4585, 7
        %s4588 = smul.addr %s4587, 8
        %s4589 = smul.addr %s4588, 8
        %s4590 = scalar_lea.vmem %s5, %s4589
      $region68: #{_lambda_.1} parent=39 // pred_fallthru
        _
      // Predicated region
      $region69: #{_lambda_.1} parent=39 // pred_check
        %p4591 = pneg %p184
      $region70: #{_lambda_.1} parent=39 // pred_check_branch
        %4593 = sbr.rel (%p4591) target = $region72
      $region71: #{_lambda_.1} parent=39 // pred_region
        %s4594 = smul.u32 8, %s22
        %p4595 = scmp.lt.s32.totalorder %s4594, 7
        %s4596 = scalar_select %p4595, %s4594, 7
        %s4597 = smul.addr %s4596, 8
        %s4598 = smul.addr %s4597, 8
        %s4599 = scalar_lea.vmem %s6, %s4598
      $region72: #{_lambda_.1} parent=39 // pred_fallthru
        _
    $region40: #{_lambda_.1} parent=5 // pred_fallthru
      _
    %p4600 = scmp.le.s32.totalorder 2, %s13
    // Predicated region
    $region73: #{_lambda_.1} parent=5 // pred_check
      %p4601 = pneg %p4600
    $region74: #{_lambda_.1} parent=5 // pred_check_branch
      %4603 = sbr.rel (%p4601) target = $region76
    $region75: #{_lambda_.1} parent=5 // pred_region
      %s4604 = ssub.s32 %s13, 2
    $region76: #{_lambda_.1} parent=5 // pred_fallthru
      _
  $region6: #{_lambda_.1} parent=0 // loop_footer
    %s17 = sadd.s32 1, %s13
  $region7: #{_lambda_.1} parent=0 // loop_footer_branch
    %12 = sbr.rel target = $region3
  $region8: #{_lambda_.1} parent=0 // loop_exit
    _

</llo_original>
